<compile_context>
chip_gen: v7x
topology: tpu7x:2x2x1
jax: 0.10.0
libtpu: 0.0.40
codegen_flags: <defaults>
</compile_context>

<pallas_src>
import jax
import jax.numpy as jnp
from jax import lax
from jax.experimental import pallas as pl
from jax.experimental.pallas import tpu as pltpu


# ----------------------------- kernel helpers --------------------------------

def _leaky_bn(y, b_ref, sc_ref, sh_ref):
    """bias -> LeakyReLU(0.2) -> folded BatchNorm (eval)."""
    y = y + b_ref[...]
    y = jnp.where(y >= 0.0, y, 0.2 * y)
    # TODO(synk): Dropout2d(0.25) is stochastic / train-only -> identity (eval).
    return y * sc_ref[...] + sh_ref[...]


def _conv_from_patches(patches, w_ref):
    """(OH, OW, 9*Cin) patches x (9*Cin, Cout) weight -> (OH, OW, Cout).

    OH-batched matmul: contraction depth is the full 9*Cin and no value
    reshape touches the trailing (sublane, lane) dims.
    """
    oh, ow, k = patches.shape
    w = w_ref[...]
    cout = w.shape[1]
    w_b = jnp.broadcast_to(w[None], (oh, k, cout))
    return jnp.einsum('ovk,okc->ovc', patches, w_b,
                      preferred_element_type=jnp.float32)


def _im2col_stride2(x):
    """In-VMEM im2col for a 3x3 / stride-2 / pad-1 conv.

    x: (H, W, C) -> (H//2, W//2, 9*C).
    Column subsampling (stride 2 along W, the sublane dim) is three tiny
    (OW x W) 0/1 selection matmuls; row subsampling/shift (H is a leading dim)
    is free reshapes / static slices / zero rows.  No strided memory access,
    no (m_out x m_in) temporaries.
    """
    h, w, c = x.shape
    oh, ow = h // 2, w // 2
    iv = lax.broadcasted_iota(jnp.int32, (ow, w), 0)   # output col index
    iw = lax.broadcasted_iota(jnp.int32, (ow, w), 1)   # input  col index
    row_taps = []
    for kw in range(3):
        # E[v, w] = 1 iff w == 2*v + (kw - 1); out-of-range columns -> all-zero.
        e = jnp.where(iw == 2 * iv + (kw - 1), 1.0, 0.0).astype(jnp.float32)
        e_b = jnp.broadcast_to(e[None], (h, ow, w))
        col = jnp.einsum('hvw,hwc->hvc', e_b, x,
                         preferred_element_type=jnp.float32)   # (H, OW, C)
        cr = col.reshape(oh, 2, ow, c)                 # leading-dim split: free
        even, odd = cr[:, 0], cr[:, 1]                 # input rows 2*oh, 2*oh+1
        if oh == 1:
            up = jnp.zeros((1, ow, c), jnp.float32)    # row -1 is padding
        else:
            up = jnp.concatenate(
                [jnp.zeros((1, ow, c), jnp.float32), odd[:oh - 1]], axis=0)
        row_taps.append((up, even, odd))               # kh = 0, 1, 2
    taps = [row_taps[kw][kh] for kh in range(3) for kw in range(3)]
    return jnp.concatenate(taps, axis=-1)              # (OH, OW, 9*C)


def _discriminator_kernel(*refs):
    """Fused forward for one image (grid is over batch).

    refs: p0, [w, b, scale, shift] x 4 layers, w_fc, b_fc, out
      p0:    (1, OH0, OW0, 27)  layer-0 patches (wrapper-side im2col)
      w_l:   (9*Cin_l, Cout_l)  conv taps flattened (kh, kw, cin)-major
      b/scale/shift: (1, Cout_l)
      w_fc:  (ds, ds, 128)      FC weight in NHWC order
      b_fc:  (1, 1, 1)
      out:   (1, 1, 1)
    """
    p0_ref = refs[0]
    layer_refs = refs[1:17]
    wfc_ref, bfc_ref, o_ref = refs[17], refs[18], refs[19]

    # Layer 1 (no BN): patches were built lane-dense in the wrapper.
    w_ref, b_ref, sc_ref, sh_ref = layer_refs[0:4]
    x = _conv_from_patches(p0_ref[0], w_ref)
    x = _leaky_bn(x, b_ref, sc_ref, sh_ref)

    # Layers 2..4: im2col entirely in VMEM, one deep-K matmul each.
    for l in range(1, 4):
        w_ref, b_ref, sc_ref, sh_ref = layer_refs[4 * l:4 * l + 4]
        patches = _im2col_stride2(x)
        x = _conv_from_patches(patches, w_ref)
        x = _leaky_bn(x, b_ref, sc_ref, sh_ref)

    # Linear(128*ds*ds -> 1) + Sigmoid.
    prod = x * wfc_ref[...]                            # (ds, ds, 128)
    t = jnp.sum(prod, axis=-1, keepdims=True)
    t = jnp.sum(t, axis=0, keepdims=True)
    t = jnp.sum(t, axis=1, keepdims=True)              # (1, 1, 1)
    logit = t + bfc_ref[...]
    o_ref[...] = 1.0 / (1.0 + jnp.exp(-logit))


# ------------------------------ JAX wrapper ----------------------------------

def discriminator_forward(x_nchw, params):
    n, cin, h, w = x_nchw.shape
    assert h == w and h % 16 == 0
    chans = [cin, 16, 32, 64, 128]
    oh0 = h // 2

    # Layer-0 im2col in the wrapper (tiny, lane-dense 9*Cin = 27 channels).
    x_nhwc = jnp.transpose(x_nchw, (0, 2, 3, 1)).astype(jnp.float32)
    x_pad = jnp.pad(x_nhwc, ((0, 0), (1, 1), (1, 1), (0, 0)))
    taps = [x_pad[:, kh:kh + h:2, kw:kw + w:2, :]
            for kh in range(3) for kw in range(3)]
    p0 = jnp.concatenate(taps, axis=-1)                # (N, OH0, OW0, 27)

    def full_spec(shape):
        return pl.BlockSpec(shape, lambda i: (0,) * len(shape))

    inputs = [p0]
    in_specs = [pl.BlockSpec((1, oh0, oh0, 9 * cin), lambda i: (i, 0, 0, 0))]

    for l in range(1, 5):
        wl = params[f"w{l}"]
        co, ci = wl.shape[0], wl.shape[1]
        # (Cout, Cin, KH, KW) -> (KH, KW, Cin, Cout) -> (9*Cin, Cout)
        w9 = jnp.transpose(wl, (2, 3, 1, 0)).reshape(9 * ci, co).astype(jnp.float32)
        b = params[f"b{l}"].reshape(1, co).astype(jnp.float32)
        if l == 1:
            sc = jnp.ones((1, co), jnp.float32)
            sh = jnp.zeros((1, co), jnp.float32)
        else:
            gamma, beta, mean, var, eps = params[f"bn{l}"]
            s = gamma / jnp.sqrt(var + eps)
            sc = s.reshape(1, co).astype(jnp.float32)
            sh = (beta - mean * s).reshape(1, co).astype(jnp.float32)
        for a in (w9, b, sc, sh):
            inputs.append(a)
            in_specs.append(full_spec(a.shape))

    ds = h // 16
    c4 = chans[4]
    # PyTorch view(N,-1) is NCHW-flatten; permute w_fc to NHWC (h, w, c) order.
    wfc3d = params["w_fc"].reshape(c4, ds, ds).transpose(1, 2, 0).astype(jnp.float32)
    bfc = params["b_fc"].reshape(1, 1, 1).astype(jnp.float32)
    for a in (wfc3d, bfc):
        inputs.append(a)
        in_specs.append(full_spec(a.shape))

    out = pl.pallas_call(
        _discriminator_kernel,
        out_shape=jax.ShapeDtypeStruct((n, 1, 1), jnp.float32),
        grid=(n,),
        in_specs=in_specs,
        out_specs=pl.BlockSpec((1, 1, 1), lambda i: (i, 0, 0)),
        compiler_params=pltpu.CompilerParams(
            dimension_semantics=("parallel",)),
    )(*inputs)
    return out.reshape(n, 1)


# --------------------------- deterministic params ----------------------------

def init_params(key, channels, img_size):
    ks = jax.random.split(key, 12)
    chans = [channels, 16, 32, 64, 128]

    def conv_w(k, cout, cin):
        return 0.05 * jax.random.normal(k, (cout, cin, 3, 3), jnp.float32)

    def bn_params(kg, kb, c, eps):
        gamma = 1.0 + 0.1 * jax.random.normal(kg, (c,), jnp.float32)
        beta = 0.1 * jax.random.normal(kb, (c,), jnp.float32)
        mean = jnp.zeros((c,), jnp.float32)   # running_mean (eval)
        var = jnp.ones((c,), jnp.float32)     # running_var (eval)
        return (gamma, beta, mean, var, eps)

    ds = img_size // 2 ** 4
    params = {
        "w1": conv_w(ks[0], chans[1], chans[0]), "b1": jnp.zeros((chans[1],), jnp.float32),
        "w2": conv_w(ks[1], chans[2], chans[1]), "b2": 0.01 * jnp.ones((chans[2],), jnp.float32),
        "w3": conv_w(ks[2], chans[3], chans[2]), "b3": 0.01 * jnp.ones((chans[3],), jnp.float32),
        "w4": conv_w(ks[3], chans[4], chans[3]), "b4": 0.01 * jnp.ones((chans[4],), jnp.float32),
        "bn2": bn_params(ks[4], ks[5], chans[2], 0.8),   # BatchNorm2d(32, eps=0.8)
        "bn3": bn_params(ks[6], ks[7], chans[3], 0.8),   # BatchNorm2d(64, eps=0.8)
        "bn4": bn_params(ks[8], ks[9], chans[4], 0.8),   # BatchNorm2d(128, eps=0.8)
        "w_fc": 0.05 * jax.random.normal(ks[10], (128 * ds * ds, 1), jnp.float32),
        "b_fc": 0.1 * jax.random.normal(ks[11], (1,), jnp.float32),
    }
    return params


# ------------------------------ pure-JAX reference ---------------------------

def reference_forward(x_nchw, params):
    def block(x, w, b, bn):
        y = lax.conv_general_dilated(
            x, w, window_strides=(2, 2), padding=((1, 1), (1, 1)),
            dimension_numbers=("NCHW", "OIHW", "NCHW"))
        y = y + b.reshape(1, -1, 1, 1)
        y = jnp.where(y >= 0.0, y, 0.2 * y)
        if bn is not None:
            gamma, beta, mean, var, eps = bn
            y = (y - mean.reshape(1, -1, 1, 1)) / jnp.sqrt(var.reshape(1, -1, 1, 1) + eps)
            y = y * gamma.reshape(1, -1, 1, 1) + beta.reshape(1, -1, 1, 1)
        return y

    x = block(x_nchw, params["w1"], params["b1"], None)
    x = block(x, params["w2"], params["b2"], params["bn2"])
    x = block(x, params["w3"], params["b3"], params["bn3"])
    x = block(x, params["w4"], params["b4"], params["bn4"])
    x = x.reshape(x.shape[0], -1)
    y = x @ params["w_fc"] + params["b_fc"].reshape(1, 1)
    return jax.nn.sigmoid(y)


# ----------------------------------- main -------------------------------------

if __name__ == "__main__":
    batch, channels, img_size = 2, 3, 16          # img_shape = (3, 16, 16)
    key = jax.random.PRNGKey(0)
    kx, kp = jax.random.split(key)
    x = jax.random.normal(kx, (batch, channels, img_size, img_size), jnp.float32)
    params = init_params(kp, channels, img_size)

    forward = jax.jit(discriminator_forward)
    out = jax.block_until_ready(forward(x, params))
    ref = reference_forward(x, params)

    assert out.shape == (batch, 1), out.shape
    assert bool(jnp.allclose(out, ref, atol=1e-5, rtol=1e-5)), (out, ref)
    print("KERNEL_OK")
</pallas_src>

<mosaic_0001>
module attributes {stable_mosaic.version = 11 : i64} {
  func.func @_discriminator_kernel(%arg0: i32, %arg1: memref<1x8x8x27xf32, #tpu.memory_space<vmem>>, %arg2: memref<27x16xf32, #tpu.memory_space<vmem>>, %arg3: memref<1x16xf32, #tpu.memory_space<vmem>>, %arg4: memref<1x16xf32, #tpu.memory_space<vmem>>, %arg5: memref<1x16xf32, #tpu.memory_space<vmem>>, %arg6: memref<144x32xf32, #tpu.memory_space<vmem>>, %arg7: memref<1x32xf32, #tpu.memory_space<vmem>>, %arg8: memref<1x32xf32, #tpu.memory_space<vmem>>, %arg9: memref<1x32xf32, #tpu.memory_space<vmem>>, %arg10: memref<288x64xf32, #tpu.memory_space<vmem>>, %arg11: memref<1x64xf32, #tpu.memory_space<vmem>>, %arg12: memref<1x64xf32, #tpu.memory_space<vmem>>, %arg13: memref<1x64xf32, #tpu.memory_space<vmem>>, %arg14: memref<576x128xf32, #tpu.memory_space<vmem>>, %arg15: memref<1x128xf32, #tpu.memory_space<vmem>>, %arg16: memref<1x128xf32, #tpu.memory_space<vmem>>, %arg17: memref<1x128xf32, #tpu.memory_space<vmem>>, %arg18: memref<1x1x128xf32, #tpu.memory_space<vmem>>, %arg19: memref<1x1x1xf32, #tpu.memory_space<vmem>>, %arg20: memref<1x1x1xf32, #tpu.memory_space<vmem>>) attributes {dimension_semantics = [#tpu.dimension_semantics<parallel>], iteration_bounds = array<i64: 2>, scalar_prefetch = 0 : i64, scratch_operands = 0 : i64, tpu.core_type = #tpu.core_type<tc>, window_params = [{transform_indices = @transform_0, window_bounds = array<i64: 1, 8, 8, 27>}, {pipeline_mode = #tpu.pipeline_mode<synchronous>, transform_indices = @transform_1, window_bounds = array<i64: 27, 16>}, {pipeline_mode = #tpu.pipeline_mode<synchronous>, transform_indices = @transform_2, window_bounds = array<i64: 1, 16>}, {pipeline_mode = #tpu.pipeline_mode<synchronous>, transform_indices = @transform_3, window_bounds = array<i64: 1, 16>}, {pipeline_mode = #tpu.pipeline_mode<synchronous>, transform_indices = @transform_4, window_bounds = array<i64: 1, 16>}, {pipeline_mode = #tpu.pipeline_mode<synchronous>, transform_indices = @transform_5, window_bounds = array<i64: 144, 32>}, {pipeline_mode = #tpu.pipeline_mode<synchronous>, transform_indices = @transform_6, window_bounds = array<i64: 1, 32>}, {pipeline_mode = #tpu.pipeline_mode<synchronous>, transform_indices = @transform_7, window_bounds = array<i64: 1, 32>}, {pipeline_mode = #tpu.pipeline_mode<synchronous>, transform_indices = @transform_8, window_bounds = array<i64: 1, 32>}, {pipeline_mode = #tpu.pipeline_mode<synchronous>, transform_indices = @transform_9, window_bounds = array<i64: 288, 64>}, {pipeline_mode = #tpu.pipeline_mode<synchronous>, transform_indices = @transform_10, window_bounds = array<i64: 1, 64>}, {pipeline_mode = #tpu.pipeline_mode<synchronous>, transform_indices = @transform_11, window_bounds = array<i64: 1, 64>}, {pipeline_mode = #tpu.pipeline_mode<synchronous>, transform_indices = @transform_12, window_bounds = array<i64: 1, 64>}, {pipeline_mode = #tpu.pipeline_mode<synchronous>, transform_indices = @transform_13, window_bounds = array<i64: 576, 128>}, {pipeline_mode = #tpu.pipeline_mode<synchronous>, transform_indices = @transform_14, window_bounds = array<i64: 1, 128>}, {pipeline_mode = #tpu.pipeline_mode<synchronous>, transform_indices = @transform_15, window_bounds = array<i64: 1, 128>}, {pipeline_mode = #tpu.pipeline_mode<synchronous>, transform_indices = @transform_16, window_bounds = array<i64: 1, 128>}, {pipeline_mode = #tpu.pipeline_mode<synchronous>, transform_indices = @transform_17, window_bounds = array<i64: 1, 1, 128>}, {pipeline_mode = #tpu.pipeline_mode<synchronous>, transform_indices = @transform_18, window_bounds = array<i64: 1, 1, 1>}, {transform_indices = @transform_19, window_bounds = array<i64: 1, 1, 1>}]} {
    %c0 = arith.constant 0 : index
    %c0_0 = arith.constant 0 : index
    %c0_1 = arith.constant 0 : index
    %c0_2 = arith.constant 0 : index
    %0 = vector.load %arg1[%c0, %c0_0, %c0_1, %c0_2] : memref<1x8x8x27xf32, #tpu.memory_space<vmem>>, vector<1x8x8x27xf32>
    %1 = vector.shape_cast %0 : vector<1x8x8x27xf32> to vector<8x8x27xf32>
    %c0_3 = arith.constant 0 : index
    %c0_4 = arith.constant 0 : index
    %2 = vector.load %arg2[%c0_3, %c0_4] : memref<27x16xf32, #tpu.memory_space<vmem>>, vector<27x16xf32>
    %3 = vector.shape_cast %2 : vector<27x16xf32> to vector<1x27x16xf32>
    %4 = vector.shape_cast %3 : vector<1x27x16xf32> to vector<1x27x16xf32>
    %5 = vector.broadcast %4 : vector<1x27x16xf32> to vector<8x27x16xf32>
    "tpu.trace_start"() <{level = 10 : i32, message = "ovk,okc->ovc"}> : () -> ()
    %cst = arith.constant dense<0.000000e+00> : vector<8x8x16xf32>
    %6 = tpu.matmul %1, %5, %cst {dimension_numbers = #tpu.dot_dimension_numbers<[2], [1], [1], [2], [0, 0, 0, 1, 1, 2], [0], [0]>} : vector<8x8x27xf32>, vector<8x27x16xf32>, vector<8x8x16xf32> -> vector<8x8x16xf32>
    "tpu.trace_stop"() : () -> ()
    %c0_5 = arith.constant 0 : index
    %c0_6 = arith.constant 0 : index
    %7 = vector.load %arg3[%c0_5, %c0_6] : memref<1x16xf32, #tpu.memory_space<vmem>>, vector<1x16xf32>
    %8 = vector.shape_cast %7 : vector<1x16xf32> to vector<1x1x16xf32>
    %9 = vector.broadcast %8 : vector<1x1x16xf32> to vector<8x8x16xf32>
    %10 = arith.addf %6, %9 : vector<8x8x16xf32>
    %cst_7 = arith.constant 0.000000e+00 : f32
    %11 = vector.broadcast %cst_7 : f32 to vector<8x8x16xf32>
    %12 = arith.cmpf oge, %10, %11 : vector<8x8x16xf32>
    %cst_8 = arith.constant 2.000000e-01 : f32
    %13 = vector.broadcast %cst_8 : f32 to vector<8x8x16xf32>
    %14 = arith.mulf %13, %10 : vector<8x8x16xf32>
    %15 = arith.select %12, %10, %14 : vector<8x8x16xi1>, vector<8x8x16xf32>
    %c0_9 = arith.constant 0 : index
    %c0_10 = arith.constant 0 : index
    %16 = vector.load %arg4[%c0_9, %c0_10] : memref<1x16xf32, #tpu.memory_space<vmem>>, vector<1x16xf32>
    %17 = vector.shape_cast %16 : vector<1x16xf32> to vector<1x1x16xf32>
    %18 = vector.broadcast %17 : vector<1x1x16xf32> to vector<8x8x16xf32>
    %19 = arith.mulf %15, %18 : vector<8x8x16xf32>
    %c0_11 = arith.constant 0 : index
    %c0_12 = arith.constant 0 : index
    %20 = vector.load %arg5[%c0_11, %c0_12] : memref<1x16xf32, #tpu.memory_space<vmem>>, vector<1x16xf32>
    %21 = vector.shape_cast %20 : vector<1x16xf32> to vector<1x1x16xf32>
    %22 = vector.broadcast %21 : vector<1x1x16xf32> to vector<8x8x16xf32>
    %23 = arith.addf %19, %22 : vector<8x8x16xf32>
    %24 = tpu.iota {dimensions = array<i32: 0>} : vector<4x8xi32>
    %25 = tpu.iota {dimensions = array<i32: 1>} : vector<4x8xi32>
    %c2_i32 = arith.constant 2 : i32
    %26 = vector.broadcast %c2_i32 : i32 to vector<4x8xi32>
    %27 = arith.muli %26, %24 : vector<4x8xi32>
    %c-1_i32 = arith.constant -1 : i32
    %28 = vector.broadcast %c-1_i32 : i32 to vector<4x8xi32>
    %29 = arith.addi %27, %28 : vector<4x8xi32>
    %30 = arith.cmpi eq, %25, %29 : vector<4x8xi32>
    %cst_13 = arith.constant 1.000000e+00 : f32
    %cst_14 = arith.constant 0.000000e+00 : f32
    %31 = vector.broadcast %cst_13 : f32 to vector<4x8xf32>
    %32 = vector.broadcast %cst_14 : f32 to vector<4x8xf32>
    %33 = arith.select %30, %31, %32 : vector<4x8xi1>, vector<4x8xf32>
    %34 = vector.shape_cast %33 : vector<4x8xf32> to vector<1x4x8xf32>
    %35 = vector.shape_cast %34 : vector<1x4x8xf32> to vector<1x4x8xf32>
    %36 = vector.broadcast %35 : vector<1x4x8xf32> to vector<8x4x8xf32>
    "tpu.trace_start"() <{level = 10 : i32, message = "hvw,hwc->hvc"}> : () -> ()
    %cst_15 = arith.constant dense<0.000000e+00> : vector<8x4x16xf32>
    %37 = tpu.matmul %36, %23, %cst_15 {dimension_numbers = #tpu.dot_dimension_numbers<[2], [1], [1], [2], [0, 0, 0, 1, 1, 2], [0], [0]>} : vector<8x4x8xf32>, vector<8x8x16xf32>, vector<8x4x16xf32> -> vector<8x4x16xf32>
    "tpu.trace_stop"() : () -> ()
    %38 = vector.shape_cast %37 : vector<8x4x16xf32> to vector<4x2x4x16xf32>
    %39 = vector.extract_strided_slice %38 {offsets = [0, 0, 0, 0], sizes = [4, 1, 4, 16], strides = [1, 1, 1, 1]} : vector<4x2x4x16xf32> to vector<4x1x4x16xf32>
    %40 = vector.shape_cast %39 : vector<4x1x4x16xf32> to vector<4x4x16xf32>
    %41 = vector.extract_strided_slice %38 {offsets = [0, 1, 0, 0], sizes = [4, 1, 4, 16], strides = [1, 1, 1, 1]} : vector<4x2x4x16xf32> to vector<4x1x4x16xf32>
    %42 = vector.shape_cast %41 : vector<4x1x4x16xf32> to vector<4x4x16xf32>
    %cst_16 = arith.constant 0.000000e+00 : f32
    %43 = vector.broadcast %cst_16 : f32 to vector<1x4x16xf32>
    %44 = vector.extract_strided_slice %42 {offsets = [0, 0, 0], sizes = [3, 4, 16], strides = [1, 1, 1]} : vector<4x4x16xf32> to vector<3x4x16xf32>
    %45 = tpu.concatenate %43, %44 in 0 : vector<1x4x16xf32>, vector<3x4x16xf32> -> vector<4x4x16xf32>
    %c2_i32_17 = arith.constant 2 : i32
    %46 = vector.broadcast %c2_i32_17 : i32 to vector<4x8xi32>
    %47 = arith.muli %46, %24 : vector<4x8xi32>
    %c0_i32 = arith.constant 0 : i32
    %48 = vector.broadcast %c0_i32 : i32 to vector<4x8xi32>
    %49 = arith.addi %47, %48 : vector<4x8xi32>
    %50 = arith.cmpi eq, %25, %49 : vector<4x8xi32>
    %cst_18 = arith.constant 1.000000e+00 : f32
    %cst_19 = arith.constant 0.000000e+00 : f32
    %51 = vector.broadcast %cst_18 : f32 to vector<4x8xf32>
    %52 = vector.broadcast %cst_19 : f32 to vector<4x8xf32>
    %53 = arith.select %50, %51, %52 : vector<4x8xi1>, vector<4x8xf32>
    %54 = vector.shape_cast %53 : vector<4x8xf32> to vector<1x4x8xf32>
    %55 = vector.shape_cast %54 : vector<1x4x8xf32> to vector<1x4x8xf32>
    %56 = vector.broadcast %55 : vector<1x4x8xf32> to vector<8x4x8xf32>
    "tpu.trace_start"() <{level = 10 : i32, message = "hvw,hwc->hvc"}> : () -> ()
    %cst_20 = arith.constant dense<0.000000e+00> : vector<8x4x16xf32>
    %57 = tpu.matmul %56, %23, %cst_20 {dimension_numbers = #tpu.dot_dimension_numbers<[2], [1], [1], [2], [0, 0, 0, 1, 1, 2], [0], [0]>} : vector<8x4x8xf32>, vector<8x8x16xf32>, vector<8x4x16xf32> -> vector<8x4x16xf32>
    "tpu.trace_stop"() : () -> ()
    %58 = vector.shape_cast %57 : vector<8x4x16xf32> to vector<4x2x4x16xf32>
    %59 = vector.extract_strided_slice %58 {offsets = [0, 0, 0, 0], sizes = [4, 1, 4, 16], strides = [1, 1, 1, 1]} : vector<4x2x4x16xf32> to vector<4x1x4x16xf32>
    %60 = vector.shape_cast %59 : vector<4x1x4x16xf32> to vector<4x4x16xf32>
    %61 = vector.extract_strided_slice %58 {offsets = [0, 1, 0, 0], sizes = [4, 1, 4, 16], strides = [1, 1, 1, 1]} : vector<4x2x4x16xf32> to vector<4x1x4x16xf32>
    %62 = vector.shape_cast %61 : vector<4x1x4x16xf32> to vector<4x4x16xf32>
    %cst_21 = arith.constant 0.000000e+00 : f32
    %63 = vector.broadcast %cst_21 : f32 to vector<1x4x16xf32>
    %64 = vector.extract_strided_slice %62 {offsets = [0, 0, 0], sizes = [3, 4, 16], strides = [1, 1, 1]} : vector<4x4x16xf32> to vector<3x4x16xf32>
    %65 = tpu.concatenate %63, %64 in 0 : vector<1x4x16xf32>, vector<3x4x16xf32> -> vector<4x4x16xf32>
    %c2_i32_22 = arith.constant 2 : i32
    %66 = vector.broadcast %c2_i32_22 : i32 to vector<4x8xi32>
    %67 = arith.muli %66, %24 : vector<4x8xi32>
    %c1_i32 = arith.constant 1 : i32
    %68 = vector.broadcast %c1_i32 : i32 to vector<4x8xi32>
    %69 = arith.addi %67, %68 : vector<4x8xi32>
    %70 = arith.cmpi eq, %25, %69 : vector<4x8xi32>
    %cst_23 = arith.constant 1.000000e+00 : f32
    %cst_24 = arith.constant 0.000000e+00 : f32
    %71 = vector.broadcast %cst_23 : f32 to vector<4x8xf32>
    %72 = vector.broadcast %cst_24 : f32 to vector<4x8xf32>
    %73 = arith.select %70, %71, %72 : vector<4x8xi1>, vector<4x8xf32>
    %74 = vector.shape_cast %73 : vector<4x8xf32> to vector<1x4x8xf32>
    %75 = vector.shape_cast %74 : vector<1x4x8xf32> to vector<1x4x8xf32>
    %76 = vector.broadcast %75 : vector<1x4x8xf32> to vector<8x4x8xf32>
    "tpu.trace_start"() <{level = 10 : i32, message = "hvw,hwc->hvc"}> : () -> ()
    %cst_25 = arith.constant dense<0.000000e+00> : vector<8x4x16xf32>
    %77 = tpu.matmul %76, %23, %cst_25 {dimension_numbers = #tpu.dot_dimension_numbers<[2], [1], [1], [2], [0, 0, 0, 1, 1, 2], [0], [0]>} : vector<8x4x8xf32>, vector<8x8x16xf32>, vector<8x4x16xf32> -> vector<8x4x16xf32>
    "tpu.trace_stop"() : () -> ()
    %78 = vector.shape_cast %77 : vector<8x4x16xf32> to vector<4x2x4x16xf32>
    %79 = vector.extract_strided_slice %78 {offsets = [0, 0, 0, 0], sizes = [4, 1, 4, 16], strides = [1, 1, 1, 1]} : vector<4x2x4x16xf32> to vector<4x1x4x16xf32>
    %80 = vector.shape_cast %79 : vector<4x1x4x16xf32> to vector<4x4x16xf32>
    %81 = vector.extract_strided_slice %78 {offsets = [0, 1, 0, 0], sizes = [4, 1, 4, 16], strides = [1, 1, 1, 1]} : vector<4x2x4x16xf32> to vector<4x1x4x16xf32>
    %82 = vector.shape_cast %81 : vector<4x1x4x16xf32> to vector<4x4x16xf32>
    %cst_26 = arith.constant 0.000000e+00 : f32
    %83 = vector.broadcast %cst_26 : f32 to vector<1x4x16xf32>
    %84 = vector.extract_strided_slice %82 {offsets = [0, 0, 0], sizes = [3, 4, 16], strides = [1, 1, 1]} : vector<4x4x16xf32> to vector<3x4x16xf32>
    %85 = tpu.concatenate %83, %84 in 0 : vector<1x4x16xf32>, vector<3x4x16xf32> -> vector<4x4x16xf32>
    %86 = tpu.concatenate %45, %65, %85, %40, %60, %80, %42, %62, %82 in 2 : vector<4x4x16xf32>, vector<4x4x16xf32>, vector<4x4x16xf32>, vector<4x4x16xf32>, vector<4x4x16xf32>, vector<4x4x16xf32>, vector<4x4x16xf32>, vector<4x4x16xf32>, vector<4x4x16xf32> -> vector<4x4x144xf32>
    %c0_27 = arith.constant 0 : index
    %c0_28 = arith.constant 0 : index
    %87 = vector.load %arg6[%c0_27, %c0_28] : memref<144x32xf32, #tpu.memory_space<vmem>>, vector<144x32xf32>
    %88 = vector.shape_cast %87 : vector<144x32xf32> to vector<1x144x32xf32>
    %89 = vector.shape_cast %88 : vector<1x144x32xf32> to vector<1x144x32xf32>
    %90 = vector.broadcast %89 : vector<1x144x32xf32> to vector<4x144x32xf32>
    "tpu.trace_start"() <{level = 10 : i32, message = "ovk,okc->ovc"}> : () -> ()
    %cst_29 = arith.constant dense<0.000000e+00> : vector<4x4x32xf32>
    %91 = tpu.matmul %86, %90, %cst_29 {dimension_numbers = #tpu.dot_dimension_numbers<[2], [1], [1], [2], [0, 0, 0, 1, 1, 2], [0], [0]>} : vector<4x4x144xf32>, vector<4x144x32xf32>, vector<4x4x32xf32> -> vector<4x4x32xf32>
    "tpu.trace_stop"() : () -> ()
    %c0_30 = arith.constant 0 : index
    %c0_31 = arith.constant 0 : index
    %92 = vector.load %arg7[%c0_30, %c0_31] : memref<1x32xf32, #tpu.memory_space<vmem>>, vector<1x32xf32>
    %93 = vector.shape_cast %92 : vector<1x32xf32> to vector<1x1x32xf32>
    %94 = vector.broadcast %93 : vector<1x1x32xf32> to vector<4x4x32xf32>
    %95 = arith.addf %91, %94 : vector<4x4x32xf32>
    %cst_32 = arith.constant 0.000000e+00 : f32
    %96 = vector.broadcast %cst_32 : f32 to vector<4x4x32xf32>
    %97 = arith.cmpf oge, %95, %96 : vector<4x4x32xf32>
    %cst_33 = arith.constant 2.000000e-01 : f32
    %98 = vector.broadcast %cst_33 : f32 to vector<4x4x32xf32>
    %99 = arith.mulf %98, %95 : vector<4x4x32xf32>
    %100 = arith.select %97, %95, %99 : vector<4x4x32xi1>, vector<4x4x32xf32>
    %c0_34 = arith.constant 0 : index
    %c0_35 = arith.constant 0 : index
    %101 = vector.load %arg8[%c0_34, %c0_35] : memref<1x32xf32, #tpu.memory_space<vmem>>, vector<1x32xf32>
    %102 = vector.shape_cast %101 : vector<1x32xf32> to vector<1x1x32xf32>
    %103 = vector.broadcast %102 : vector<1x1x32xf32> to vector<4x4x32xf32>
    %104 = arith.mulf %100, %103 : vector<4x4x32xf32>
    %c0_36 = arith.constant 0 : index
    %c0_37 = arith.constant 0 : index
    %105 = vector.load %arg9[%c0_36, %c0_37] : memref<1x32xf32, #tpu.memory_space<vmem>>, vector<1x32xf32>
    %106 = vector.shape_cast %105 : vector<1x32xf32> to vector<1x1x32xf32>
    %107 = vector.broadcast %106 : vector<1x1x32xf32> to vector<4x4x32xf32>
    %108 = arith.addf %104, %107 : vector<4x4x32xf32>
    %109 = tpu.iota {dimensions = array<i32: 0>} : vector<2x4xi32>
    %110 = tpu.iota {dimensions = array<i32: 1>} : vector<2x4xi32>
    %c2_i32_38 = arith.constant 2 : i32
    %111 = vector.broadcast %c2_i32_38 : i32 to vector<2x4xi32>
    %112 = arith.muli %111, %109 : vector<2x4xi32>
    %c-1_i32_39 = arith.constant -1 : i32
    %113 = vector.broadcast %c-1_i32_39 : i32 to vector<2x4xi32>
    %114 = arith.addi %112, %113 : vector<2x4xi32>
    %115 = arith.cmpi eq, %110, %114 : vector<2x4xi32>
    %cst_40 = arith.constant 1.000000e+00 : f32
    %cst_41 = arith.constant 0.000000e+00 : f32
    %116 = vector.broadcast %cst_40 : f32 to vector<2x4xf32>
    %117 = vector.broadcast %cst_41 : f32 to vector<2x4xf32>
    %118 = arith.select %115, %116, %117 : vector<2x4xi1>, vector<2x4xf32>
    %119 = vector.shape_cast %118 : vector<2x4xf32> to vector<1x2x4xf32>
    %120 = vector.shape_cast %119 : vector<1x2x4xf32> to vector<1x2x4xf32>
    %121 = vector.broadcast %120 : vector<1x2x4xf32> to vector<4x2x4xf32>
    "tpu.trace_start"() <{level = 10 : i32, message = "hvw,hwc->hvc"}> : () -> ()
    %cst_42 = arith.constant dense<0.000000e+00> : vector<4x2x32xf32>
    %122 = tpu.matmul %121, %108, %cst_42 {dimension_numbers = #tpu.dot_dimension_numbers<[2], [1], [1], [2], [0, 0, 0, 1, 1, 2], [0], [0]>} : vector<4x2x4xf32>, vector<4x4x32xf32>, vector<4x2x32xf32> -> vector<4x2x32xf32>
    "tpu.trace_stop"() : () -> ()
    %123 = vector.shape_cast %122 : vector<4x2x32xf32> to vector<2x2x2x32xf32>
    %124 = vector.extract_strided_slice %123 {offsets = [0, 0, 0, 0], sizes = [2, 1, 2, 32], strides = [1, 1, 1, 1]} : vector<2x2x2x32xf32> to vector<2x1x2x32xf32>
    %125 = vector.shape_cast %124 : vector<2x1x2x32xf32> to vector<2x2x32xf32>
    %126 = vector.extract_strided_slice %123 {offsets = [0, 1, 0, 0], sizes = [2, 1, 2, 32], strides = [1, 1, 1, 1]} : vector<2x2x2x32xf32> to vector<2x1x2x32xf32>
    %127 = vector.shape_cast %126 : vector<2x1x2x32xf32> to vector<2x2x32xf32>
    %cst_43 = arith.constant 0.000000e+00 : f32
    %128 = vector.broadcast %cst_43 : f32 to vector<1x2x32xf32>
    %129 = vector.extract_strided_slice %127 {offsets = [0, 0, 0], sizes = [1, 2, 32], strides = [1, 1, 1]} : vector<2x2x32xf32> to vector<1x2x32xf32>
    %130 = tpu.concatenate %128, %129 in 0 : vector<1x2x32xf32>, vector<1x2x32xf32> -> vector<2x2x32xf32>
    %c2_i32_44 = arith.constant 2 : i32
    %131 = vector.broadcast %c2_i32_44 : i32 to vector<2x4xi32>
    %132 = arith.muli %131, %109 : vector<2x4xi32>
    %c0_i32_45 = arith.constant 0 : i32
    %133 = vector.broadcast %c0_i32_45 : i32 to vector<2x4xi32>
    %134 = arith.addi %132, %133 : vector<2x4xi32>
    %135 = arith.cmpi eq, %110, %134 : vector<2x4xi32>
    %cst_46 = arith.constant 1.000000e+00 : f32
    %cst_47 = arith.constant 0.000000e+00 : f32
    %136 = vector.broadcast %cst_46 : f32 to vector<2x4xf32>
    %137 = vector.broadcast %cst_47 : f32 to vector<2x4xf32>
    %138 = arith.select %135, %136, %137 : vector<2x4xi1>, vector<2x4xf32>
    %139 = vector.shape_cast %138 : vector<2x4xf32> to vector<1x2x4xf32>
    %140 = vector.shape_cast %139 : vector<1x2x4xf32> to vector<1x2x4xf32>
    %141 = vector.broadcast %140 : vector<1x2x4xf32> to vector<4x2x4xf32>
    "tpu.trace_start"() <{level = 10 : i32, message = "hvw,hwc->hvc"}> : () -> ()
    %cst_48 = arith.constant dense<0.000000e+00> : vector<4x2x32xf32>
    %142 = tpu.matmul %141, %108, %cst_48 {dimension_numbers = #tpu.dot_dimension_numbers<[2], [1], [1], [2], [0, 0, 0, 1, 1, 2], [0], [0]>} : vector<4x2x4xf32>, vector<4x4x32xf32>, vector<4x2x32xf32> -> vector<4x2x32xf32>
    "tpu.trace_stop"() : () -> ()
    %143 = vector.shape_cast %142 : vector<4x2x32xf32> to vector<2x2x2x32xf32>
    %144 = vector.extract_strided_slice %143 {offsets = [0, 0, 0, 0], sizes = [2, 1, 2, 32], strides = [1, 1, 1, 1]} : vector<2x2x2x32xf32> to vector<2x1x2x32xf32>
    %145 = vector.shape_cast %144 : vector<2x1x2x32xf32> to vector<2x2x32xf32>
    %146 = vector.extract_strided_slice %143 {offsets = [0, 1, 0, 0], sizes = [2, 1, 2, 32], strides = [1, 1, 1, 1]} : vector<2x2x2x32xf32> to vector<2x1x2x32xf32>
    %147 = vector.shape_cast %146 : vector<2x1x2x32xf32> to vector<2x2x32xf32>
    %cst_49 = arith.constant 0.000000e+00 : f32
    %148 = vector.broadcast %cst_49 : f32 to vector<1x2x32xf32>
    %149 = vector.extract_strided_slice %147 {offsets = [0, 0, 0], sizes = [1, 2, 32], strides = [1, 1, 1]} : vector<2x2x32xf32> to vector<1x2x32xf32>
    %150 = tpu.concatenate %148, %149 in 0 : vector<1x2x32xf32>, vector<1x2x32xf32> -> vector<2x2x32xf32>
    %c2_i32_50 = arith.constant 2 : i32
    %151 = vector.broadcast %c2_i32_50 : i32 to vector<2x4xi32>
    %152 = arith.muli %151, %109 : vector<2x4xi32>
    %c1_i32_51 = arith.constant 1 : i32
    %153 = vector.broadcast %c1_i32_51 : i32 to vector<2x4xi32>
    %154 = arith.addi %152, %153 : vector<2x4xi32>
    %155 = arith.cmpi eq, %110, %154 : vector<2x4xi32>
    %cst_52 = arith.constant 1.000000e+00 : f32
    %cst_53 = arith.constant 0.000000e+00 : f32
    %156 = vector.broadcast %cst_52 : f32 to vector<2x4xf32>
    %157 = vector.broadcast %cst_53 : f32 to vector<2x4xf32>
    %158 = arith.select %155, %156, %157 : vector<2x4xi1>, vector<2x4xf32>
    %159 = vector.shape_cast %158 : vector<2x4xf32> to vector<1x2x4xf32>
    %160 = vector.shape_cast %159 : vector<1x2x4xf32> to vector<1x2x4xf32>
    %161 = vector.broadcast %160 : vector<1x2x4xf32> to vector<4x2x4xf32>
    "tpu.trace_start"() <{level = 10 : i32, message = "hvw,hwc->hvc"}> : () -> ()
    %cst_54 = arith.constant dense<0.000000e+00> : vector<4x2x32xf32>
    %162 = tpu.matmul %161, %108, %cst_54 {dimension_numbers = #tpu.dot_dimension_numbers<[2], [1], [1], [2], [0, 0, 0, 1, 1, 2], [0], [0]>} : vector<4x2x4xf32>, vector<4x4x32xf32>, vector<4x2x32xf32> -> vector<4x2x32xf32>
    "tpu.trace_stop"() : () -> ()
    %163 = vector.shape_cast %162 : vector<4x2x32xf32> to vector<2x2x2x32xf32>
    %164 = vector.extract_strided_slice %163 {offsets = [0, 0, 0, 0], sizes = [2, 1, 2, 32], strides = [1, 1, 1, 1]} : vector<2x2x2x32xf32> to vector<2x1x2x32xf32>
    %165 = vector.shape_cast %164 : vector<2x1x2x32xf32> to vector<2x2x32xf32>
    %166 = vector.extract_strided_slice %163 {offsets = [0, 1, 0, 0], sizes = [2, 1, 2, 32], strides = [1, 1, 1, 1]} : vector<2x2x2x32xf32> to vector<2x1x2x32xf32>
    %167 = vector.shape_cast %166 : vector<2x1x2x32xf32> to vector<2x2x32xf32>
    %cst_55 = arith.constant 0.000000e+00 : f32
    %168 = vector.broadcast %cst_55 : f32 to vector<1x2x32xf32>
    %169 = vector.extract_strided_slice %167 {offsets = [0, 0, 0], sizes = [1, 2, 32], strides = [1, 1, 1]} : vector<2x2x32xf32> to vector<1x2x32xf32>
    %170 = tpu.concatenate %168, %169 in 0 : vector<1x2x32xf32>, vector<1x2x32xf32> -> vector<2x2x32xf32>
    %171 = tpu.concatenate %130, %150, %170, %125, %145, %165, %127, %147, %167 in 2 : vector<2x2x32xf32>, vector<2x2x32xf32>, vector<2x2x32xf32>, vector<2x2x32xf32>, vector<2x2x32xf32>, vector<2x2x32xf32>, vector<2x2x32xf32>, vector<2x2x32xf32>, vector<2x2x32xf32> -> vector<2x2x288xf32>
    %c0_56 = arith.constant 0 : index
    %c0_57 = arith.constant 0 : index
    %172 = vector.load %arg10[%c0_56, %c0_57] : memref<288x64xf32, #tpu.memory_space<vmem>>, vector<288x64xf32>
    %173 = vector.shape_cast %172 : vector<288x64xf32> to vector<1x288x64xf32>
    %174 = vector.shape_cast %173 : vector<1x288x64xf32> to vector<1x288x64xf32>
    %175 = vector.broadcast %174 : vector<1x288x64xf32> to vector<2x288x64xf32>
    "tpu.trace_start"() <{level = 10 : i32, message = "ovk,okc->ovc"}> : () -> ()
    %cst_58 = arith.constant dense<0.000000e+00> : vector<2x2x64xf32>
    %176 = tpu.matmul %171, %175, %cst_58 {dimension_numbers = #tpu.dot_dimension_numbers<[2], [1], [1], [2], [0, 0, 0, 1, 1, 2], [0], [0]>} : vector<2x2x288xf32>, vector<2x288x64xf32>, vector<2x2x64xf32> -> vector<2x2x64xf32>
    "tpu.trace_stop"() : () -> ()
    %c0_59 = arith.constant 0 : index
    %c0_60 = arith.constant 0 : index
    %177 = vector.load %arg11[%c0_59, %c0_60] : memref<1x64xf32, #tpu.memory_space<vmem>>, vector<1x64xf32>
    %178 = vector.shape_cast %177 : vector<1x64xf32> to vector<1x1x64xf32>
    %179 = vector.broadcast %178 : vector<1x1x64xf32> to vector<2x2x64xf32>
    %180 = arith.addf %176, %179 : vector<2x2x64xf32>
    %cst_61 = arith.constant 0.000000e+00 : f32
    %181 = vector.broadcast %cst_61 : f32 to vector<2x2x64xf32>
    %182 = arith.cmpf oge, %180, %181 : vector<2x2x64xf32>
    %cst_62 = arith.constant 2.000000e-01 : f32
    %183 = vector.broadcast %cst_62 : f32 to vector<2x2x64xf32>
    %184 = arith.mulf %183, %180 : vector<2x2x64xf32>
    %185 = arith.select %182, %180, %184 : vector<2x2x64xi1>, vector<2x2x64xf32>
    %c0_63 = arith.constant 0 : index
    %c0_64 = arith.constant 0 : index
    %186 = vector.load %arg12[%c0_63, %c0_64] : memref<1x64xf32, #tpu.memory_space<vmem>>, vector<1x64xf32>
    %187 = vector.shape_cast %186 : vector<1x64xf32> to vector<1x1x64xf32>
    %188 = vector.broadcast %187 : vector<1x1x64xf32> to vector<2x2x64xf32>
    %189 = arith.mulf %185, %188 : vector<2x2x64xf32>
    %c0_65 = arith.constant 0 : index
    %c0_66 = arith.constant 0 : index
    %190 = vector.load %arg13[%c0_65, %c0_66] : memref<1x64xf32, #tpu.memory_space<vmem>>, vector<1x64xf32>
    %191 = vector.shape_cast %190 : vector<1x64xf32> to vector<1x1x64xf32>
    %192 = vector.broadcast %191 : vector<1x1x64xf32> to vector<2x2x64xf32>
    %193 = arith.addf %189, %192 : vector<2x2x64xf32>
    %194 = tpu.iota {dimensions = array<i32: 0>} : vector<1x2xi32>
    %195 = tpu.iota {dimensions = array<i32: 1>} : vector<1x2xi32>
    %c2_i32_67 = arith.constant 2 : i32
    %196 = vector.broadcast %c2_i32_67 : i32 to vector<1x2xi32>
    %197 = arith.muli %196, %194 : vector<1x2xi32>
    %c-1_i32_68 = arith.constant -1 : i32
    %198 = vector.broadcast %c-1_i32_68 : i32 to vector<1x2xi32>
    %199 = arith.addi %197, %198 : vector<1x2xi32>
    %200 = arith.cmpi eq, %195, %199 : vector<1x2xi32>
    %cst_69 = arith.constant 1.000000e+00 : f32
    %cst_70 = arith.constant 0.000000e+00 : f32
    %201 = vector.broadcast %cst_69 : f32 to vector<1x2xf32>
    %202 = vector.broadcast %cst_70 : f32 to vector<1x2xf32>
    %203 = arith.select %200, %201, %202 : vector<1x2xi1>, vector<1x2xf32>
    %204 = vector.shape_cast %203 : vector<1x2xf32> to vector<1x1x2xf32>
    %205 = vector.shape_cast %204 : vector<1x1x2xf32> to vector<1x1x2xf32>
    %206 = vector.broadcast %205 : vector<1x1x2xf32> to vector<2x1x2xf32>
    "tpu.trace_start"() <{level = 10 : i32, message = "hvw,hwc->hvc"}> : () -> ()
    %cst_71 = arith.constant dense<0.000000e+00> : vector<2x1x64xf32>
    %207 = tpu.matmul %206, %193, %cst_71 {dimension_numbers = #tpu.dot_dimension_numbers<[2], [1], [1], [2], [0, 0, 0, 1, 1, 2], [0], [0]>} : vector<2x1x2xf32>, vector<2x2x64xf32>, vector<2x1x64xf32> -> vector<2x1x64xf32>
    "tpu.trace_stop"() : () -> ()
    %208 = vector.shape_cast %207 : vector<2x1x64xf32> to vector<1x2x1x64xf32>
    %209 = vector.extract_strided_slice %208 {offsets = [0, 0, 0, 0], sizes = [1, 1, 1, 64], strides = [1, 1, 1, 1]} : vector<1x2x1x64xf32> to vector<1x1x1x64xf32>
    %210 = vector.shape_cast %209 : vector<1x1x1x64xf32> to vector<1x1x64xf32>
    %211 = vector.extract_strided_slice %208 {offsets = [0, 1, 0, 0], sizes = [1, 1, 1, 64], strides = [1, 1, 1, 1]} : vector<1x2x1x64xf32> to vector<1x1x1x64xf32>
    %212 = vector.shape_cast %211 : vector<1x1x1x64xf32> to vector<1x1x64xf32>
    %cst_72 = arith.constant 0.000000e+00 : f32
    %213 = vector.broadcast %cst_72 : f32 to vector<1x1x64xf32>
    %c2_i32_73 = arith.constant 2 : i32
    %214 = vector.broadcast %c2_i32_73 : i32 to vector<1x2xi32>
    %215 = arith.muli %214, %194 : vector<1x2xi32>
    %c0_i32_74 = arith.constant 0 : i32
    %216 = vector.broadcast %c0_i32_74 : i32 to vector<1x2xi32>
    %217 = arith.addi %215, %216 : vector<1x2xi32>
    %218 = arith.cmpi eq, %195, %217 : vector<1x2xi32>
    %cst_75 = arith.constant 1.000000e+00 : f32
    %cst_76 = arith.constant 0.000000e+00 : f32
    %219 = vector.broadcast %cst_75 : f32 to vector<1x2xf32>
    %220 = vector.broadcast %cst_76 : f32 to vector<1x2xf32>
    %221 = arith.select %218, %219, %220 : vector<1x2xi1>, vector<1x2xf32>
    %222 = vector.shape_cast %221 : vector<1x2xf32> to vector<1x1x2xf32>
    %223 = vector.shape_cast %222 : vector<1x1x2xf32> to vector<1x1x2xf32>
    %224 = vector.broadcast %223 : vector<1x1x2xf32> to vector<2x1x2xf32>
    "tpu.trace_start"() <{level = 10 : i32, message = "hvw,hwc->hvc"}> : () -> ()
    %cst_77 = arith.constant dense<0.000000e+00> : vector<2x1x64xf32>
    %225 = tpu.matmul %224, %193, %cst_77 {dimension_numbers = #tpu.dot_dimension_numbers<[2], [1], [1], [2], [0, 0, 0, 1, 1, 2], [0], [0]>} : vector<2x1x2xf32>, vector<2x2x64xf32>, vector<2x1x64xf32> -> vector<2x1x64xf32>
    "tpu.trace_stop"() : () -> ()
    %226 = vector.shape_cast %225 : vector<2x1x64xf32> to vector<1x2x1x64xf32>
    %227 = vector.extract_strided_slice %226 {offsets = [0, 0, 0, 0], sizes = [1, 1, 1, 64], strides = [1, 1, 1, 1]} : vector<1x2x1x64xf32> to vector<1x1x1x64xf32>
    %228 = vector.shape_cast %227 : vector<1x1x1x64xf32> to vector<1x1x64xf32>
    %229 = vector.extract_strided_slice %226 {offsets = [0, 1, 0, 0], sizes = [1, 1, 1, 64], strides = [1, 1, 1, 1]} : vector<1x2x1x64xf32> to vector<1x1x1x64xf32>
    %230 = vector.shape_cast %229 : vector<1x1x1x64xf32> to vector<1x1x64xf32>
    %cst_78 = arith.constant 0.000000e+00 : f32
    %231 = vector.broadcast %cst_78 : f32 to vector<1x1x64xf32>
    %c2_i32_79 = arith.constant 2 : i32
    %232 = vector.broadcast %c2_i32_79 : i32 to vector<1x2xi32>
    %233 = arith.muli %232, %194 : vector<1x2xi32>
    %c1_i32_80 = arith.constant 1 : i32
    %234 = vector.broadcast %c1_i32_80 : i32 to vector<1x2xi32>
    %235 = arith.addi %233, %234 : vector<1x2xi32>
    %236 = arith.cmpi eq, %195, %235 : vector<1x2xi32>
    %cst_81 = arith.constant 1.000000e+00 : f32
    %cst_82 = arith.constant 0.000000e+00 : f32
    %237 = vector.broadcast %cst_81 : f32 to vector<1x2xf32>
    %238 = vector.broadcast %cst_82 : f32 to vector<1x2xf32>
    %239 = arith.select %236, %237, %238 : vector<1x2xi1>, vector<1x2xf32>
    %240 = vector.shape_cast %239 : vector<1x2xf32> to vector<1x1x2xf32>
    %241 = vector.shape_cast %240 : vector<1x1x2xf32> to vector<1x1x2xf32>
    %242 = vector.broadcast %241 : vector<1x1x2xf32> to vector<2x1x2xf32>
    "tpu.trace_start"() <{level = 10 : i32, message = "hvw,hwc->hvc"}> : () -> ()
    %cst_83 = arith.constant dense<0.000000e+00> : vector<2x1x64xf32>
    %243 = tpu.matmul %242, %193, %cst_83 {dimension_numbers = #tpu.dot_dimension_numbers<[2], [1], [1], [2], [0, 0, 0, 1, 1, 2], [0], [0]>} : vector<2x1x2xf32>, vector<2x2x64xf32>, vector<2x1x64xf32> -> vector<2x1x64xf32>
    "tpu.trace_stop"() : () -> ()
    %244 = vector.shape_cast %243 : vector<2x1x64xf32> to vector<1x2x1x64xf32>
    %245 = vector.extract_strided_slice %244 {offsets = [0, 0, 0, 0], sizes = [1, 1, 1, 64], strides = [1, 1, 1, 1]} : vector<1x2x1x64xf32> to vector<1x1x1x64xf32>
    %246 = vector.shape_cast %245 : vector<1x1x1x64xf32> to vector<1x1x64xf32>
    %247 = vector.extract_strided_slice %244 {offsets = [0, 1, 0, 0], sizes = [1, 1, 1, 64], strides = [1, 1, 1, 1]} : vector<1x2x1x64xf32> to vector<1x1x1x64xf32>
    %248 = vector.shape_cast %247 : vector<1x1x1x64xf32> to vector<1x1x64xf32>
    %cst_84 = arith.constant 0.000000e+00 : f32
    %249 = vector.broadcast %cst_84 : f32 to vector<1x1x64xf32>
    %250 = tpu.concatenate %213, %231, %249, %210, %228, %246, %212, %230, %248 in 2 : vector<1x1x64xf32>, vector<1x1x64xf32>, vector<1x1x64xf32>, vector<1x1x64xf32>, vector<1x1x64xf32>, vector<1x1x64xf32>, vector<1x1x64xf32>, vector<1x1x64xf32>, vector<1x1x64xf32> -> vector<1x1x576xf32>
    %c0_85 = arith.constant 0 : index
    %c0_86 = arith.constant 0 : index
    %251 = vector.load %arg14[%c0_85, %c0_86] : memref<576x128xf32, #tpu.memory_space<vmem>>, vector<576x128xf32>
    %252 = vector.shape_cast %251 : vector<576x128xf32> to vector<1x576x128xf32>
    "tpu.trace_start"() <{level = 10 : i32, message = "ovk,okc->ovc"}> : () -> ()
    %cst_87 = arith.constant dense<0.000000e+00> : vector<1x1x128xf32>
    %253 = tpu.matmul %250, %252, %cst_87 {dimension_numbers = #tpu.dot_dimension_numbers<[2], [1], [1], [2], [0, 0, 0, 1, 1, 2], [0], [0]>} : vector<1x1x576xf32>, vector<1x576x128xf32>, vector<1x1x128xf32> -> vector<1x1x128xf32>
    "tpu.trace_stop"() : () -> ()
    %c0_88 = arith.constant 0 : index
    %c0_89 = arith.constant 0 : index
    %254 = vector.load %arg15[%c0_88, %c0_89] : memref<1x128xf32, #tpu.memory_space<vmem>>, vector<1x128xf32>
    %255 = vector.shape_cast %254 : vector<1x128xf32> to vector<1x1x128xf32>
    %256 = arith.addf %253, %255 : vector<1x1x128xf32>
    %cst_90 = arith.constant 0.000000e+00 : f32
    %257 = vector.broadcast %cst_90 : f32 to vector<1x1x128xf32>
    %258 = arith.cmpf oge, %256, %257 : vector<1x1x128xf32>
    %cst_91 = arith.constant 2.000000e-01 : f32
    %259 = vector.broadcast %cst_91 : f32 to vector<1x1x128xf32>
    %260 = arith.mulf %259, %256 : vector<1x1x128xf32>
    %261 = arith.select %258, %256, %260 : vector<1x1x128xi1>, vector<1x1x128xf32>
    %c0_92 = arith.constant 0 : index
    %c0_93 = arith.constant 0 : index
    %262 = vector.load %arg16[%c0_92, %c0_93] : memref<1x128xf32, #tpu.memory_space<vmem>>, vector<1x128xf32>
    %263 = vector.shape_cast %262 : vector<1x128xf32> to vector<1x1x128xf32>
    %264 = arith.mulf %261, %263 : vector<1x1x128xf32>
    %c0_94 = arith.constant 0 : index
    %c0_95 = arith.constant 0 : index
    %265 = vector.load %arg17[%c0_94, %c0_95] : memref<1x128xf32, #tpu.memory_space<vmem>>, vector<1x128xf32>
    %266 = vector.shape_cast %265 : vector<1x128xf32> to vector<1x1x128xf32>
    %267 = arith.addf %264, %266 : vector<1x1x128xf32>
    %c0_96 = arith.constant 0 : index
    %c0_97 = arith.constant 0 : index
    %c0_98 = arith.constant 0 : index
    %268 = vector.load %arg18[%c0_96, %c0_97, %c0_98] : memref<1x1x128xf32, #tpu.memory_space<vmem>>, vector<1x1x128xf32>
    %269 = arith.mulf %267, %268 : vector<1x1x128xf32>
    %cst_99 = arith.constant dense<0.000000e+00> : vector<1x1xf32>
    %270 = vector.multi_reduction <add>, %269, %cst_99 [2] : vector<1x1x128xf32> to vector<1x1xf32>
    %271 = vector.shape_cast %270 : vector<1x1xf32> to vector<1x1x1xf32>
    %cst_100 = arith.constant dense<0.000000e+00> : vector<1x1xf32>
    %272 = vector.multi_reduction <add>, %271, %cst_100 [0] : vector<1x1x1xf32> to vector<1x1xf32>
    %273 = vector.shape_cast %272 : vector<1x1xf32> to vector<1x1x1xf32>
    %cst_101 = arith.constant dense<0.000000e+00> : vector<1x1xf32>
    %274 = vector.multi_reduction <add>, %273, %cst_101 [1] : vector<1x1x1xf32> to vector<1x1xf32>
    %275 = vector.shape_cast %274 : vector<1x1xf32> to vector<1x1x1xf32>
    %c0_102 = arith.constant 0 : index
    %c0_103 = arith.constant 0 : index
    %c0_104 = arith.constant 0 : index
    %276 = vector.load %arg19[%c0_102, %c0_103, %c0_104] : memref<1x1x1xf32, #tpu.memory_space<vmem>>, vector<1x1x1xf32>
    %277 = arith.addf %275, %276 : vector<1x1x1xf32>
    %cst_105 = arith.constant 0.000000e+00 : f32
    %278 = vector.broadcast %cst_105 : f32 to vector<1x1x1xf32>
    %279 = arith.subf %278, %277 : vector<1x1x1xf32>
    %280 = math.exp %279 : vector<1x1x1xf32>
    %cst_106 = arith.constant 1.000000e+00 : f32
    %281 = vector.broadcast %cst_106 : f32 to vector<1x1x1xf32>
    %282 = arith.addf %281, %280 : vector<1x1x1xf32>
    %cst_107 = arith.constant 1.000000e+00 : f32
    %283 = vector.broadcast %cst_107 : f32 to vector<1x1x1xf32>
    %284 = arith.divf %283, %282 : vector<1x1x1xf32>
    %c0_108 = arith.constant 0 : index
    %c0_109 = arith.constant 0 : index
    %c0_110 = arith.constant 0 : index
    %285 = vector.load %arg20[%c0_108, %c0_109, %c0_110] : memref<1x1x1xf32, #tpu.memory_space<vmem>>, vector<1x1x1xf32>
    tpu.vector_store %arg20[%c0_108, %c0_109, %c0_110], %284 {strides = array<i32>} : memref<1x1x1xf32, #tpu.memory_space<vmem>>, vector<1x1x1xf32>,
    return
  }
  func.func @transform_0(%arg0: i32) -> (i32, i32, i32, i32) {
    %c0_i32 = arith.constant 0 : i32
    %c0_i32_0 = arith.constant 0 : i32
    %c0_i32_1 = arith.constant 0 : i32
    %c0_i32_2 = arith.constant 0 : i32
    return %arg0, %c0_i32, %c0_i32_0, %c0_i32_1 : i32, i32, i32, i32
  }
  func.func @transform_1(%arg0: i32) -> (i32, i32) {
    %c0_i32 = arith.constant 0 : i32
    %c0_i32_0 = arith.constant 0 : i32
    %c0_i32_1 = arith.constant 0 : i32
    return %c0_i32, %c0_i32_0 : i32, i32
  }
  func.func @transform_2(%arg0: i32) -> (i32, i32) {
    %c0_i32 = arith.constant 0 : i32
    %c0_i32_0 = arith.constant 0 : i32
    %c0_i32_1 = arith.constant 0 : i32
    return %c0_i32, %c0_i32_0 : i32, i32
  }
  func.func @transform_3(%arg0: i32) -> (i32, i32) {
    %c0_i32 = arith.constant 0 : i32
    %c0_i32_0 = arith.constant 0 : i32
    %c0_i32_1 = arith.constant 0 : i32
    return %c0_i32, %c0_i32_0 : i32, i32
  }
  func.func @transform_4(%arg0: i32) -> (i32, i32) {
    %c0_i32 = arith.constant 0 : i32
    %c0_i32_0 = arith.constant 0 : i32
    %c0_i32_1 = arith.constant 0 : i32
    return %c0_i32, %c0_i32_0 : i32, i32
  }
  func.func @transform_5(%arg0: i32) -> (i32, i32) {
    %c0_i32 = arith.constant 0 : i32
    %c0_i32_0 = arith.constant 0 : i32
    %c0_i32_1 = arith.constant 0 : i32
    return %c0_i32, %c0_i32_0 : i32, i32
  }
  func.func @transform_6(%arg0: i32) -> (i32, i32) {
    %c0_i32 = arith.constant 0 : i32
    %c0_i32_0 = arith.constant 0 : i32
    %c0_i32_1 = arith.constant 0 : i32
    return %c0_i32, %c0_i32_0 : i32, i32
  }
  func.func @transform_7(%arg0: i32) -> (i32, i32) {
    %c0_i32 = arith.constant 0 : i32
    %c0_i32_0 = arith.constant 0 : i32
    %c0_i32_1 = arith.constant 0 : i32
    return %c0_i32, %c0_i32_0 : i32, i32
  }
  func.func @transform_8(%arg0: i32) -> (i32, i32) {
    %c0_i32 = arith.constant 0 : i32
    %c0_i32_0 = arith.constant 0 : i32
    %c0_i32_1 = arith.constant 0 : i32
    return %c0_i32, %c0_i32_0 : i32, i32
  }
  func.func @transform_9(%arg0: i32) -> (i32, i32) {
    %c0_i32 = arith.constant 0 : i32
    %c0_i32_0 = arith.constant 0 : i32
    %c0_i32_1 = arith.constant 0 : i32
    return %c0_i32, %c0_i32_0 : i32, i32
  }
  func.func @transform_10(%arg0: i32) -> (i32, i32) {
    %c0_i32 = arith.constant 0 : i32
    %c0_i32_0 = arith.constant 0 : i32
    %c0_i32_1 = arith.constant 0 : i32
    return %c0_i32, %c0_i32_0 : i32, i32
  }
  func.func @transform_11(%arg0: i32) -> (i32, i32) {
    %c0_i32 = arith.constant 0 : i32
    %c0_i32_0 = arith.constant 0 : i32
    %c0_i32_1 = arith.constant 0 : i32
    return %c0_i32, %c0_i32_0 : i32, i32
  }
  func.func @transform_12(%arg0: i32) -> (i32, i32) {
    %c0_i32 = arith.constant 0 : i32
    %c0_i32_0 = arith.constant 0 : i32
    %c0_i32_1 = arith.constant 0 : i32
    return %c0_i32, %c0_i32_0 : i32, i32
  }
  func.func @transform_13(%arg0: i32) -> (i32, i32) {
    %c0_i32 = arith.constant 0 : i32
    %c0_i32_0 = arith.constant 0 : i32
    %c0_i32_1 = arith.constant 0 : i32
    return %c0_i32, %c0_i32_0 : i32, i32
  }
  func.func @transform_14(%arg0: i32) -> (i32, i32) {
    %c0_i32 = arith.constant 0 : i32
    %c0_i32_0 = arith.constant 0 : i32
    %c0_i32_1 = arith.constant 0 : i32
    return %c0_i32, %c0_i32_0 : i32, i32
  }
  func.func @transform_15(%arg0: i32) -> (i32, i32) {
    %c0_i32 = arith.constant 0 : i32
    %c0_i32_0 = arith.constant 0 : i32
    %c0_i32_1 = arith.constant 0 : i32
    return %c0_i32, %c0_i32_0 : i32, i32
  }
  func.func @transform_16(%arg0: i32) -> (i32, i32) {
    %c0_i32 = arith.constant 0 : i32
    %c0_i32_0 = arith.constant 0 : i32
    %c0_i32_1 = arith.constant 0 : i32
    return %c0_i32, %c0_i32_0 : i32, i32
  }
  func.func @transform_17(%arg0: i32) -> (i32, i32, i32) {
    %c0_i32 = arith.constant 0 : i32
    %c0_i32_0 = arith.constant 0 : i32
    %c0_i32_1 = arith.constant 0 : i32
    %c0_i32_2 = arith.constant 0 : i32
    return %c0_i32, %c0_i32_0, %c0_i32_1 : i32, i32, i32
  }
  func.func @transform_18(%arg0: i32) -> (i32, i32, i32) {
    %c0_i32 = arith.constant 0 : i32
    %c0_i32_0 = arith.constant 0 : i32
    %c0_i32_1 = arith.constant 0 : i32
    %c0_i32_2 = arith.constant 0 : i32
    return %c0_i32, %c0_i32_0, %c0_i32_1 : i32, i32, i32
  }
  func.func @transform_19(%arg0: i32) -> (i32, i32, i32) {
    %c0_i32 = arith.constant 0 : i32
    %c0_i32_0 = arith.constant 0 : i32
    %c0_i32_1 = arith.constant 0 : i32
    return %arg0, %c0_i32, %c0_i32_0 : i32, i32, i32
  }
}

</mosaic_0001>

<llo_original>
// kernel: discriminator_forward.1
$region0: #{discriminator_forward.1}
  #allocation0 [shape = 'u32[]', space=smem, size = 0x4, offset = 0x4, fixed_abs, tag = 'smem constant byte address 0x4 - core index']
  #allocation1 [shape = 'u32[144,128]{1,0:T(1,128)}', space=vmem, size = 0x12000, scoped, tag = 'internal scratch']
  #allocation2 [shape = 'f32[1,1,1]{2,1,0:T(1,128)S(1)}', space=vmem, size = 0x200, scoped, tag = 'scoped memory for discriminator_forward.1']
  %s0 = inlined_call_operand.vmem [shape: f32[2,8,8,27], index: 0, kind: input, shape index: {}]
  %s1 = inlined_call_operand.vmem [shape: f32[27,16], index: 1, kind: input, shape index: {}]
  %s2 = inlined_call_operand.vmem [shape: f32[1,16], index: 2, kind: input, shape index: {}]
  %s3 = inlined_call_operand.vmem [shape: f32[1,16], index: 3, kind: input, shape index: {}]
  %s4 = inlined_call_operand.vmem [shape: f32[1,16], index: 4, kind: input, shape index: {}]
  %s5 = inlined_call_operand.vmem [shape: f32[144,32], index: 5, kind: input, shape index: {}]
  %s6 = inlined_call_operand.vmem [shape: f32[1,32], index: 6, kind: input, shape index: {}]
  %s7 = inlined_call_operand.vmem [shape: f32[1,32], index: 7, kind: input, shape index: {}]
  %s8 = inlined_call_operand.vmem [shape: f32[1,32], index: 8, kind: input, shape index: {}]
  %s9 = inlined_call_operand.vmem [shape: f32[288,64], index: 9, kind: input, shape index: {}]
  %s10 = inlined_call_operand.vmem [shape: f32[1,64], index: 10, kind: input, shape index: {}]
  %s11 = inlined_call_operand.vmem [shape: f32[1,64], index: 11, kind: input, shape index: {}]
  %s12 = inlined_call_operand.vmem [shape: f32[1,64], index: 12, kind: input, shape index: {}]
  %s13 = inlined_call_operand.vmem [shape: f32[576,128], index: 13, kind: input, shape index: {}]
  %s14 = inlined_call_operand.vmem [shape: f32[1,128], index: 14, kind: input, shape index: {}]
  %s15 = inlined_call_operand.vmem [shape: f32[1,128], index: 15, kind: input, shape index: {}]
  %s16 = inlined_call_operand.vmem [shape: f32[1,128], index: 16, kind: input, shape index: {}]
  %s17 = inlined_call_operand.vmem [shape: f32[1,1,128], index: 17, kind: input, shape index: {}]
  %s18 = inlined_call_operand.<no memory space> [shape: f32[1,1,1], index: 18, kind: input, shape index: {}]
  %s19 = inlined_call_operand.vmem [shape: f32[2,1,1], index: 19, kind: output, shape index: {}]
  %s20 = sld [smem:[#allocation0]]
  $region109: #{discriminator_forward.1} parent=0
    _
  %s22 = ssub.s32 1, %s20
  %s23 = scalar_select 0, %s22, %s20
  %v24 = vstv %s18
  %25 = vst [vmem:[#allocation2] sm:$0x1] %v24
  loop: start=0, step=1, limit=4
  $region2: #{discriminator_forward.1} parent=0 // loop_pre_header
    _
  $region3: #{discriminator_forward.1} parent=0 // loop_header
    %s27 = sphi 0, %s31
    %p28 = scmp.ge.s32.totalorder %s27, 4
    %s37 = sphi 0, %s39
    %s40 = sphi 0, %s37
    %s41 = sphi 0, %s40
    %s57 = sphi 0, %s41
    %s61 = sphi 0, %s61
    %s63 = sphi 0, %s61
    %s64 = sphi 0, %s63
    %s78 = sphi 0, %s64
    %s82 = sphi 0, %s82
    %s84 = sphi 0, %s82
    %s85 = sphi 0, %s84
    %s99 = sphi 0, %s85
    %s103 = sphi 0, %s103
    %s105 = sphi 0, %s103
    %s106 = sphi 0, %s105
    %s120 = sphi 0, %s106
    %s124 = sphi 0, %s124
    %s126 = sphi 0, %s124
    %s127 = sphi 0, %s126
    %s141 = sphi 0, %s127
    %s145 = sphi 0, %s145
    %s147 = sphi 0, %s145
    %s148 = sphi 0, %s147
    %s162 = sphi 0, %s148
    %s166 = sphi 0, %s166
    %s168 = sphi 0, %s166
    %s169 = sphi 0, %s168
    %s183 = sphi 0, %s169
    %s187 = sphi 0, %s187
    %s189 = sphi 0, %s187
    %s190 = sphi 0, %s189
    %s204 = sphi 0, %s190
    %s208 = sphi 0, %s208
    %s210 = sphi 0, %s208
    %s211 = sphi 0, %s210
    %s225 = sphi 0, %s211
    %s229 = sphi 0, %s229
    %s231 = sphi 0, %s229
    %s232 = sphi 0, %s231
    %s246 = sphi 0, %s232
    %s250 = sphi 0, %s250
    %s252 = sphi 0, %s250
    %s253 = sphi 0, %s252
    %s267 = sphi 0, %s253
    %s271 = sphi 0, %s271
    %s273 = sphi 0, %s271
    %s274 = sphi 0, %s273
    %s288 = sphi 0, %s274
    %s292 = sphi 0, %s292
    %s294 = sphi 0, %s292
    %s295 = sphi 0, %s294
    %s309 = sphi 0, %s295
    %s313 = sphi 0, %s313
    %s315 = sphi 0, %s313
    %s316 = sphi 0, %s315
    %s330 = sphi 0, %s316
    %s334 = sphi 0, %s334
    %s336 = sphi 0, %s334
    %s337 = sphi 0, %s336
    %s351 = sphi 0, %s337
    %s355 = sphi 0, %s355
    %s357 = sphi 0, %s355
    %s358 = sphi 0, %s357
    %s372 = sphi 0, %s358
    %s376 = sphi 0, %s376
    %s378 = sphi 0, %s376
    %s379 = sphi 0, %s378
    %s393 = sphi 0, %s379
    %s397 = sphi 0, %s397
    %s399 = sphi 0, %s397
    %s400 = sphi 0, %s399
    %s414 = sphi 0, %s400
    %s418 = sphi 0, %s418
    %s420 = sphi 0, %s418
    %s421 = sphi 0, %s420
    %s435 = sphi 0, %s421
    %s441 = sphi 0, %s443
    %s444 = sphi 0, %s441
    %s445 = sphi 0, %s444
    %s461 = sphi 0, %s445
  $region4: #{discriminator_forward.1} parent=0 // loop_header_branch
    %30 = sbr.rel (%p28) target = $region8
  $region5: #{discriminator_forward.1} parent=0 // loop_body
    %s32 = ssub.s32 %s27, 1
    %s33 = ssub.s32 %s27, 2
    %s34 = sadd.s32 %s27, 1
    %s35 = ssub.s32 %s27, %s34
    %p36 = scmp.eq.s32.totalorder %s35, 0
    %s38 = sadd.s32 %s37, 1
    %s39 = scalar_select %p36, %s37, %s38
    %p42 = pneg %p36
    %p43 = scmp.eq.s32.totalorder %s27, 1
    %p44 = por %p42, %p43
    %p45 = scmp.ne.s32.totalorder %s37, %s40
    %p46 = scmp.eq.s32.totalorder %s27, 0
    %p47 = por %p45, %p46
    %p48 = scmp.ne.s32.totalorder %s37, %s40
    %p49 = scmp.eq.s32.totalorder %s32, 1
    %p50 = por %p48, %p49
    %p51 = scmp.ne.s32.totalorder %s40, %s41
    %p52 = scmp.eq.s32.totalorder %s32, 0
    %p53 = por %p51, %p52
    %p54 = scmp.ne.s32.totalorder %s40, %s41
    %p55 = scmp.eq.s32.totalorder %s33, 1
    %p56 = por %p54, %p55
    %p58 = scmp.ne.s32.totalorder %s41, %s57
    %p59 = scmp.eq.s32.totalorder %s33, 0
    %p60 = por %p58, %p59
    %s62 = sadd.s32 %s61, 1
    %p65 = scmp.eq.s32.totalorder %s27, 1
    %p66 = scmp.ne.s32.totalorder %s61, %s63
    %p67 = scmp.eq.s32.totalorder %s27, 0
    %p68 = por %p66, %p67
    %p69 = scmp.ne.s32.totalorder %s61, %s63
    %p70 = scmp.eq.s32.totalorder %s32, 1
    %p71 = por %p69, %p70
    %p72 = scmp.ne.s32.totalorder %s63, %s64
    %p73 = scmp.eq.s32.totalorder %s32, 0
    %p74 = por %p72, %p73
    %p75 = scmp.ne.s32.totalorder %s63, %s64
    %p76 = scmp.eq.s32.totalorder %s33, 1
    %p77 = por %p75, %p76
    %p79 = scmp.ne.s32.totalorder %s64, %s78
    %p80 = scmp.eq.s32.totalorder %s33, 0
    %p81 = por %p79, %p80
    %s83 = sadd.s32 %s82, 1
    %p86 = scmp.eq.s32.totalorder %s27, 1
    %p87 = scmp.ne.s32.totalorder %s82, %s84
    %p88 = scmp.eq.s32.totalorder %s27, 0
    %p89 = por %p87, %p88
    %p90 = scmp.ne.s32.totalorder %s82, %s84
    %p91 = scmp.eq.s32.totalorder %s32, 1
    %p92 = por %p90, %p91
    %p93 = scmp.ne.s32.totalorder %s84, %s85
    %p94 = scmp.eq.s32.totalorder %s32, 0
    %p95 = por %p93, %p94
    %p96 = scmp.ne.s32.totalorder %s84, %s85
    %p97 = scmp.eq.s32.totalorder %s33, 1
    %p98 = por %p96, %p97
    %p100 = scmp.ne.s32.totalorder %s85, %s99
    %p101 = scmp.eq.s32.totalorder %s33, 0
    %p102 = por %p100, %p101
    %s104 = sadd.s32 %s103, 1
    %p107 = scmp.eq.s32.totalorder %s27, 1
    %p108 = scmp.ne.s32.totalorder %s103, %s105
    %p109 = scmp.eq.s32.totalorder %s27, 0
    %p110 = por %p108, %p109
    %p111 = scmp.ne.s32.totalorder %s103, %s105
    %p112 = scmp.eq.s32.totalorder %s32, 1
    %p113 = por %p111, %p112
    %p114 = scmp.ne.s32.totalorder %s105, %s106
    %p115 = scmp.eq.s32.totalorder %s32, 0
    %p116 = por %p114, %p115
    %p117 = scmp.ne.s32.totalorder %s105, %s106
    %p118 = scmp.eq.s32.totalorder %s33, 1
    %p119 = por %p117, %p118
    %p121 = scmp.ne.s32.totalorder %s106, %s120
    %p122 = scmp.eq.s32.totalorder %s33, 0
    %p123 = por %p121, %p122
    %s125 = sadd.s32 %s124, 1
    %p128 = scmp.eq.s32.totalorder %s27, 1
    %p129 = scmp.ne.s32.totalorder %s124, %s126
    %p130 = scmp.eq.s32.totalorder %s27, 0
    %p131 = por %p129, %p130
    %p132 = scmp.ne.s32.totalorder %s124, %s126
    %p133 = scmp.eq.s32.totalorder %s32, 1
    %p134 = por %p132, %p133
    %p135 = scmp.ne.s32.totalorder %s126, %s127
    %p136 = scmp.eq.s32.totalorder %s32, 0
    %p137 = por %p135, %p136
    %p138 = scmp.ne.s32.totalorder %s126, %s127
    %p139 = scmp.eq.s32.totalorder %s33, 1
    %p140 = por %p138, %p139
    %p142 = scmp.ne.s32.totalorder %s127, %s141
    %p143 = scmp.eq.s32.totalorder %s33, 0
    %p144 = por %p142, %p143
    %s146 = sadd.s32 %s145, 1
    %p149 = scmp.eq.s32.totalorder %s27, 1
    %p150 = scmp.ne.s32.totalorder %s145, %s147
    %p151 = scmp.eq.s32.totalorder %s27, 0
    %p152 = por %p150, %p151
    %p153 = scmp.ne.s32.totalorder %s145, %s147
    %p154 = scmp.eq.s32.totalorder %s32, 1
    %p155 = por %p153, %p154
    %p156 = scmp.ne.s32.totalorder %s147, %s148
    %p157 = scmp.eq.s32.totalorder %s32, 0
    %p158 = por %p156, %p157
    %p159 = scmp.ne.s32.totalorder %s147, %s148
    %p160 = scmp.eq.s32.totalorder %s33, 1
    %p161 = por %p159, %p160
    %p163 = scmp.ne.s32.totalorder %s148, %s162
    %p164 = scmp.eq.s32.totalorder %s33, 0
    %p165 = por %p163, %p164
    %s167 = sadd.s32 %s166, 1
    %p170 = scmp.eq.s32.totalorder %s27, 1
    %p171 = scmp.ne.s32.totalorder %s166, %s168
    %p172 = scmp.eq.s32.totalorder %s27, 0
    %p173 = por %p171, %p172
    %p174 = scmp.ne.s32.totalorder %s166, %s168
    %p175 = scmp.eq.s32.totalorder %s32, 1
    %p176 = por %p174, %p175
    %p177 = scmp.ne.s32.totalorder %s168, %s169
    %p178 = scmp.eq.s32.totalorder %s32, 0
    %p179 = por %p177, %p178
    %p180 = scmp.ne.s32.totalorder %s168, %s169
    %p181 = scmp.eq.s32.totalorder %s33, 1
    %p182 = por %p180, %p181
    %p184 = scmp.ne.s32.totalorder %s169, %s183
    %p185 = scmp.eq.s32.totalorder %s33, 0
    %p186 = por %p184, %p185
    %s188 = sadd.s32 %s187, 1
    %p191 = scmp.eq.s32.totalorder %s27, 1
    %p192 = scmp.ne.s32.totalorder %s187, %s189
    %p193 = scmp.eq.s32.totalorder %s27, 0
    %p194 = por %p192, %p193
    %p195 = scmp.ne.s32.totalorder %s187, %s189
    %p196 = scmp.eq.s32.totalorder %s32, 1
    %p197 = por %p195, %p196
    %p198 = scmp.ne.s32.totalorder %s189, %s190
    %p199 = scmp.eq.s32.totalorder %s32, 0
    %p200 = por %p198, %p199
    %p201 = scmp.ne.s32.totalorder %s189, %s190
    %p202 = scmp.eq.s32.totalorder %s33, 1
    %p203 = por %p201, %p202
    %p205 = scmp.ne.s32.totalorder %s190, %s204
    %p206 = scmp.eq.s32.totalorder %s33, 0
    %p207 = por %p205, %p206
    %s209 = sadd.s32 %s208, 1
    %p212 = scmp.eq.s32.totalorder %s27, 1
    %p213 = scmp.ne.s32.totalorder %s208, %s210
    %p214 = scmp.eq.s32.totalorder %s27, 0
    %p215 = por %p213, %p214
    %p216 = scmp.ne.s32.totalorder %s208, %s210
    %p217 = scmp.eq.s32.totalorder %s32, 1
    %p218 = por %p216, %p217
    %p219 = scmp.ne.s32.totalorder %s210, %s211
    %p220 = scmp.eq.s32.totalorder %s32, 0
    %p221 = por %p219, %p220
    %p222 = scmp.ne.s32.totalorder %s210, %s211
    %p223 = scmp.eq.s32.totalorder %s33, 1
    %p224 = por %p222, %p223
    %p226 = scmp.ne.s32.totalorder %s211, %s225
    %p227 = scmp.eq.s32.totalorder %s33, 0
    %p228 = por %p226, %p227
    %s230 = sadd.s32 %s229, 1
    %p233 = scmp.eq.s32.totalorder %s27, 1
    %p234 = scmp.ne.s32.totalorder %s229, %s231
    %p235 = scmp.eq.s32.totalorder %s27, 0
    %p236 = por %p234, %p235
    %p237 = scmp.ne.s32.totalorder %s229, %s231
    %p238 = scmp.eq.s32.totalorder %s32, 1
    %p239 = por %p237, %p238
    %p240 = scmp.ne.s32.totalorder %s231, %s232
    %p241 = scmp.eq.s32.totalorder %s32, 0
    %p242 = por %p240, %p241
    %p243 = scmp.ne.s32.totalorder %s231, %s232
    %p244 = scmp.eq.s32.totalorder %s33, 1
    %p245 = por %p243, %p244
    %p247 = scmp.ne.s32.totalorder %s232, %s246
    %p248 = scmp.eq.s32.totalorder %s33, 0
    %p249 = por %p247, %p248
    %s251 = sadd.s32 %s250, 1
    %p254 = scmp.eq.s32.totalorder %s27, 1
    %p255 = scmp.ne.s32.totalorder %s250, %s252
    %p256 = scmp.eq.s32.totalorder %s27, 0
    %p257 = por %p255, %p256
    %p258 = scmp.ne.s32.totalorder %s250, %s252
    %p259 = scmp.eq.s32.totalorder %s32, 1
    %p260 = por %p258, %p259
    %p261 = scmp.ne.s32.totalorder %s252, %s253
    %p262 = scmp.eq.s32.totalorder %s32, 0
    %p263 = por %p261, %p262
    %p264 = scmp.ne.s32.totalorder %s252, %s253
    %p265 = scmp.eq.s32.totalorder %s33, 1
    %p266 = por %p264, %p265
    %p268 = scmp.ne.s32.totalorder %s253, %s267
    %p269 = scmp.eq.s32.totalorder %s33, 0
    %p270 = por %p268, %p269
    %s272 = sadd.s32 %s271, 1
    %p275 = scmp.eq.s32.totalorder %s27, 1
    %p276 = scmp.ne.s32.totalorder %s271, %s273
    %p277 = scmp.eq.s32.totalorder %s27, 0
    %p278 = por %p276, %p277
    %p279 = scmp.ne.s32.totalorder %s271, %s273
    %p280 = scmp.eq.s32.totalorder %s32, 1
    %p281 = por %p279, %p280
    %p282 = scmp.ne.s32.totalorder %s273, %s274
    %p283 = scmp.eq.s32.totalorder %s32, 0
    %p284 = por %p282, %p283
    %p285 = scmp.ne.s32.totalorder %s273, %s274
    %p286 = scmp.eq.s32.totalorder %s33, 1
    %p287 = por %p285, %p286
    %p289 = scmp.ne.s32.totalorder %s274, %s288
    %p290 = scmp.eq.s32.totalorder %s33, 0
    %p291 = por %p289, %p290
    %s293 = sadd.s32 %s292, 1
    %p296 = scmp.eq.s32.totalorder %s27, 1
    %p297 = scmp.ne.s32.totalorder %s292, %s294
    %p298 = scmp.eq.s32.totalorder %s27, 0
    %p299 = por %p297, %p298
    %p300 = scmp.ne.s32.totalorder %s292, %s294
    %p301 = scmp.eq.s32.totalorder %s32, 1
    %p302 = por %p300, %p301
    %p303 = scmp.ne.s32.totalorder %s294, %s295
    %p304 = scmp.eq.s32.totalorder %s32, 0
    %p305 = por %p303, %p304
    %p306 = scmp.ne.s32.totalorder %s294, %s295
    %p307 = scmp.eq.s32.totalorder %s33, 1
    %p308 = por %p306, %p307
    %p310 = scmp.ne.s32.totalorder %s295, %s309
    %p311 = scmp.eq.s32.totalorder %s33, 0
    %p312 = por %p310, %p311
    %s314 = sadd.s32 %s313, 1
    %p317 = scmp.eq.s32.totalorder %s27, 1
    %p318 = scmp.ne.s32.totalorder %s313, %s315
    %p319 = scmp.eq.s32.totalorder %s27, 0
    %p320 = por %p318, %p319
    %p321 = scmp.ne.s32.totalorder %s313, %s315
    %p322 = scmp.eq.s32.totalorder %s32, 1
    %p323 = por %p321, %p322
    %p324 = scmp.ne.s32.totalorder %s315, %s316
    %p325 = scmp.eq.s32.totalorder %s32, 0
    %p326 = por %p324, %p325
    %p327 = scmp.ne.s32.totalorder %s315, %s316
    %p328 = scmp.eq.s32.totalorder %s33, 1
    %p329 = por %p327, %p328
    %p331 = scmp.ne.s32.totalorder %s316, %s330
    %p332 = scmp.eq.s32.totalorder %s33, 0
    %p333 = por %p331, %p332
    %s335 = sadd.s32 %s334, 1
    %p338 = scmp.eq.s32.totalorder %s27, 1
    %p339 = scmp.ne.s32.totalorder %s334, %s336
    %p340 = scmp.eq.s32.totalorder %s27, 0
    %p341 = por %p339, %p340
    %p342 = scmp.ne.s32.totalorder %s334, %s336
    %p343 = scmp.eq.s32.totalorder %s32, 1
    %p344 = por %p342, %p343
    %p345 = scmp.ne.s32.totalorder %s336, %s337
    %p346 = scmp.eq.s32.totalorder %s32, 0
    %p347 = por %p345, %p346
    %p348 = scmp.ne.s32.totalorder %s336, %s337
    %p349 = scmp.eq.s32.totalorder %s33, 1
    %p350 = por %p348, %p349
    %p352 = scmp.ne.s32.totalorder %s337, %s351
    %p353 = scmp.eq.s32.totalorder %s33, 0
    %p354 = por %p352, %p353
    %s356 = sadd.s32 %s355, 1
    %p359 = scmp.eq.s32.totalorder %s27, 1
    %p360 = scmp.ne.s32.totalorder %s355, %s357
    %p361 = scmp.eq.s32.totalorder %s27, 0
    %p362 = por %p360, %p361
    %p363 = scmp.ne.s32.totalorder %s355, %s357
    %p364 = scmp.eq.s32.totalorder %s32, 1
    %p365 = por %p363, %p364
    %p366 = scmp.ne.s32.totalorder %s357, %s358
    %p367 = scmp.eq.s32.totalorder %s32, 0
    %p368 = por %p366, %p367
    %p369 = scmp.ne.s32.totalorder %s357, %s358
    %p370 = scmp.eq.s32.totalorder %s33, 1
    %p371 = por %p369, %p370
    %p373 = scmp.ne.s32.totalorder %s358, %s372
    %p374 = scmp.eq.s32.totalorder %s33, 0
    %p375 = por %p373, %p374
    %s377 = sadd.s32 %s376, 1
    %p380 = scmp.eq.s32.totalorder %s27, 1
    %p381 = scmp.ne.s32.totalorder %s376, %s378
    %p382 = scmp.eq.s32.totalorder %s27, 0
    %p383 = por %p381, %p382
    %p384 = scmp.ne.s32.totalorder %s376, %s378
    %p385 = scmp.eq.s32.totalorder %s32, 1
    %p386 = por %p384, %p385
    %p387 = scmp.ne.s32.totalorder %s378, %s379
    %p388 = scmp.eq.s32.totalorder %s32, 0
    %p389 = por %p387, %p388
    %p390 = scmp.ne.s32.totalorder %s378, %s379
    %p391 = scmp.eq.s32.totalorder %s33, 1
    %p392 = por %p390, %p391
    %p394 = scmp.ne.s32.totalorder %s379, %s393
    %p395 = scmp.eq.s32.totalorder %s33, 0
    %p396 = por %p394, %p395
    %s398 = sadd.s32 %s397, 1
    %p401 = scmp.eq.s32.totalorder %s27, 1
    %p402 = scmp.ne.s32.totalorder %s397, %s399
    %p403 = scmp.eq.s32.totalorder %s27, 0
    %p404 = por %p402, %p403
    %p405 = scmp.ne.s32.totalorder %s397, %s399
    %p406 = scmp.eq.s32.totalorder %s32, 1
    %p407 = por %p405, %p406
    %p408 = scmp.ne.s32.totalorder %s399, %s400
    %p409 = scmp.eq.s32.totalorder %s32, 0
    %p410 = por %p408, %p409
    %p411 = scmp.ne.s32.totalorder %s399, %s400
    %p412 = scmp.eq.s32.totalorder %s33, 1
    %p413 = por %p411, %p412
    %p415 = scmp.ne.s32.totalorder %s400, %s414
    %p416 = scmp.eq.s32.totalorder %s33, 0
    %p417 = por %p415, %p416
    %s419 = sadd.s32 %s418, 1
    %p422 = scmp.eq.s32.totalorder %s27, 1
    %p423 = scmp.ne.s32.totalorder %s418, %s420
    %p424 = scmp.eq.s32.totalorder %s27, 0
    %p425 = por %p423, %p424
    %p426 = scmp.ne.s32.totalorder %s418, %s420
    %p427 = scmp.eq.s32.totalorder %s32, 1
    %p428 = por %p426, %p427
    %p429 = scmp.ne.s32.totalorder %s420, %s421
    %p430 = scmp.eq.s32.totalorder %s32, 0
    %p431 = por %p429, %p430
    %p432 = scmp.ne.s32.totalorder %s420, %s421
    %p433 = scmp.eq.s32.totalorder %s33, 1
    %p434 = por %p432, %p433
    %p436 = scmp.ne.s32.totalorder %s421, %s435
    %p437 = scmp.eq.s32.totalorder %s33, 0
    %p438 = por %p436, %p437
    %s439 = ssub.s32 %s27, %s34
    %p440 = scmp.eq.s32.totalorder %s439, 0
    %s442 = sadd.s32 %s441, 1
    %s443 = scalar_select %p440, %s441, %s442
    %p446 = pneg %p440
    %p447 = scmp.eq.s32.totalorder %s27, 1
    %p448 = por %p446, %p447
    %p449 = scmp.ne.s32.totalorder %s441, %s444
    %p450 = scmp.eq.s32.totalorder %s27, 0
    %p451 = por %p449, %p450
    %p452 = scmp.ne.s32.totalorder %s441, %s444
    %p453 = scmp.eq.s32.totalorder %s32, 1
    %p454 = por %p452, %p453
    %p455 = scmp.ne.s32.totalorder %s444, %s445
    %p456 = scmp.eq.s32.totalorder %s32, 0
    %p457 = por %p455, %p456
    %p458 = scmp.ne.s32.totalorder %s444, %s445
    %p459 = scmp.eq.s32.totalorder %s33, 1
    %p460 = por %p458, %p459
    %p462 = scmp.ne.s32.totalorder %s445, %s461
    %p463 = scmp.eq.s32.totalorder %s33, 0
    %p464 = por %p462, %p463
    %p465 = scmp.le.s32.totalorder 1, %s27
    %p466 = scmp.lt.s32.totalorder %s27, 3
    %p467 = pnand %p465, %p466
    %p468 = pneg %p467
    // Predicated region
    $region9: #{discriminator_forward.1} parent=5 // pred_check
      _
    $region10: #{discriminator_forward.1} parent=5 // pred_check_branch
      %470 = sbr.rel (%p467) target = $region12
    $region11: #{discriminator_forward.1} parent=5 // pred_region
      %s471 = ssub.s32 %s27, 1
      // Predicated region
      $region13: #{discriminator_forward.1} parent=11 // pred_check
        %p472 = pneg %p74
      $region14: #{discriminator_forward.1} parent=11 // pred_check_branch
        %474 = sbr.rel (%p472) target = $region16
      $region15: #{discriminator_forward.1} parent=11 // pred_region
        _
      $region16: #{discriminator_forward.1} parent=11 // pred_fallthru
        _
      // Predicated region
      $region17: #{discriminator_forward.1} parent=11 // pred_check
        %p475 = pneg %p95
      $region18: #{discriminator_forward.1} parent=11 // pred_check_branch
        %477 = sbr.rel (%p475) target = $region20
      $region19: #{discriminator_forward.1} parent=11 // pred_region
        _
      $region20: #{discriminator_forward.1} parent=11 // pred_fallthru
        _
      // Predicated region
      $region21: #{discriminator_forward.1} parent=11 // pred_check
        %p478 = pneg %p116
      $region22: #{discriminator_forward.1} parent=11 // pred_check_branch
        %480 = sbr.rel (%p478) target = $region24
      $region23: #{discriminator_forward.1} parent=11 // pred_region
        _
      $region24: #{discriminator_forward.1} parent=11 // pred_fallthru
        _
      // Predicated region
      $region25: #{discriminator_forward.1} parent=11 // pred_check
        %p481 = pneg %p137
      $region26: #{discriminator_forward.1} parent=11 // pred_check_branch
        %483 = sbr.rel (%p481) target = $region28
      $region27: #{discriminator_forward.1} parent=11 // pred_region
        _
      $region28: #{discriminator_forward.1} parent=11 // pred_fallthru
        _
      // Predicated region
      $region29: #{discriminator_forward.1} parent=11 // pred_check
        %p484 = pneg %p158
      $region30: #{discriminator_forward.1} parent=11 // pred_check_branch
        %486 = sbr.rel (%p484) target = $region32
      $region31: #{discriminator_forward.1} parent=11 // pred_region
        _
      $region32: #{discriminator_forward.1} parent=11 // pred_fallthru
        _
      // Predicated region
      $region33: #{discriminator_forward.1} parent=11 // pred_check
        %p487 = pneg %p179
      $region34: #{discriminator_forward.1} parent=11 // pred_check_branch
        %489 = sbr.rel (%p487) target = $region36
      $region35: #{discriminator_forward.1} parent=11 // pred_region
        _
      $region36: #{discriminator_forward.1} parent=11 // pred_fallthru
        _
      // Predicated region
      $region37: #{discriminator_forward.1} parent=11 // pred_check
        %p490 = pneg %p200
      $region38: #{discriminator_forward.1} parent=11 // pred_check_branch
        %492 = sbr.rel (%p490) target = $region40
      $region39: #{discriminator_forward.1} parent=11 // pred_region
        _
      $region40: #{discriminator_forward.1} parent=11 // pred_fallthru
        _
      // Predicated region
      $region41: #{discriminator_forward.1} parent=11 // pred_check
        %p493 = pneg %p221
      $region42: #{discriminator_forward.1} parent=11 // pred_check_branch
        %495 = sbr.rel (%p493) target = $region44
      $region43: #{discriminator_forward.1} parent=11 // pred_region
        _
      $region44: #{discriminator_forward.1} parent=11 // pred_fallthru
        _
      // Predicated region
      $region45: #{discriminator_forward.1} parent=11 // pred_check
        %p496 = pneg %p242
      $region46: #{discriminator_forward.1} parent=11 // pred_check_branch
        %498 = sbr.rel (%p496) target = $region48
      $region47: #{discriminator_forward.1} parent=11 // pred_region
        _
      $region48: #{discriminator_forward.1} parent=11 // pred_fallthru
        _
      // Predicated region
      $region49: #{discriminator_forward.1} parent=11 // pred_check
        %p499 = pneg %p263
      $region50: #{discriminator_forward.1} parent=11 // pred_check_branch
        %501 = sbr.rel (%p499) target = $region52
      $region51: #{discriminator_forward.1} parent=11 // pred_region
        _
      $region52: #{discriminator_forward.1} parent=11 // pred_fallthru
        _
      // Predicated region
      $region53: #{discriminator_forward.1} parent=11 // pred_check
        %p502 = pneg %p284
      $region54: #{discriminator_forward.1} parent=11 // pred_check_branch
        %504 = sbr.rel (%p502) target = $region56
      $region55: #{discriminator_forward.1} parent=11 // pred_region
        _
      $region56: #{discriminator_forward.1} parent=11 // pred_fallthru
        _
      // Predicated region
      $region57: #{discriminator_forward.1} parent=11 // pred_check
        %p505 = pneg %p305
      $region58: #{discriminator_forward.1} parent=11 // pred_check_branch
        %507 = sbr.rel (%p505) target = $region60
      $region59: #{discriminator_forward.1} parent=11 // pred_region
        _
      $region60: #{discriminator_forward.1} parent=11 // pred_fallthru
        _
      // Predicated region
      $region61: #{discriminator_forward.1} parent=11 // pred_check
        %p508 = pneg %p326
      $region62: #{discriminator_forward.1} parent=11 // pred_check_branch
        %510 = sbr.rel (%p508) target = $region64
      $region63: #{discriminator_forward.1} parent=11 // pred_region
        _
      $region64: #{discriminator_forward.1} parent=11 // pred_fallthru
        _
      // Predicated region
      $region65: #{discriminator_forward.1} parent=11 // pred_check
        %p511 = pneg %p347
      $region66: #{discriminator_forward.1} parent=11 // pred_check_branch
        %513 = sbr.rel (%p511) target = $region68
      $region67: #{discriminator_forward.1} parent=11 // pred_region
        _
      $region68: #{discriminator_forward.1} parent=11 // pred_fallthru
        _
      // Predicated region
      $region69: #{discriminator_forward.1} parent=11 // pred_check
        %p514 = pneg %p368
      $region70: #{discriminator_forward.1} parent=11 // pred_check_branch
        %516 = sbr.rel (%p514) target = $region72
      $region71: #{discriminator_forward.1} parent=11 // pred_region
        _
      $region72: #{discriminator_forward.1} parent=11 // pred_fallthru
        _
      // Predicated region
      $region73: #{discriminator_forward.1} parent=11 // pred_check
        %p517 = pneg %p389
      $region74: #{discriminator_forward.1} parent=11 // pred_check_branch
        %519 = sbr.rel (%p517) target = $region76
      $region75: #{discriminator_forward.1} parent=11 // pred_region
        _
      $region76: #{discriminator_forward.1} parent=11 // pred_fallthru
        _
      // Predicated region
      $region77: #{discriminator_forward.1} parent=11 // pred_check
        %p520 = pneg %p410
      $region78: #{discriminator_forward.1} parent=11 // pred_check_branch
        %522 = sbr.rel (%p520) target = $region80
      $region79: #{discriminator_forward.1} parent=11 // pred_region
        _
      $region80: #{discriminator_forward.1} parent=11 // pred_fallthru
        _
      // Predicated region
      $region81: #{discriminator_forward.1} parent=11 // pred_check
        %p523 = pneg %p431
      $region82: #{discriminator_forward.1} parent=11 // pred_check_branch
        %525 = sbr.rel (%p523) target = $region84
      $region83: #{discriminator_forward.1} parent=11 // pred_region
        _
      $region84: #{discriminator_forward.1} parent=11 // pred_fallthru
        _
    $region12: #{discriminator_forward.1} parent=5 // pred_fallthru
      _
    %p526 = scmp.lt.s32.totalorder %s27, 2
    // Predicated region
    $region85: #{discriminator_forward.1} parent=5 // pred_check
      %p527 = pneg %p526
    $region86: #{discriminator_forward.1} parent=5 // pred_check_branch
      %529 = sbr.rel (%p527) target = $region88
    $region87: #{discriminator_forward.1} parent=5 // pred_region
      // Predicated region
      $region89: #{discriminator_forward.1} parent=87 // pred_check
        %p530 = pneg %p47
      $region90: #{discriminator_forward.1} parent=87 // pred_check_branch
        %532 = sbr.rel (%p530) target = $region92
      $region91: #{discriminator_forward.1} parent=87 // pred_region
        %p533 = scmp.lt.s32.totalorder %s27, 1
        %s534 = scalar_select %p533, %s27, 1
        %s535 = smul.addr %s534, 8
        %s536 = smul.addr %s535, 8
        %s537 = scalar_lea.vmem %s0, %s536
      $region92: #{discriminator_forward.1} parent=87 // pred_fallthru
        _
    $region88: #{discriminator_forward.1} parent=5 // pred_fallthru
      _
    %p538 = scmp.le.s32.totalorder 1, %s27
    %p539 = scmp.lt.s32.totalorder %s27, 3
    %p540 = pnand %p538, %p539
    %p541 = pneg %p540
    // Predicated region
    $region93: #{discriminator_forward.1} parent=5 // pred_check
      _
    $region94: #{discriminator_forward.1} parent=5 // pred_check_branch
      %543 = sbr.rel (%p540) target = $region96
    $region95: #{discriminator_forward.1} parent=5 // pred_region
      %s544 = ssub.s32 %s27, 1
      %p545 = scmp.lt.s32.totalorder %s32, 1
      %s546 = scalar_select %p545, %s32, 1
      %s547 = smul.addr %s546, 8
      %s548 = smul.addr %s547, 8
      %s549 = scalar_lea.vmem %s0, %s548
      %p550 = pneg %p53
      %p551 = pneg %p50
      %p552 = pneg %p74
      %p553 = pneg %p71
      %p554 = pneg %p95
      %p555 = pneg %p92
      %p556 = pneg %p116
      %p557 = pneg %p113
      %p558 = pneg %p137
      %p559 = pneg %p134
      %p560 = pneg %p158
      %p561 = pneg %p155
      %p562 = pneg %p179
      %p563 = pneg %p176
      %p564 = pneg %p200
      %p565 = pneg %p197
      %p566 = pneg %p221
      %p567 = pneg %p218
      %p568 = pneg %p242
      %p569 = pneg %p239
      %p570 = pneg %p263
      %p571 = pneg %p260
      %p572 = pneg %p284
      %p573 = pneg %p281
      %p574 = pneg %p305
      %p575 = pneg %p302
      %p576 = pneg %p326
      %p577 = pneg %p323
      %p578 = pneg %p347
      %p579 = pneg %p344
      %p580 = pneg %p368
      %p581 = pneg %p365
      %p582 = pneg %p389
      %p583 = pneg %p386
      %p584 = pneg %p410
      %p585 = pneg %p407
      %p586 = pneg %p431
      %p587 = pneg %p428
      %p588 = pneg %p457
      %p589 = pneg %p454
      %p590 = scmp.lt.s32.totalorder %s32, 1
      %s591 = scalar_select %p590, %s32, 1
      %s592 = scalar_lea.vmem %s19, %s591
      %p593 = scmp.lt.s32.totalorder %s32, 1
      %s594 = scalar_select %p593, %s32, 1
      %s595 = smul.addr %s594, 8
      %s596 = smul.addr %s595, 8
      %s597 = scalar_lea.vmem %s0, %s596
      %p598 = scmp.lt.s32.totalorder %s32, 1
      %s599 = scalar_select %p598, %s32, 1
      %s600 = scalar_lea.vmem %s19, %s599
      %v601 = vld [vmem:[%s597] sm:$0xff]
      %v602 = vld [vmem:[%s597 + $0x8] sm:$0xff]
      %v603 = vld [vmem:[%s597 + $0x10] sm:$0xff]
      %v604 = vld [vmem:[%s597 + $0x18] sm:$0xff]
      %v605 = vld [vmem:[%s597 + $0x20] sm:$0xff]
      %v606 = vld [vmem:[%s597 + $0x28] sm:$0xff]
      %v607 = vld [vmem:[%s597 + $0x30] sm:$0xff]
      %v608 = vld [vmem:[%s597 + $0x38] sm:$0xff]
      %v609 = vld [vmem:[%s1] sm:$0xff]
      %v610 = vld [vmem:[%s1 + $0x8] sm:$0xff]
      %v611 = vld [vmem:[%s1 + $0x10] sm:$0xff]
      %v612 = vld [vmem:[%s1 + $0x18] sm:$0x7]
      %v613 = vld [vmem:[%s2] sm:$0x1]
      %v615 = vlaneseq
      %v616 = vshrl.u32 %v615, 7
      %v617 = vsub.s32 0, %v616
      %v618 = vrot.slane %v613, %v617
      %vm620 = vcmask 220160
      %v622 = vsel %vm620, %v601, 0
      %vm624 = vcmask 1042432
      %v626 = vsel %vm624, %v612, 0
      %628 = vmatprep.subr.mxu0 0.0
      %629 = vmatpush1.msra.mxu0 %v609
      %630 = vmatprep.subr.mxu0 0.0
      %631 = vmatpush1.msra.mxu0 %v610
      %632 = vmatprep.subr.mxu0 0.0
      %633 = vmatpush1.msra.mxu0 %v611
      %634 = vmatprep.subr.mxu0 0.0
      %635 = vmatpush1.msra.mxu0 %v626
      %636 = vmatprep.subr.mxu0 0.0
      %637 = vmatpush1.msra.mxu0 0.0
      %638 = vmatprep.subr.mxu0 0.0
      %639 = vmatpush1.msra.mxu0 0.0
      %640 = vmatprep.subr.mxu0 0.0
      %641 = vmatpush1.msra.mxu0 0.0
      %642 = vmatprep.subr.mxu0 0.0
      %643 = vmatpush1.msra.mxu0 0.0
      %644 = vmatprep.subr.mxu0 0.0
      %645 = vmatpush1.msra.mxu0 0.0
      %646 = vmatprep.subr.mxu0 0.0
      %647 = vmatpush1.msra.mxu0 0.0
      %648 = vmatprep.subr.mxu0 0.0
      %649 = vmatpush1.msra.mxu0 0.0
      %650 = vmatprep.subr.mxu0 0.0
      %651 = vmatpush1.msra.mxu0 0.0
      %652 = vmatprep.subr.mxu0 0.0
      %653 = vmatpush1.msra.mxu0 0.0
      %654 = vmatprep.subr.mxu0 0.0
      %655 = vmatpush1.msra.mxu0 0.0
      %656 = vmatprep.subr.mxu0 0.0
      %657 = vmatpush1.msra.mxu0 0.0
      %658 = vmatprep.subr.mxu0 0.0
      %659 = vmatpush1.msra.mxu0 0.0
      %660 = vmatprep.subr.mxu0 0.0
      %661 = vmatpush1.msra.mxu0 0.0
      %662 = vmatprep.subr.mxu0 0.0
      %663 = vmatpush1.msra.mxu0 0.0
      %664 = vmatprep.subr.mxu0 0.0
      %665 = vmatpush1.msra.mxu0 0.0
      %666 = vmatprep.subr.mxu0 0.0
      %667 = vmatpush1.msra.mxu0 0.0
      %668 = vmatprep.subr.mxu0 0.0
      %669 = vmatpush1.msra.mxu0 0.0
      %670 = vmatprep.subr.mxu0 0.0
      %671 = vmatpush1.msra.mxu0 0.0
      %672 = vmatprep.subr.mxu0 0.0
      %673 = vmatpush1.msra.mxu0 0.0
      %674 = vmatprep.subr.mxu0 0.0
      %675 = vmatpush1.msra.mxu0 0.0
      %676 = vmatprep.subr.mxu0 0.0
      %677 = vmatpush1.msra.mxu0 0.0
      %678 = vmatprep.subr.mxu0 0.0
      %679 = vmatpush1.msra.mxu0 0.0
      %680 = vmatprep.subr.mxu0 0.0
      %681 = vmatpush1.msra.mxu0 0.0
      %682 = vmatprep.subr.mxu0 0.0
      %683 = vmatpush1.msra.mxu0 0.0
      %684 = vmatprep.subr.mxu0 0.0
      %685 = vmatpush1.msra.mxu0 0.0
      %686 = vmatprep.subr.mxu0 0.0
      %687 = vmatpush1.msra.mxu0 0.0
      %688 = vmatprep.subr.mxu0 0.0
      %689 = vmatpush1.msra.mxu0 0.0
      %690 = vmatprep.subr.mxu0 0.0
      %691 = vmatpush1.msra.mxu0 0.0
      %692 = vmatprep.mubr.f32.mxu0 0.0
      %693 = vmatmul.mubr.f32.gmra.mrb[0].mxu0 %v622
      %v694 = vpop.f32.mrb[0].mxu0
      %v695 = vadd.f32 %v618, %v694
      %v696 = vpop.f32.mrb[0].mxu0
      %697 = vdwg.mxu0
      %v699 = vsel %vm620, %v602, 0
      %701 = vmatprep.subr.mxu0 0.0
      %702 = vmatpush1.msra.mxu0 %v609
      %703 = vmatprep.subr.mxu0 0.0
      %704 = vmatpush1.msra.mxu0 %v610
      %705 = vmatprep.subr.mxu0 0.0
      %706 = vmatpush1.msra.mxu0 %v611
      %707 = vmatprep.subr.mxu0 0.0
      %708 = vmatpush1.msra.mxu0 %v626
      %709 = vmatprep.subr.mxu0 0.0
      %710 = vmatpush1.msra.mxu0 0.0
      %711 = vmatprep.subr.mxu0 0.0
      %712 = vmatpush1.msra.mxu0 0.0
      %713 = vmatprep.subr.mxu0 0.0
      %714 = vmatpush1.msra.mxu0 0.0
      %715 = vmatprep.subr.mxu0 0.0
      %716 = vmatpush1.msra.mxu0 0.0
      %717 = vmatprep.subr.mxu0 0.0
      %718 = vmatpush1.msra.mxu0 0.0
      %719 = vmatprep.subr.mxu0 0.0
      %720 = vmatpush1.msra.mxu0 0.0
      %721 = vmatprep.subr.mxu0 0.0
      %722 = vmatpush1.msra.mxu0 0.0
      %723 = vmatprep.subr.mxu0 0.0
      %724 = vmatpush1.msra.mxu0 0.0
      %725 = vmatprep.subr.mxu0 0.0
      %726 = vmatpush1.msra.mxu0 0.0
      %727 = vmatprep.subr.mxu0 0.0
      %728 = vmatpush1.msra.mxu0 0.0
      %729 = vmatprep.subr.mxu0 0.0
      %730 = vmatpush1.msra.mxu0 0.0
      %731 = vmatprep.subr.mxu0 0.0
      %732 = vmatpush1.msra.mxu0 0.0
      %733 = vmatprep.subr.mxu0 0.0
      %734 = vmatpush1.msra.mxu0 0.0
      %735 = vmatprep.subr.mxu0 0.0
      %736 = vmatpush1.msra.mxu0 0.0
      %737 = vmatprep.subr.mxu0 0.0
      %738 = vmatpush1.msra.mxu0 0.0
      %739 = vmatprep.subr.mxu0 0.0
      %740 = vmatpush1.msra.mxu0 0.0
      %741 = vmatprep.subr.mxu0 0.0
      %742 = vmatpush1.msra.mxu0 0.0
      %743 = vmatprep.subr.mxu0 0.0
      %744 = vmatpush1.msra.mxu0 0.0
      %745 = vmatprep.subr.mxu0 0.0
      %746 = vmatpush1.msra.mxu0 0.0
      %747 = vmatprep.subr.mxu0 0.0
      %748 = vmatpush1.msra.mxu0 0.0
      %749 = vmatprep.subr.mxu0 0.0
      %750 = vmatpush1.msra.mxu0 0.0
      %751 = vmatprep.subr.mxu0 0.0
      %752 = vmatpush1.msra.mxu0 0.0
      %753 = vmatprep.subr.mxu0 0.0
      %754 = vmatpush1.msra.mxu0 0.0
      %755 = vmatprep.subr.mxu0 0.0
      %756 = vmatpush1.msra.mxu0 0.0
      %757 = vmatprep.subr.mxu0 0.0
      %758 = vmatpush1.msra.mxu0 0.0
      %759 = vmatprep.subr.mxu0 0.0
      %760 = vmatpush1.msra.mxu0 0.0
      %761 = vmatprep.subr.mxu0 0.0
      %762 = vmatpush1.msra.mxu0 0.0
      %763 = vmatprep.subr.mxu0 0.0
      %764 = vmatpush1.msra.mxu0 0.0
      %765 = vmatprep.mubr.f32.mxu0 0.0
      %766 = vmatmul.mubr.f32.gmra.mrb[0].mxu0 %v699
      %v767 = vpop.f32.mrb[0].mxu0
      %v768 = vadd.f32 %v618, %v767
      %v769 = vpop.f32.mrb[0].mxu0
      %770 = vdwg.mxu0
      %v772 = vsel %vm620, %v603, 0
      %774 = vmatprep.subr.mxu0 0.0
      %775 = vmatpush1.msra.mxu0 %v609
      %776 = vmatprep.subr.mxu0 0.0
      %777 = vmatpush1.msra.mxu0 %v610
      %778 = vmatprep.subr.mxu0 0.0
      %779 = vmatpush1.msra.mxu0 %v611
      %780 = vmatprep.subr.mxu0 0.0
      %781 = vmatpush1.msra.mxu0 %v626
      %782 = vmatprep.subr.mxu0 0.0
      %783 = vmatpush1.msra.mxu0 0.0
      %784 = vmatprep.subr.mxu0 0.0
      %785 = vmatpush1.msra.mxu0 0.0
      %786 = vmatprep.subr.mxu0 0.0
      %787 = vmatpush1.msra.mxu0 0.0
      %788 = vmatprep.subr.mxu0 0.0
      %789 = vmatpush1.msra.mxu0 0.0
      %790 = vmatprep.subr.mxu0 0.0
      %791 = vmatpush1.msra.mxu0 0.0
      %792 = vmatprep.subr.mxu0 0.0
      %793 = vmatpush1.msra.mxu0 0.0
      %794 = vmatprep.subr.mxu0 0.0
      %795 = vmatpush1.msra.mxu0 0.0
      %796 = vmatprep.subr.mxu0 0.0
      %797 = vmatpush1.msra.mxu0 0.0
      %798 = vmatprep.subr.mxu0 0.0
      %799 = vmatpush1.msra.mxu0 0.0
      %800 = vmatprep.subr.mxu0 0.0
      %801 = vmatpush1.msra.mxu0 0.0
      %802 = vmatprep.subr.mxu0 0.0
      %803 = vmatpush1.msra.mxu0 0.0
      %804 = vmatprep.subr.mxu0 0.0
      %805 = vmatpush1.msra.mxu0 0.0
      %806 = vmatprep.subr.mxu0 0.0
      %807 = vmatpush1.msra.mxu0 0.0
      %808 = vmatprep.subr.mxu0 0.0
      %809 = vmatpush1.msra.mxu0 0.0
      %810 = vmatprep.subr.mxu0 0.0
      %811 = vmatpush1.msra.mxu0 0.0
      %812 = vmatprep.subr.mxu0 0.0
      %813 = vmatpush1.msra.mxu0 0.0
      %814 = vmatprep.subr.mxu0 0.0
      %815 = vmatpush1.msra.mxu0 0.0
      %816 = vmatprep.subr.mxu0 0.0
      %817 = vmatpush1.msra.mxu0 0.0
      %818 = vmatprep.subr.mxu0 0.0
      %819 = vmatpush1.msra.mxu0 0.0
      %820 = vmatprep.subr.mxu0 0.0
      %821 = vmatpush1.msra.mxu0 0.0
      %822 = vmatprep.subr.mxu0 0.0
      %823 = vmatpush1.msra.mxu0 0.0
      %824 = vmatprep.subr.mxu0 0.0
      %825 = vmatpush1.msra.mxu0 0.0
      %826 = vmatprep.subr.mxu0 0.0
      %827 = vmatpush1.msra.mxu0 0.0
      %828 = vmatprep.subr.mxu0 0.0
      %829 = vmatpush1.msra.mxu0 0.0
      %830 = vmatprep.subr.mxu0 0.0
      %831 = vmatpush1.msra.mxu0 0.0
      %832 = vmatprep.subr.mxu0 0.0
      %833 = vmatpush1.msra.mxu0 0.0
      %834 = vmatprep.subr.mxu0 0.0
      %835 = vmatpush1.msra.mxu0 0.0
      %836 = vmatprep.subr.mxu0 0.0
      %837 = vmatpush1.msra.mxu0 0.0
      %838 = vmatprep.mubr.f32.mxu0 0.0
      %839 = vmatmul.mubr.f32.gmra.mrb[0].mxu0 %v772
      %v840 = vpop.f32.mrb[0].mxu0
      %v841 = vadd.f32 %v618, %v840
      %v842 = vpop.f32.mrb[0].mxu0
      %843 = vdwg.mxu0
      %v845 = vsel %vm620, %v604, 0
      %847 = vmatprep.subr.mxu0 0.0
      %848 = vmatpush1.msra.mxu0 %v609
      %849 = vmatprep.subr.mxu0 0.0
      %850 = vmatpush1.msra.mxu0 %v610
      %851 = vmatprep.subr.mxu0 0.0
      %852 = vmatpush1.msra.mxu0 %v611
      %853 = vmatprep.subr.mxu0 0.0
      %854 = vmatpush1.msra.mxu0 %v626
      %855 = vmatprep.subr.mxu0 0.0
      %856 = vmatpush1.msra.mxu0 0.0
      %857 = vmatprep.subr.mxu0 0.0
      %858 = vmatpush1.msra.mxu0 0.0
      %859 = vmatprep.subr.mxu0 0.0
      %860 = vmatpush1.msra.mxu0 0.0
      %861 = vmatprep.subr.mxu0 0.0
      %862 = vmatpush1.msra.mxu0 0.0
      %863 = vmatprep.subr.mxu0 0.0
      %864 = vmatpush1.msra.mxu0 0.0
      %865 = vmatprep.subr.mxu0 0.0
      %866 = vmatpush1.msra.mxu0 0.0
      %867 = vmatprep.subr.mxu0 0.0
      %868 = vmatpush1.msra.mxu0 0.0
      %869 = vmatprep.subr.mxu0 0.0
      %870 = vmatpush1.msra.mxu0 0.0
      %871 = vmatprep.subr.mxu0 0.0
      %872 = vmatpush1.msra.mxu0 0.0
      %873 = vmatprep.subr.mxu0 0.0
      %874 = vmatpush1.msra.mxu0 0.0
      %875 = vmatprep.subr.mxu0 0.0
      %876 = vmatpush1.msra.mxu0 0.0
      %877 = vmatprep.subr.mxu0 0.0
      %878 = vmatpush1.msra.mxu0 0.0
      %879 = vmatprep.subr.mxu0 0.0
      %880 = vmatpush1.msra.mxu0 0.0
      %881 = vmatprep.subr.mxu0 0.0
      %882 = vmatpush1.msra.mxu0 0.0
      %883 = vmatprep.subr.mxu0 0.0
      %884 = vmatpush1.msra.mxu0 0.0
      %885 = vmatprep.subr.mxu0 0.0
      %886 = vmatpush1.msra.mxu0 0.0
      %887 = vmatprep.subr.mxu0 0.0
      %888 = vmatpush1.msra.mxu0 0.0
      %889 = vmatprep.subr.mxu0 0.0
      %890 = vmatpush1.msra.mxu0 0.0
      %891 = vmatprep.subr.mxu0 0.0
      %892 = vmatpush1.msra.mxu0 0.0
      %893 = vmatprep.subr.mxu0 0.0
      %894 = vmatpush1.msra.mxu0 0.0
      %895 = vmatprep.subr.mxu0 0.0
      %896 = vmatpush1.msra.mxu0 0.0
      %897 = vmatprep.subr.mxu0 0.0
      %898 = vmatpush1.msra.mxu0 0.0
      %899 = vmatprep.subr.mxu0 0.0
      %900 = vmatpush1.msra.mxu0 0.0
      %901 = vmatprep.subr.mxu0 0.0
      %902 = vmatpush1.msra.mxu0 0.0
      %903 = vmatprep.subr.mxu0 0.0
      %904 = vmatpush1.msra.mxu0 0.0
      %905 = vmatprep.subr.mxu0 0.0
      %906 = vmatpush1.msra.mxu0 0.0
      %907 = vmatprep.subr.mxu0 0.0
      %908 = vmatpush1.msra.mxu0 0.0
      %909 = vmatprep.subr.mxu0 0.0
      %910 = vmatpush1.msra.mxu0 0.0
      %911 = vmatprep.mubr.f32.mxu0 0.0
      %912 = vmatmul.mubr.f32.gmra.mrb[0].mxu0 %v845
      %v913 = vpop.f32.mrb[0].mxu0
      %v914 = vadd.f32 %v618, %v913
      %v915 = vpop.f32.mrb[0].mxu0
      %916 = vdwg.mxu0
      %v918 = vsel %vm620, %v605, 0
      %920 = vmatprep.subr.mxu0 0.0
      %921 = vmatpush1.msra.mxu0 %v609
      %922 = vmatprep.subr.mxu0 0.0
      %923 = vmatpush1.msra.mxu0 %v610
      %924 = vmatprep.subr.mxu0 0.0
      %925 = vmatpush1.msra.mxu0 %v611
      %926 = vmatprep.subr.mxu0 0.0
      %927 = vmatpush1.msra.mxu0 %v626
      %928 = vmatprep.subr.mxu0 0.0
      %929 = vmatpush1.msra.mxu0 0.0
      %930 = vmatprep.subr.mxu0 0.0
      %931 = vmatpush1.msra.mxu0 0.0
      %932 = vmatprep.subr.mxu0 0.0
      %933 = vmatpush1.msra.mxu0 0.0
      %934 = vmatprep.subr.mxu0 0.0
      %935 = vmatpush1.msra.mxu0 0.0
      %936 = vmatprep.subr.mxu0 0.0
      %937 = vmatpush1.msra.mxu0 0.0
      %938 = vmatprep.subr.mxu0 0.0
      %939 = vmatpush1.msra.mxu0 0.0
      %940 = vmatprep.subr.mxu0 0.0
      %941 = vmatpush1.msra.mxu0 0.0
      %942 = vmatprep.subr.mxu0 0.0
      %943 = vmatpush1.msra.mxu0 0.0
      %944 = vmatprep.subr.mxu0 0.0
      %945 = vmatpush1.msra.mxu0 0.0
      %946 = vmatprep.subr.mxu0 0.0
      %947 = vmatpush1.msra.mxu0 0.0
      %948 = vmatprep.subr.mxu0 0.0
      %949 = vmatpush1.msra.mxu0 0.0
      %950 = vmatprep.subr.mxu0 0.0
      %951 = vmatpush1.msra.mxu0 0.0
      %952 = vmatprep.subr.mxu0 0.0
      %953 = vmatpush1.msra.mxu0 0.0
      %954 = vmatprep.subr.mxu0 0.0
      %955 = vmatpush1.msra.mxu0 0.0
      %956 = vmatprep.subr.mxu0 0.0
      %957 = vmatpush1.msra.mxu0 0.0
      %958 = vmatprep.subr.mxu0 0.0
      %959 = vmatpush1.msra.mxu0 0.0
      %960 = vmatprep.subr.mxu0 0.0
      %961 = vmatpush1.msra.mxu0 0.0
      %962 = vmatprep.subr.mxu0 0.0
      %963 = vmatpush1.msra.mxu0 0.0
      %964 = vmatprep.subr.mxu0 0.0
      %965 = vmatpush1.msra.mxu0 0.0
      %966 = vmatprep.subr.mxu0 0.0
      %967 = vmatpush1.msra.mxu0 0.0
      %968 = vmatprep.subr.mxu0 0.0
      %969 = vmatpush1.msra.mxu0 0.0
      %970 = vmatprep.subr.mxu0 0.0
      %971 = vmatpush1.msra.mxu0 0.0
      %972 = vmatprep.subr.mxu0 0.0
      %973 = vmatpush1.msra.mxu0 0.0
      %974 = vmatprep.subr.mxu0 0.0
      %975 = vmatpush1.msra.mxu0 0.0
      %976 = vmatprep.subr.mxu0 0.0
      %977 = vmatpush1.msra.mxu0 0.0
      %978 = vmatprep.subr.mxu0 0.0
      %979 = vmatpush1.msra.mxu0 0.0
      %980 = vmatprep.subr.mxu0 0.0
      %981 = vmatpush1.msra.mxu0 0.0
      %982 = vmatprep.subr.mxu0 0.0
      %983 = vmatpush1.msra.mxu0 0.0
      %984 = vmatprep.mubr.f32.mxu0 0.0
      %985 = vmatmul.mubr.f32.gmra.mrb[0].mxu0 %v918
      %v986 = vpop.f32.mrb[0].mxu0
      %v987 = vadd.f32 %v618, %v986
      %v988 = vpop.f32.mrb[0].mxu0
      %989 = vdwg.mxu0
      %v991 = vsel %vm620, %v606, 0
      %993 = vmatprep.subr.mxu0 0.0
      %994 = vmatpush1.msra.mxu0 %v609
      %995 = vmatprep.subr.mxu0 0.0
      %996 = vmatpush1.msra.mxu0 %v610
      %997 = vmatprep.subr.mxu0 0.0
      %998 = vmatpush1.msra.mxu0 %v611
      %999 = vmatprep.subr.mxu0 0.0
      %1000 = vmatpush1.msra.mxu0 %v626
      %1001 = vmatprep.subr.mxu0 0.0
      %1002 = vmatpush1.msra.mxu0 0.0
      %1003 = vmatprep.subr.mxu0 0.0
      %1004 = vmatpush1.msra.mxu0 0.0
      %1005 = vmatprep.subr.mxu0 0.0
      %1006 = vmatpush1.msra.mxu0 0.0
      %1007 = vmatprep.subr.mxu0 0.0
      %1008 = vmatpush1.msra.mxu0 0.0
      %1009 = vmatprep.subr.mxu0 0.0
      %1010 = vmatpush1.msra.mxu0 0.0
      %1011 = vmatprep.subr.mxu0 0.0
      %1012 = vmatpush1.msra.mxu0 0.0
      %1013 = vmatprep.subr.mxu0 0.0
      %1014 = vmatpush1.msra.mxu0 0.0
      %1015 = vmatprep.subr.mxu0 0.0
      %1016 = vmatpush1.msra.mxu0 0.0
      %1017 = vmatprep.subr.mxu0 0.0
      %1018 = vmatpush1.msra.mxu0 0.0
      %1019 = vmatprep.subr.mxu0 0.0
      %1020 = vmatpush1.msra.mxu0 0.0
      %1021 = vmatprep.subr.mxu0 0.0
      %1022 = vmatpush1.msra.mxu0 0.0
      %1023 = vmatprep.subr.mxu0 0.0
      %1024 = vmatpush1.msra.mxu0 0.0
      %1025 = vmatprep.subr.mxu0 0.0
      %1026 = vmatpush1.msra.mxu0 0.0
      %1027 = vmatprep.subr.mxu0 0.0
      %1028 = vmatpush1.msra.mxu0 0.0
      %1029 = vmatprep.subr.mxu0 0.0
      %1030 = vmatpush1.msra.mxu0 0.0
      %1031 = vmatprep.subr.mxu0 0.0
      %1032 = vmatpush1.msra.mxu0 0.0
      %1033 = vmatprep.subr.mxu0 0.0
      %1034 = vmatpush1.msra.mxu0 0.0
      %1035 = vmatprep.subr.mxu0 0.0
      %1036 = vmatpush1.msra.mxu0 0.0
      %1037 = vmatprep.subr.mxu0 0.0
      %1038 = vmatpush1.msra.mxu0 0.0
      %1039 = vmatprep.subr.mxu0 0.0
      %1040 = vmatpush1.msra.mxu0 0.0
      %1041 = vmatprep.subr.mxu0 0.0
      %1042 = vmatpush1.msra.mxu0 0.0
      %1043 = vmatprep.subr.mxu0 0.0
      %1044 = vmatpush1.msra.mxu0 0.0
      %1045 = vmatprep.subr.mxu0 0.0
      %1046 = vmatpush1.msra.mxu0 0.0
      %1047 = vmatprep.subr.mxu0 0.0
      %1048 = vmatpush1.msra.mxu0 0.0
      %1049 = vmatprep.subr.mxu0 0.0
      %1050 = vmatpush1.msra.mxu0 0.0
      %1051 = vmatprep.subr.mxu0 0.0
      %1052 = vmatpush1.msra.mxu0 0.0
      %1053 = vmatprep.subr.mxu0 0.0
      %1054 = vmatpush1.msra.mxu0 0.0
      %1055 = vmatprep.subr.mxu0 0.0
      %1056 = vmatpush1.msra.mxu0 0.0
      %1057 = vmatprep.mubr.f32.mxu0 0.0
      %1058 = vmatmul.mubr.f32.gmra.mrb[0].mxu0 %v991
      %v1059 = vpop.f32.mrb[0].mxu0
      %v1060 = vadd.f32 %v618, %v1059
      %v1061 = vpop.f32.mrb[0].mxu0
      %1062 = vdwg.mxu0
      %v1064 = vsel %vm620, %v607, 0
      %1066 = vmatprep.subr.mxu0 0.0
      %1067 = vmatpush1.msra.mxu0 %v609
      %1068 = vmatprep.subr.mxu0 0.0
      %1069 = vmatpush1.msra.mxu0 %v610
      %1070 = vmatprep.subr.mxu0 0.0
      %1071 = vmatpush1.msra.mxu0 %v611
      %1072 = vmatprep.subr.mxu0 0.0
      %1073 = vmatpush1.msra.mxu0 %v626
      %1074 = vmatprep.subr.mxu0 0.0
      %1075 = vmatpush1.msra.mxu0 0.0
      %1076 = vmatprep.subr.mxu0 0.0
      %1077 = vmatpush1.msra.mxu0 0.0
      %1078 = vmatprep.subr.mxu0 0.0
      %1079 = vmatpush1.msra.mxu0 0.0
      %1080 = vmatprep.subr.mxu0 0.0
      %1081 = vmatpush1.msra.mxu0 0.0
      %1082 = vmatprep.subr.mxu0 0.0
      %1083 = vmatpush1.msra.mxu0 0.0
      %1084 = vmatprep.subr.mxu0 0.0
      %1085 = vmatpush1.msra.mxu0 0.0
      %1086 = vmatprep.subr.mxu0 0.0
      %1087 = vmatpush1.msra.mxu0 0.0
      %1088 = vmatprep.subr.mxu0 0.0
      %1089 = vmatpush1.msra.mxu0 0.0
      %1090 = vmatprep.subr.mxu0 0.0
      %1091 = vmatpush1.msra.mxu0 0.0
      %1092 = vmatprep.subr.mxu0 0.0
      %1093 = vmatpush1.msra.mxu0 0.0
      %1094 = vmatprep.subr.mxu0 0.0
      %1095 = vmatpush1.msra.mxu0 0.0
      %1096 = vmatprep.subr.mxu0 0.0
      %1097 = vmatpush1.msra.mxu0 0.0
      %1098 = vmatprep.subr.mxu0 0.0
      %1099 = vmatpush1.msra.mxu0 0.0
      %1100 = vmatprep.subr.mxu0 0.0
      %1101 = vmatpush1.msra.mxu0 0.0
      %1102 = vmatprep.subr.mxu0 0.0
      %1103 = vmatpush1.msra.mxu0 0.0
      %1104 = vmatprep.subr.mxu0 0.0
      %1105 = vmatpush1.msra.mxu0 0.0
      %1106 = vmatprep.subr.mxu0 0.0
      %1107 = vmatpush1.msra.mxu0 0.0
      %1108 = vmatprep.subr.mxu0 0.0
      %1109 = vmatpush1.msra.mxu0 0.0
      %1110 = vmatprep.subr.mxu0 0.0
      %1111 = vmatpush1.msra.mxu0 0.0
      %1112 = vmatprep.subr.mxu0 0.0
      %1113 = vmatpush1.msra.mxu0 0.0
      %1114 = vmatprep.subr.mxu0 0.0
      %1115 = vmatpush1.msra.mxu0 0.0
      %1116 = vmatprep.subr.mxu0 0.0
      %1117 = vmatpush1.msra.mxu0 0.0
      %1118 = vmatprep.subr.mxu0 0.0
      %1119 = vmatpush1.msra.mxu0 0.0
      %1120 = vmatprep.subr.mxu0 0.0
      %1121 = vmatpush1.msra.mxu0 0.0
      %1122 = vmatprep.subr.mxu0 0.0
      %1123 = vmatpush1.msra.mxu0 0.0
      %1124 = vmatprep.subr.mxu0 0.0
      %1125 = vmatpush1.msra.mxu0 0.0
      %1126 = vmatprep.subr.mxu0 0.0
      %1127 = vmatpush1.msra.mxu0 0.0
      %1128 = vmatprep.subr.mxu0 0.0
      %1129 = vmatpush1.msra.mxu0 0.0
      %1130 = vmatprep.mubr.f32.mxu0 0.0
      %1131 = vmatmul.mubr.f32.gmra.mrb[0].mxu0 %v1064
      %v1132 = vpop.f32.mrb[0].mxu0
      %v1133 = vadd.f32 %v618, %v1132
      %v1134 = vpop.f32.mrb[0].mxu0
      %1135 = vdwg.mxu0
      %v1137 = vsel %vm620, %v608, 0
      %1139 = vmatprep.subr.mxu0 0.0
      %1140 = vmatpush1.msra.mxu0 %v609
      %1141 = vmatprep.subr.mxu0 0.0
      %1142 = vmatpush1.msra.mxu0 %v610
      %1143 = vmatprep.subr.mxu0 0.0
      %1144 = vmatpush1.msra.mxu0 %v611
      %1145 = vmatprep.subr.mxu0 0.0
      %1146 = vmatpush1.msra.mxu0 %v626
      %1147 = vmatprep.subr.mxu0 0.0
      %1148 = vmatpush1.msra.mxu0 0.0
      %1149 = vmatprep.subr.mxu0 0.0
      %1150 = vmatpush1.msra.mxu0 0.0
      %1151 = vmatprep.subr.mxu0 0.0
      %1152 = vmatpush1.msra.mxu0 0.0
      %1153 = vmatprep.subr.mxu0 0.0
      %1154 = vmatpush1.msra.mxu0 0.0
      %1155 = vmatprep.subr.mxu0 0.0
      %1156 = vmatpush1.msra.mxu0 0.0
      %1157 = vmatprep.subr.mxu0 0.0
      %1158 = vmatpush1.msra.mxu0 0.0
      %1159 = vmatprep.subr.mxu0 0.0
      %1160 = vmatpush1.msra.mxu0 0.0
      %1161 = vmatprep.subr.mxu0 0.0
      %1162 = vmatpush1.msra.mxu0 0.0
      %1163 = vmatprep.subr.mxu0 0.0
      %1164 = vmatpush1.msra.mxu0 0.0
      %1165 = vmatprep.subr.mxu0 0.0
      %1166 = vmatpush1.msra.mxu0 0.0
      %1167 = vmatprep.subr.mxu0 0.0
      %1168 = vmatpush1.msra.mxu0 0.0
      %1169 = vmatprep.subr.mxu0 0.0
      %1170 = vmatpush1.msra.mxu0 0.0
      %1171 = vmatprep.subr.mxu0 0.0
      %1172 = vmatpush1.msra.mxu0 0.0
      %1173 = vmatprep.subr.mxu0 0.0
      %1174 = vmatpush1.msra.mxu0 0.0
      %1175 = vmatprep.subr.mxu0 0.0
      %1176 = vmatpush1.msra.mxu0 0.0
      %1177 = vmatprep.subr.mxu0 0.0
      %1178 = vmatpush1.msra.mxu0 0.0
      %1179 = vmatprep.subr.mxu0 0.0
      %1180 = vmatpush1.msra.mxu0 0.0
      %1181 = vmatprep.subr.mxu0 0.0
      %1182 = vmatpush1.msra.mxu0 0.0
      %1183 = vmatprep.subr.mxu0 0.0
      %1184 = vmatpush1.msra.mxu0 0.0
      %1185 = vmatprep.subr.mxu0 0.0
      %1186 = vmatpush1.msra.mxu0 0.0
      %1187 = vmatprep.subr.mxu0 0.0
      %1188 = vmatpush1.msra.mxu0 0.0
      %1189 = vmatprep.subr.mxu0 0.0
      %1190 = vmatpush1.msra.mxu0 0.0
      %1191 = vmatprep.subr.mxu0 0.0
      %1192 = vmatpush1.msra.mxu0 0.0
      %1193 = vmatprep.subr.mxu0 0.0
      %1194 = vmatpush1.msra.mxu0 0.0
      %1195 = vmatprep.subr.mxu0 0.0
      %1196 = vmatpush1.msra.mxu0 0.0
      %1197 = vmatprep.subr.mxu0 0.0
      %1198 = vmatpush1.msra.mxu0 0.0
      %1199 = vmatprep.subr.mxu0 0.0
      %1200 = vmatpush1.msra.mxu0 0.0
      %1201 = vmatprep.subr.mxu0 0.0
      %1202 = vmatpush1.msra.mxu0 0.0
      %1203 = vmatprep.mubr.f32.mxu0 0.0
      %1204 = vmatmul.mubr.f32.gmra.mrb[0].mxu0 %v1137
      %v1205 = vpop.f32.mrb[0].mxu0
      %v1206 = vadd.f32 %v618, %v1205
      %v1207 = vpop.f32.mrb[0].mxu0
      %1208 = vdwg.mxu0
      %vm1209 = vcmp.ge.f32.partialorder %v695, 0.0
      %vm1210 = vcmp.ge.f32.partialorder %v768, 0.0
      %vm1211 = vcmp.ge.f32.partialorder %v841, 0.0
      %vm1212 = vcmp.ge.f32.partialorder %v914, 0.0
      %vm1213 = vcmp.ge.f32.partialorder %v987, 0.0
      %vm1214 = vcmp.ge.f32.partialorder %v1060, 0.0
      %vm1215 = vcmp.ge.f32.partialorder %v1133, 0.0
      %vm1216 = vcmp.ge.f32.partialorder %v1206, 0.0
      %v1217 = vmul.f32 %v695, 0.2
      %v1218 = vmul.f32 %v768, 0.2
      %v1219 = vmul.f32 %v841, 0.2
      %v1220 = vmul.f32 %v914, 0.2
      %v1221 = vmul.f32 %v987, 0.2
      %v1222 = vmul.f32 %v1060, 0.2
      %v1223 = vmul.f32 %v1133, 0.2
      %v1224 = vmul.f32 %v1206, 0.2
      %v1225 = vsel %vm1209, %v695, %v1217
      %v1226 = vsel %vm1210, %v768, %v1218
      %v1227 = vsel %vm1211, %v841, %v1219
      %v1228 = vsel %vm1212, %v914, %v1220
      %v1229 = vsel %vm1213, %v987, %v1221
      %v1230 = vsel %vm1214, %v1060, %v1222
      %v1231 = vsel %vm1215, %v1133, %v1223
      %v1232 = vsel %vm1216, %v1206, %v1224
      %v1233 = vld [vmem:[%s3] sm:$0x1]
      %v1235 = vlaneseq
      %v1236 = vshrl.u32 %v1235, 7
      %v1237 = vsub.s32 0, %v1236
      %v1238 = vrot.slane %v1233, %v1237
      %v1240 = vmul.f32 %v1225, %v1238
      %v1241 = vmul.f32 %v1226, %v1238
      %v1242 = vmul.f32 %v1227, %v1238
      %v1243 = vmul.f32 %v1228, %v1238
      %v1244 = vmul.f32 %v1229, %v1238
      %v1245 = vmul.f32 %v1230, %v1238
      %v1246 = vmul.f32 %v1231, %v1238
      %v1247 = vmul.f32 %v1232, %v1238
      %v1248 = vld [vmem:[%s4] sm:$0x1]
      %v1250 = vlaneseq
      %v1251 = vshrl.u32 %v1250, 7
      %v1252 = vsub.s32 0, %v1251
      %v1253 = vrot.slane %v1248, %v1252
      %v1255 = vadd.f32 %v1240, %v1253
      %v1256 = vadd.f32 %v1241, %v1253
      %v1257 = vadd.f32 %v1242, %v1253
      %v1258 = vadd.f32 %v1243, %v1253
      %v1259 = vadd.f32 %v1244, %v1253
      %v1260 = vadd.f32 %v1245, %v1253
      %v1261 = vadd.f32 %v1246, %v1253
      %v1262 = vadd.f32 %v1247, %v1253
      %v1263 = vlaneseq
      %v1264 = vshrl.u32 %v1263, 7
      %v1265 = vlaneseq
      %v1266 = vand.u32 %v1265, 127
      %v1267 = vmul.u32 %v1264, 2
      %v1268 = vadd.s32 %v1267, 4294967295
      %vm1269 = vcmp.eq.s32.totalorder %v1266, %v1268
      %v1270 = vsel %vm1269, 1.0, 0.0
      %vm1271 = vcmask 64512
      %v1273 = vsel %vm1271, %v1270, 0
      %1275 = vmatprep.subr.mxu0 0.0
      %1276 = vmatpush1.msra.mxu0 %v1255
      %1277 = vmatprep.subr.mxu0 0.0
      %1278 = vmatpush1.msra.mxu0 0.0
      %1279 = vmatprep.subr.mxu0 0.0
      %1280 = vmatpush1.msra.mxu0 0.0
      %1281 = vmatprep.subr.mxu0 0.0
      %1282 = vmatpush1.msra.mxu0 0.0
      %1283 = vmatprep.subr.mxu0 0.0
      %1284 = vmatpush1.msra.mxu0 0.0
      %1285 = vmatprep.subr.mxu0 0.0
      %1286 = vmatpush1.msra.mxu0 0.0
      %1287 = vmatprep.subr.mxu0 0.0
      %1288 = vmatpush1.msra.mxu0 0.0
      %1289 = vmatprep.subr.mxu0 0.0
      %1290 = vmatpush1.msra.mxu0 0.0
      %1291 = vmatprep.subr.mxu0 0.0
      %1292 = vmatpush1.msra.mxu0 0.0
      %1293 = vmatprep.subr.mxu0 0.0
      %1294 = vmatpush1.msra.mxu0 0.0
      %1295 = vmatprep.subr.mxu0 0.0
      %1296 = vmatpush1.msra.mxu0 0.0
      %1297 = vmatprep.subr.mxu0 0.0
      %1298 = vmatpush1.msra.mxu0 0.0
      %1299 = vmatprep.subr.mxu0 0.0
      %1300 = vmatpush1.msra.mxu0 0.0
      %1301 = vmatprep.subr.mxu0 0.0
      %1302 = vmatpush1.msra.mxu0 0.0
      %1303 = vmatprep.subr.mxu0 0.0
      %1304 = vmatpush1.msra.mxu0 0.0
      %1305 = vmatprep.subr.mxu0 0.0
      %1306 = vmatpush1.msra.mxu0 0.0
      %1307 = vmatprep.subr.mxu0 0.0
      %1308 = vmatpush1.msra.mxu0 0.0
      %1309 = vmatprep.subr.mxu0 0.0
      %1310 = vmatpush1.msra.mxu0 0.0
      %1311 = vmatprep.subr.mxu0 0.0
      %1312 = vmatpush1.msra.mxu0 0.0
      %1313 = vmatprep.subr.mxu0 0.0
      %1314 = vmatpush1.msra.mxu0 0.0
      %1315 = vmatprep.subr.mxu0 0.0
      %1316 = vmatpush1.msra.mxu0 0.0
      %1317 = vmatprep.subr.mxu0 0.0
      %1318 = vmatpush1.msra.mxu0 0.0
      %1319 = vmatprep.subr.mxu0 0.0
      %1320 = vmatpush1.msra.mxu0 0.0
      %1321 = vmatprep.subr.mxu0 0.0
      %1322 = vmatpush1.msra.mxu0 0.0
      %1323 = vmatprep.subr.mxu0 0.0
      %1324 = vmatpush1.msra.mxu0 0.0
      %1325 = vmatprep.subr.mxu0 0.0
      %1326 = vmatpush1.msra.mxu0 0.0
      %1327 = vmatprep.subr.mxu0 0.0
      %1328 = vmatpush1.msra.mxu0 0.0
      %1329 = vmatprep.subr.mxu0 0.0
      %1330 = vmatpush1.msra.mxu0 0.0
      %1331 = vmatprep.subr.mxu0 0.0
      %1332 = vmatpush1.msra.mxu0 0.0
      %1333 = vmatprep.subr.mxu0 0.0
      %1334 = vmatpush1.msra.mxu0 0.0
      %1335 = vmatprep.subr.mxu0 0.0
      %1336 = vmatpush1.msra.mxu0 0.0
      %1337 = vmatprep.subr.mxu0 0.0
      %1338 = vmatpush1.msra.mxu0 0.0
      %1339 = vmatprep.mubr.f32.mxu0 0.0
      %1340 = vmatmul.mubr.f32.gmra.mrb[0].mxu0 %v1273
      %v1341 = vpop.f32.mrb[0].mxu0
      %v1342 = vadd.f32 0.0, %v1341
      %v1343 = vpop.f32.mrb[0].mxu0
      %1344 = vdwg.mxu0
      %1345 = vmatprep.subr.mxu0 0.0
      %1346 = vmatpush1.msra.mxu0 %v1256
      %1347 = vmatprep.subr.mxu0 0.0
      %1348 = vmatpush1.msra.mxu0 0.0
      %1349 = vmatprep.subr.mxu0 0.0
      %1350 = vmatpush1.msra.mxu0 0.0
      %1351 = vmatprep.subr.mxu0 0.0
      %1352 = vmatpush1.msra.mxu0 0.0
      %1353 = vmatprep.subr.mxu0 0.0
      %1354 = vmatpush1.msra.mxu0 0.0
      %1355 = vmatprep.subr.mxu0 0.0
      %1356 = vmatpush1.msra.mxu0 0.0
      %1357 = vmatprep.subr.mxu0 0.0
      %1358 = vmatpush1.msra.mxu0 0.0
      %1359 = vmatprep.subr.mxu0 0.0
      %1360 = vmatpush1.msra.mxu0 0.0
      %1361 = vmatprep.subr.mxu0 0.0
      %1362 = vmatpush1.msra.mxu0 0.0
      %1363 = vmatprep.subr.mxu0 0.0
      %1364 = vmatpush1.msra.mxu0 0.0
      %1365 = vmatprep.subr.mxu0 0.0
      %1366 = vmatpush1.msra.mxu0 0.0
      %1367 = vmatprep.subr.mxu0 0.0
      %1368 = vmatpush1.msra.mxu0 0.0
      %1369 = vmatprep.subr.mxu0 0.0
      %1370 = vmatpush1.msra.mxu0 0.0
      %1371 = vmatprep.subr.mxu0 0.0
      %1372 = vmatpush1.msra.mxu0 0.0
      %1373 = vmatprep.subr.mxu0 0.0
      %1374 = vmatpush1.msra.mxu0 0.0
      %1375 = vmatprep.subr.mxu0 0.0
      %1376 = vmatpush1.msra.mxu0 0.0
      %1377 = vmatprep.subr.mxu0 0.0
      %1378 = vmatpush1.msra.mxu0 0.0
      %1379 = vmatprep.subr.mxu0 0.0
      %1380 = vmatpush1.msra.mxu0 0.0
      %1381 = vmatprep.subr.mxu0 0.0
      %1382 = vmatpush1.msra.mxu0 0.0
      %1383 = vmatprep.subr.mxu0 0.0
      %1384 = vmatpush1.msra.mxu0 0.0
      %1385 = vmatprep.subr.mxu0 0.0
      %1386 = vmatpush1.msra.mxu0 0.0
      %1387 = vmatprep.subr.mxu0 0.0
      %1388 = vmatpush1.msra.mxu0 0.0
      %1389 = vmatprep.subr.mxu0 0.0
      %1390 = vmatpush1.msra.mxu0 0.0
      %1391 = vmatprep.subr.mxu0 0.0
      %1392 = vmatpush1.msra.mxu0 0.0
      %1393 = vmatprep.subr.mxu0 0.0
      %1394 = vmatpush1.msra.mxu0 0.0
      %1395 = vmatprep.subr.mxu0 0.0
      %1396 = vmatpush1.msra.mxu0 0.0
      %1397 = vmatprep.subr.mxu0 0.0
      %1398 = vmatpush1.msra.mxu0 0.0
      %1399 = vmatprep.subr.mxu0 0.0
      %1400 = vmatpush1.msra.mxu0 0.0
      %1401 = vmatprep.subr.mxu0 0.0
      %1402 = vmatpush1.msra.mxu0 0.0
      %1403 = vmatprep.subr.mxu0 0.0
      %1404 = vmatpush1.msra.mxu0 0.0
      %1405 = vmatprep.subr.mxu0 0.0
      %1406 = vmatpush1.msra.mxu0 0.0
      %1407 = vmatprep.subr.mxu0 0.0
      %1408 = vmatpush1.msra.mxu0 0.0
      %1409 = vmatprep.mubr.f32.mxu0 0.0
      %1410 = vmatmul.mubr.f32.gmra.mrb[0].mxu0 %v1273
      %v1411 = vpop.f32.mrb[0].mxu0
      %v1412 = vadd.f32 0.0, %v1411
      %v1413 = vpop.f32.mrb[0].mxu0
      %1414 = vdwg.mxu0
      %1415 = vmatprep.subr.mxu0 0.0
      %1416 = vmatpush1.msra.mxu0 %v1257
      %1417 = vmatprep.subr.mxu0 0.0
      %1418 = vmatpush1.msra.mxu0 0.0
      %1419 = vmatprep.subr.mxu0 0.0
      %1420 = vmatpush1.msra.mxu0 0.0
      %1421 = vmatprep.subr.mxu0 0.0
      %1422 = vmatpush1.msra.mxu0 0.0
      %1423 = vmatprep.subr.mxu0 0.0
      %1424 = vmatpush1.msra.mxu0 0.0
      %1425 = vmatprep.subr.mxu0 0.0
      %1426 = vmatpush1.msra.mxu0 0.0
      %1427 = vmatprep.subr.mxu0 0.0
      %1428 = vmatpush1.msra.mxu0 0.0
      %1429 = vmatprep.subr.mxu0 0.0
      %1430 = vmatpush1.msra.mxu0 0.0
      %1431 = vmatprep.subr.mxu0 0.0
      %1432 = vmatpush1.msra.mxu0 0.0
      %1433 = vmatprep.subr.mxu0 0.0
      %1434 = vmatpush1.msra.mxu0 0.0
      %1435 = vmatprep.subr.mxu0 0.0
      %1436 = vmatpush1.msra.mxu0 0.0
      %1437 = vmatprep.subr.mxu0 0.0
      %1438 = vmatpush1.msra.mxu0 0.0
      %1439 = vmatprep.subr.mxu0 0.0
      %1440 = vmatpush1.msra.mxu0 0.0
      %1441 = vmatprep.subr.mxu0 0.0
      %1442 = vmatpush1.msra.mxu0 0.0
      %1443 = vmatprep.subr.mxu0 0.0
      %1444 = vmatpush1.msra.mxu0 0.0
      %1445 = vmatprep.subr.mxu0 0.0
      %1446 = vmatpush1.msra.mxu0 0.0
      %1447 = vmatprep.subr.mxu0 0.0
      %1448 = vmatpush1.msra.mxu0 0.0
      %1449 = vmatprep.subr.mxu0 0.0
      %1450 = vmatpush1.msra.mxu0 0.0
      %1451 = vmatprep.subr.mxu0 0.0
      %1452 = vmatpush1.msra.mxu0 0.0
      %1453 = vmatprep.subr.mxu0 0.0
      %1454 = vmatpush1.msra.mxu0 0.0
      %1455 = vmatprep.subr.mxu0 0.0
      %1456 = vmatpush1.msra.mxu0 0.0
      %1457 = vmatprep.subr.mxu0 0.0
      %1458 = vmatpush1.msra.mxu0 0.0
      %1459 = vmatprep.subr.mxu0 0.0
      %1460 = vmatpush1.msra.mxu0 0.0
      %1461 = vmatprep.subr.mxu0 0.0
      %1462 = vmatpush1.msra.mxu0 0.0
      %1463 = vmatprep.subr.mxu0 0.0
      %1464 = vmatpush1.msra.mxu0 0.0
      %1465 = vmatprep.subr.mxu0 0.0
      %1466 = vmatpush1.msra.mxu0 0.0
      %1467 = vmatprep.subr.mxu0 0.0
      %1468 = vmatpush1.msra.mxu0 0.0
      %1469 = vmatprep.subr.mxu0 0.0
      %1470 = vmatpush1.msra.mxu0 0.0
      %1471 = vmatprep.subr.mxu0 0.0
      %1472 = vmatpush1.msra.mxu0 0.0
      %1473 = vmatprep.subr.mxu0 0.0
      %1474 = vmatpush1.msra.mxu0 0.0
      %1475 = vmatprep.subr.mxu0 0.0
      %1476 = vmatpush1.msra.mxu0 0.0
      %1477 = vmatprep.subr.mxu0 0.0
      %1478 = vmatpush1.msra.mxu0 0.0
      %1479 = vmatprep.mubr.f32.mxu0 0.0
      %1480 = vmatmul.mubr.f32.gmra.mrb[0].mxu0 %v1273
      %v1481 = vpop.f32.mrb[0].mxu0
      %v1482 = vadd.f32 0.0, %v1481
      %v1483 = vpop.f32.mrb[0].mxu0
      %1484 = vdwg.mxu0
      %1485 = vmatprep.subr.mxu0 0.0
      %1486 = vmatpush1.msra.mxu0 %v1258
      %1487 = vmatprep.subr.mxu0 0.0
      %1488 = vmatpush1.msra.mxu0 0.0
      %1489 = vmatprep.subr.mxu0 0.0
      %1490 = vmatpush1.msra.mxu0 0.0
      %1491 = vmatprep.subr.mxu0 0.0
      %1492 = vmatpush1.msra.mxu0 0.0
      %1493 = vmatprep.subr.mxu0 0.0
      %1494 = vmatpush1.msra.mxu0 0.0
      %1495 = vmatprep.subr.mxu0 0.0
      %1496 = vmatpush1.msra.mxu0 0.0
      %1497 = vmatprep.subr.mxu0 0.0
      %1498 = vmatpush1.msra.mxu0 0.0
      %1499 = vmatprep.subr.mxu0 0.0
      %1500 = vmatpush1.msra.mxu0 0.0
      %1501 = vmatprep.subr.mxu0 0.0
      %1502 = vmatpush1.msra.mxu0 0.0
      %1503 = vmatprep.subr.mxu0 0.0
      %1504 = vmatpush1.msra.mxu0 0.0
      %1505 = vmatprep.subr.mxu0 0.0
      %1506 = vmatpush1.msra.mxu0 0.0
      %1507 = vmatprep.subr.mxu0 0.0
      %1508 = vmatpush1.msra.mxu0 0.0
      %1509 = vmatprep.subr.mxu0 0.0
      %1510 = vmatpush1.msra.mxu0 0.0
      %1511 = vmatprep.subr.mxu0 0.0
      %1512 = vmatpush1.msra.mxu0 0.0
      %1513 = vmatprep.subr.mxu0 0.0
      %1514 = vmatpush1.msra.mxu0 0.0
      %1515 = vmatprep.subr.mxu0 0.0
      %1516 = vmatpush1.msra.mxu0 0.0
      %1517 = vmatprep.subr.mxu0 0.0
      %1518 = vmatpush1.msra.mxu0 0.0
      %1519 = vmatprep.subr.mxu0 0.0
      %1520 = vmatpush1.msra.mxu0 0.0
      %1521 = vmatprep.subr.mxu0 0.0
      %1522 = vmatpush1.msra.mxu0 0.0
      %1523 = vmatprep.subr.mxu0 0.0
      %1524 = vmatpush1.msra.mxu0 0.0
      %1525 = vmatprep.subr.mxu0 0.0
      %1526 = vmatpush1.msra.mxu0 0.0
      %1527 = vmatprep.subr.mxu0 0.0
      %1528 = vmatpush1.msra.mxu0 0.0
      %1529 = vmatprep.subr.mxu0 0.0
      %1530 = vmatpush1.msra.mxu0 0.0
      %1531 = vmatprep.subr.mxu0 0.0
      %1532 = vmatpush1.msra.mxu0 0.0
      %1533 = vmatprep.subr.mxu0 0.0
      %1534 = vmatpush1.msra.mxu0 0.0
      %1535 = vmatprep.subr.mxu0 0.0
      %1536 = vmatpush1.msra.mxu0 0.0
      %1537 = vmatprep.subr.mxu0 0.0
      %1538 = vmatpush1.msra.mxu0 0.0
      %1539 = vmatprep.subr.mxu0 0.0
      %1540 = vmatpush1.msra.mxu0 0.0
      %1541 = vmatprep.subr.mxu0 0.0
      %1542 = vmatpush1.msra.mxu0 0.0
      %1543 = vmatprep.subr.mxu0 0.0
      %1544 = vmatpush1.msra.mxu0 0.0
      %1545 = vmatprep.subr.mxu0 0.0
      %1546 = vmatpush1.msra.mxu0 0.0
      %1547 = vmatprep.subr.mxu0 0.0
      %1548 = vmatpush1.msra.mxu0 0.0
      %1549 = vmatprep.mubr.f32.mxu0 0.0
      %1550 = vmatmul.mubr.f32.gmra.mrb[0].mxu0 %v1273
      %v1551 = vpop.f32.mrb[0].mxu0
      %v1552 = vadd.f32 0.0, %v1551
      %v1553 = vpop.f32.mrb[0].mxu0
      %1554 = vdwg.mxu0
      %1555 = vmatprep.subr.mxu0 0.0
      %1556 = vmatpush1.msra.mxu0 %v1259
      %1557 = vmatprep.subr.mxu0 0.0
      %1558 = vmatpush1.msra.mxu0 0.0
      %1559 = vmatprep.subr.mxu0 0.0
      %1560 = vmatpush1.msra.mxu0 0.0
      %1561 = vmatprep.subr.mxu0 0.0
      %1562 = vmatpush1.msra.mxu0 0.0
      %1563 = vmatprep.subr.mxu0 0.0
      %1564 = vmatpush1.msra.mxu0 0.0
      %1565 = vmatprep.subr.mxu0 0.0
      %1566 = vmatpush1.msra.mxu0 0.0
      %1567 = vmatprep.subr.mxu0 0.0
      %1568 = vmatpush1.msra.mxu0 0.0
      %1569 = vmatprep.subr.mxu0 0.0
      %1570 = vmatpush1.msra.mxu0 0.0
      %1571 = vmatprep.subr.mxu0 0.0
      %1572 = vmatpush1.msra.mxu0 0.0
      %1573 = vmatprep.subr.mxu0 0.0
      %1574 = vmatpush1.msra.mxu0 0.0
      %1575 = vmatprep.subr.mxu0 0.0
      %1576 = vmatpush1.msra.mxu0 0.0
      %1577 = vmatprep.subr.mxu0 0.0
      %1578 = vmatpush1.msra.mxu0 0.0
      %1579 = vmatprep.subr.mxu0 0.0
      %1580 = vmatpush1.msra.mxu0 0.0
      %1581 = vmatprep.subr.mxu0 0.0
      %1582 = vmatpush1.msra.mxu0 0.0
      %1583 = vmatprep.subr.mxu0 0.0
      %1584 = vmatpush1.msra.mxu0 0.0
      %1585 = vmatprep.subr.mxu0 0.0
      %1586 = vmatpush1.msra.mxu0 0.0
      %1587 = vmatprep.subr.mxu0 0.0
      %1588 = vmatpush1.msra.mxu0 0.0
      %1589 = vmatprep.subr.mxu0 0.0
      %1590 = vmatpush1.msra.mxu0 0.0
      %1591 = vmatprep.subr.mxu0 0.0
      %1592 = vmatpush1.msra.mxu0 0.0
      %1593 = vmatprep.subr.mxu0 0.0
      %1594 = vmatpush1.msra.mxu0 0.0
      %1595 = vmatprep.subr.mxu0 0.0
      %1596 = vmatpush1.msra.mxu0 0.0
      %1597 = vmatprep.subr.mxu0 0.0
      %1598 = vmatpush1.msra.mxu0 0.0
      %1599 = vmatprep.subr.mxu0 0.0
      %1600 = vmatpush1.msra.mxu0 0.0
      %1601 = vmatprep.subr.mxu0 0.0
      %1602 = vmatpush1.msra.mxu0 0.0
      %1603 = vmatprep.subr.mxu0 0.0
      %1604 = vmatpush1.msra.mxu0 0.0
      %1605 = vmatprep.subr.mxu0 0.0
      %1606 = vmatpush1.msra.mxu0 0.0
      %1607 = vmatprep.subr.mxu0 0.0
      %1608 = vmatpush1.msra.mxu0 0.0
      %1609 = vmatprep.subr.mxu0 0.0
      %1610 = vmatpush1.msra.mxu0 0.0
      %1611 = vmatprep.subr.mxu0 0.0
      %1612 = vmatpush1.msra.mxu0 0.0
      %1613 = vmatprep.subr.mxu0 0.0
      %1614 = vmatpush1.msra.mxu0 0.0
      %1615 = vmatprep.subr.mxu0 0.0
      %1616 = vmatpush1.msra.mxu0 0.0
      %1617 = vmatprep.subr.mxu0 0.0
      %1618 = vmatpush1.msra.mxu0 0.0
      %1619 = vmatprep.mubr.f32.mxu0 0.0
      %1620 = vmatmul.mubr.f32.gmra.mrb[0].mxu0 %v1273
      %v1621 = vpop.f32.mrb[0].mxu0
      %v1622 = vadd.f32 0.0, %v1621
      %v1623 = vpop.f32.mrb[0].mxu0
      %1624 = vdwg.mxu0
      %1625 = vmatprep.subr.mxu0 0.0
      %1626 = vmatpush1.msra.mxu0 %v1260
      %1627 = vmatprep.subr.mxu0 0.0
      %1628 = vmatpush1.msra.mxu0 0.0
      %1629 = vmatprep.subr.mxu0 0.0
      %1630 = vmatpush1.msra.mxu0 0.0
      %1631 = vmatprep.subr.mxu0 0.0
      %1632 = vmatpush1.msra.mxu0 0.0
      %1633 = vmatprep.subr.mxu0 0.0
      %1634 = vmatpush1.msra.mxu0 0.0
      %1635 = vmatprep.subr.mxu0 0.0
      %1636 = vmatpush1.msra.mxu0 0.0
      %1637 = vmatprep.subr.mxu0 0.0
      %1638 = vmatpush1.msra.mxu0 0.0
      %1639 = vmatprep.subr.mxu0 0.0
      %1640 = vmatpush1.msra.mxu0 0.0
      %1641 = vmatprep.subr.mxu0 0.0
      %1642 = vmatpush1.msra.mxu0 0.0
      %1643 = vmatprep.subr.mxu0 0.0
      %1644 = vmatpush1.msra.mxu0 0.0
      %1645 = vmatprep.subr.mxu0 0.0
      %1646 = vmatpush1.msra.mxu0 0.0
      %1647 = vmatprep.subr.mxu0 0.0
      %1648 = vmatpush1.msra.mxu0 0.0
      %1649 = vmatprep.subr.mxu0 0.0
      %1650 = vmatpush1.msra.mxu0 0.0
      %1651 = vmatprep.subr.mxu0 0.0
      %1652 = vmatpush1.msra.mxu0 0.0
      %1653 = vmatprep.subr.mxu0 0.0
      %1654 = vmatpush1.msra.mxu0 0.0
      %1655 = vmatprep.subr.mxu0 0.0
      %1656 = vmatpush1.msra.mxu0 0.0
      %1657 = vmatprep.subr.mxu0 0.0
      %1658 = vmatpush1.msra.mxu0 0.0
      %1659 = vmatprep.subr.mxu0 0.0
      %1660 = vmatpush1.msra.mxu0 0.0
      %1661 = vmatprep.subr.mxu0 0.0
      %1662 = vmatpush1.msra.mxu0 0.0
      %1663 = vmatprep.subr.mxu0 0.0
      %1664 = vmatpush1.msra.mxu0 0.0
      %1665 = vmatprep.subr.mxu0 0.0
      %1666 = vmatpush1.msra.mxu0 0.0
      %1667 = vmatprep.subr.mxu0 0.0
      %1668 = vmatpush1.msra.mxu0 0.0
      %1669 = vmatprep.subr.mxu0 0.0
      %1670 = vmatpush1.msra.mxu0 0.0
      %1671 = vmatprep.subr.mxu0 0.0
      %1672 = vmatpush1.msra.mxu0 0.0
      %1673 = vmatprep.subr.mxu0 0.0
      %1674 = vmatpush1.msra.mxu0 0.0
      %1675 = vmatprep.subr.mxu0 0.0
      %1676 = vmatpush1.msra.mxu0 0.0
      %1677 = vmatprep.subr.mxu0 0.0
      %1678 = vmatpush1.msra.mxu0 0.0
      %1679 = vmatprep.subr.mxu0 0.0
      %1680 = vmatpush1.msra.mxu0 0.0
      %1681 = vmatprep.subr.mxu0 0.0
      %1682 = vmatpush1.msra.mxu0 0.0
      %1683 = vmatprep.subr.mxu0 0.0
      %1684 = vmatpush1.msra.mxu0 0.0
      %1685 = vmatprep.subr.mxu0 0.0
      %1686 = vmatpush1.msra.mxu0 0.0
      %1687 = vmatprep.subr.mxu0 0.0
      %1688 = vmatpush1.msra.mxu0 0.0
      %1689 = vmatprep.mubr.f32.mxu0 0.0
      %1690 = vmatmul.mubr.f32.gmra.mrb[0].mxu0 %v1273
      %v1691 = vpop.f32.mrb[0].mxu0
      %v1692 = vadd.f32 0.0, %v1691
      %v1693 = vpop.f32.mrb[0].mxu0
      %1694 = vdwg.mxu0
      %1695 = vmatprep.subr.mxu0 0.0
      %1696 = vmatpush1.msra.mxu0 %v1261
      %1697 = vmatprep.subr.mxu0 0.0
      %1698 = vmatpush1.msra.mxu0 0.0
      %1699 = vmatprep.subr.mxu0 0.0
      %1700 = vmatpush1.msra.mxu0 0.0
      %1701 = vmatprep.subr.mxu0 0.0
      %1702 = vmatpush1.msra.mxu0 0.0
      %1703 = vmatprep.subr.mxu0 0.0
      %1704 = vmatpush1.msra.mxu0 0.0
      %1705 = vmatprep.subr.mxu0 0.0
      %1706 = vmatpush1.msra.mxu0 0.0
      %1707 = vmatprep.subr.mxu0 0.0
      %1708 = vmatpush1.msra.mxu0 0.0
      %1709 = vmatprep.subr.mxu0 0.0
      %1710 = vmatpush1.msra.mxu0 0.0
      %1711 = vmatprep.subr.mxu0 0.0
      %1712 = vmatpush1.msra.mxu0 0.0
      %1713 = vmatprep.subr.mxu0 0.0
      %1714 = vmatpush1.msra.mxu0 0.0
      %1715 = vmatprep.subr.mxu0 0.0
      %1716 = vmatpush1.msra.mxu0 0.0
      %1717 = vmatprep.subr.mxu0 0.0
      %1718 = vmatpush1.msra.mxu0 0.0
      %1719 = vmatprep.subr.mxu0 0.0
      %1720 = vmatpush1.msra.mxu0 0.0
      %1721 = vmatprep.subr.mxu0 0.0
      %1722 = vmatpush1.msra.mxu0 0.0
      %1723 = vmatprep.subr.mxu0 0.0
      %1724 = vmatpush1.msra.mxu0 0.0
      %1725 = vmatprep.subr.mxu0 0.0
      %1726 = vmatpush1.msra.mxu0 0.0
      %1727 = vmatprep.subr.mxu0 0.0
      %1728 = vmatpush1.msra.mxu0 0.0
      %1729 = vmatprep.subr.mxu0 0.0
      %1730 = vmatpush1.msra.mxu0 0.0
      %1731 = vmatprep.subr.mxu0 0.0
      %1732 = vmatpush1.msra.mxu0 0.0
      %1733 = vmatprep.subr.mxu0 0.0
      %1734 = vmatpush1.msra.mxu0 0.0
      %1735 = vmatprep.subr.mxu0 0.0
      %1736 = vmatpush1.msra.mxu0 0.0
      %1737 = vmatprep.subr.mxu0 0.0
      %1738 = vmatpush1.msra.mxu0 0.0
      %1739 = vmatprep.subr.mxu0 0.0
      %1740 = vmatpush1.msra.mxu0 0.0
      %1741 = vmatprep.subr.mxu0 0.0
      %1742 = vmatpush1.msra.mxu0 0.0
      %1743 = vmatprep.subr.mxu0 0.0
      %1744 = vmatpush1.msra.mxu0 0.0
      %1745 = vmatprep.subr.mxu0 0.0
      %1746 = vmatpush1.msra.mxu0 0.0
      %1747 = vmatprep.subr.mxu0 0.0
      %1748 = vmatpush1.msra.mxu0 0.0
      %1749 = vmatprep.subr.mxu0 0.0
      %1750 = vmatpush1.msra.mxu0 0.0
      %1751 = vmatprep.subr.mxu0 0.0
      %1752 = vmatpush1.msra.mxu0 0.0
      %1753 = vmatprep.subr.mxu0 0.0
      %1754 = vmatpush1.msra.mxu0 0.0
      %1755 = vmatprep.subr.mxu0 0.0
      %1756 = vmatpush1.msra.mxu0 0.0
      %1757 = vmatprep.subr.mxu0 0.0
      %1758 = vmatpush1.msra.mxu0 0.0
      %1759 = vmatprep.mubr.f32.mxu0 0.0
      %1760 = vmatmul.mubr.f32.gmra.mrb[0].mxu0 %v1273
      %v1761 = vpop.f32.mrb[0].mxu0
      %v1762 = vadd.f32 0.0, %v1761
      %v1763 = vpop.f32.mrb[0].mxu0
      %1764 = vdwg.mxu0
      %1765 = vmatprep.subr.mxu0 0.0
      %1766 = vmatpush1.msra.mxu0 %v1262
      %1767 = vmatprep.subr.mxu0 0.0
      %1768 = vmatpush1.msra.mxu0 0.0
      %1769 = vmatprep.subr.mxu0 0.0
      %1770 = vmatpush1.msra.mxu0 0.0
      %1771 = vmatprep.subr.mxu0 0.0
      %1772 = vmatpush1.msra.mxu0 0.0
      %1773 = vmatprep.subr.mxu0 0.0
      %1774 = vmatpush1.msra.mxu0 0.0
      %1775 = vmatprep.subr.mxu0 0.0
      %1776 = vmatpush1.msra.mxu0 0.0
      %1777 = vmatprep.subr.mxu0 0.0
      %1778 = vmatpush1.msra.mxu0 0.0
      %1779 = vmatprep.subr.mxu0 0.0
      %1780 = vmatpush1.msra.mxu0 0.0
      %1781 = vmatprep.subr.mxu0 0.0
      %1782 = vmatpush1.msra.mxu0 0.0
      %1783 = vmatprep.subr.mxu0 0.0
      %1784 = vmatpush1.msra.mxu0 0.0
      %1785 = vmatprep.subr.mxu0 0.0
      %1786 = vmatpush1.msra.mxu0 0.0
      %1787 = vmatprep.subr.mxu0 0.0
      %1788 = vmatpush1.msra.mxu0 0.0
      %1789 = vmatprep.subr.mxu0 0.0
      %1790 = vmatpush1.msra.mxu0 0.0
      %1791 = vmatprep.subr.mxu0 0.0
      %1792 = vmatpush1.msra.mxu0 0.0
      %1793 = vmatprep.subr.mxu0 0.0
      %1794 = vmatpush1.msra.mxu0 0.0
      %1795 = vmatprep.subr.mxu0 0.0
      %1796 = vmatpush1.msra.mxu0 0.0
      %1797 = vmatprep.subr.mxu0 0.0
      %1798 = vmatpush1.msra.mxu0 0.0
      %1799 = vmatprep.subr.mxu0 0.0
      %1800 = vmatpush1.msra.mxu0 0.0
      %1801 = vmatprep.subr.mxu0 0.0
      %1802 = vmatpush1.msra.mxu0 0.0
      %1803 = vmatprep.subr.mxu0 0.0
      %1804 = vmatpush1.msra.mxu0 0.0
      %1805 = vmatprep.subr.mxu0 0.0
      %1806 = vmatpush1.msra.mxu0 0.0
      %1807 = vmatprep.subr.mxu0 0.0
      %1808 = vmatpush1.msra.mxu0 0.0
      %1809 = vmatprep.subr.mxu0 0.0
      %1810 = vmatpush1.msra.mxu0 0.0
      %1811 = vmatprep.subr.mxu0 0.0
      %1812 = vmatpush1.msra.mxu0 0.0
      %1813 = vmatprep.subr.mxu0 0.0
      %1814 = vmatpush1.msra.mxu0 0.0
      %1815 = vmatprep.subr.mxu0 0.0
      %1816 = vmatpush1.msra.mxu0 0.0
      %1817 = vmatprep.subr.mxu0 0.0
      %1818 = vmatpush1.msra.mxu0 0.0
      %1819 = vmatprep.subr.mxu0 0.0
      %1820 = vmatpush1.msra.mxu0 0.0
      %1821 = vmatprep.subr.mxu0 0.0
      %1822 = vmatpush1.msra.mxu0 0.0
      %1823 = vmatprep.subr.mxu0 0.0
      %1824 = vmatpush1.msra.mxu0 0.0
      %1825 = vmatprep.subr.mxu0 0.0
      %1826 = vmatpush1.msra.mxu0 0.0
      %1827 = vmatprep.subr.mxu0 0.0
      %1828 = vmatpush1.msra.mxu0 0.0
      %1829 = vmatprep.mubr.f32.mxu0 0.0
      %1830 = vmatmul.mubr.f32.gmra.mrb[0].mxu0 %v1273
      %v1831 = vpop.f32.mrb[0].mxu0
      %v1832 = vadd.f32 0.0, %v1831
      %v1833 = vpop.f32.mrb[0].mxu0
      %1834 = vdwg.mxu0
      %vm1835 = vcmp.eq.s32.totalorder %v1266, %v1267
      %v1836 = vsel %vm1835, 1.0, 0.0
      %v1838 = vsel %vm1271, %v1836, 0
      %1840 = vmatprep.subr.mxu0 0.0
      %1841 = vmatpush1.msra.mxu0 %v1255
      %1842 = vmatprep.subr.mxu0 0.0
      %1843 = vmatpush1.msra.mxu0 0.0
      %1844 = vmatprep.subr.mxu0 0.0
      %1845 = vmatpush1.msra.mxu0 0.0
      %1846 = vmatprep.subr.mxu0 0.0
      %1847 = vmatpush1.msra.mxu0 0.0
      %1848 = vmatprep.subr.mxu0 0.0
      %1849 = vmatpush1.msra.mxu0 0.0
      %1850 = vmatprep.subr.mxu0 0.0
      %1851 = vmatpush1.msra.mxu0 0.0
      %1852 = vmatprep.subr.mxu0 0.0
      %1853 = vmatpush1.msra.mxu0 0.0
      %1854 = vmatprep.subr.mxu0 0.0
      %1855 = vmatpush1.msra.mxu0 0.0
      %1856 = vmatprep.subr.mxu0 0.0
      %1857 = vmatpush1.msra.mxu0 0.0
      %1858 = vmatprep.subr.mxu0 0.0
      %1859 = vmatpush1.msra.mxu0 0.0
      %1860 = vmatprep.subr.mxu0 0.0
      %1861 = vmatpush1.msra.mxu0 0.0
      %1862 = vmatprep.subr.mxu0 0.0
      %1863 = vmatpush1.msra.mxu0 0.0
      %1864 = vmatprep.subr.mxu0 0.0
      %1865 = vmatpush1.msra.mxu0 0.0
      %1866 = vmatprep.subr.mxu0 0.0
      %1867 = vmatpush1.msra.mxu0 0.0
      %1868 = vmatprep.subr.mxu0 0.0
      %1869 = vmatpush1.msra.mxu0 0.0
      %1870 = vmatprep.subr.mxu0 0.0
      %1871 = vmatpush1.msra.mxu0 0.0
      %1872 = vmatprep.subr.mxu0 0.0
      %1873 = vmatpush1.msra.mxu0 0.0
      %1874 = vmatprep.subr.mxu0 0.0
      %1875 = vmatpush1.msra.mxu0 0.0
      %1876 = vmatprep.subr.mxu0 0.0
      %1877 = vmatpush1.msra.mxu0 0.0
      %1878 = vmatprep.subr.mxu0 0.0
      %1879 = vmatpush1.msra.mxu0 0.0
      %1880 = vmatprep.subr.mxu0 0.0
      %1881 = vmatpush1.msra.mxu0 0.0
      %1882 = vmatprep.subr.mxu0 0.0
      %1883 = vmatpush1.msra.mxu0 0.0
      %1884 = vmatprep.subr.mxu0 0.0
      %1885 = vmatpush1.msra.mxu0 0.0
      %1886 = vmatprep.subr.mxu0 0.0
      %1887 = vmatpush1.msra.mxu0 0.0
      %1888 = vmatprep.subr.mxu0 0.0
      %1889 = vmatpush1.msra.mxu0 0.0
      %1890 = vmatprep.subr.mxu0 0.0
      %1891 = vmatpush1.msra.mxu0 0.0
      %1892 = vmatprep.subr.mxu0 0.0
      %1893 = vmatpush1.msra.mxu0 0.0
      %1894 = vmatprep.subr.mxu0 0.0
      %1895 = vmatpush1.msra.mxu0 0.0
      %1896 = vmatprep.subr.mxu0 0.0
      %1897 = vmatpush1.msra.mxu0 0.0
      %1898 = vmatprep.subr.mxu0 0.0
      %1899 = vmatpush1.msra.mxu0 0.0
      %1900 = vmatprep.subr.mxu0 0.0
      %1901 = vmatpush1.msra.mxu0 0.0
      %1902 = vmatprep.subr.mxu0 0.0
      %1903 = vmatpush1.msra.mxu0 0.0
      %1904 = vmatprep.mubr.f32.mxu0 0.0
      %1905 = vmatmul.mubr.f32.gmra.mrb[0].mxu0 %v1838
      %v1906 = vpop.f32.mrb[0].mxu0
      %v1907 = vadd.f32 0.0, %v1906
      %v1908 = vpop.f32.mrb[0].mxu0
      %1909 = vdwg.mxu0
      %1910 = vmatprep.subr.mxu0 0.0
      %1911 = vmatpush1.msra.mxu0 %v1256
      %1912 = vmatprep.subr.mxu0 0.0
      %1913 = vmatpush1.msra.mxu0 0.0
      %1914 = vmatprep.subr.mxu0 0.0
      %1915 = vmatpush1.msra.mxu0 0.0
      %1916 = vmatprep.subr.mxu0 0.0
      %1917 = vmatpush1.msra.mxu0 0.0
      %1918 = vmatprep.subr.mxu0 0.0
      %1919 = vmatpush1.msra.mxu0 0.0
      %1920 = vmatprep.subr.mxu0 0.0
      %1921 = vmatpush1.msra.mxu0 0.0
      %1922 = vmatprep.subr.mxu0 0.0
      %1923 = vmatpush1.msra.mxu0 0.0
      %1924 = vmatprep.subr.mxu0 0.0
      %1925 = vmatpush1.msra.mxu0 0.0
      %1926 = vmatprep.subr.mxu0 0.0
      %1927 = vmatpush1.msra.mxu0 0.0
      %1928 = vmatprep.subr.mxu0 0.0
      %1929 = vmatpush1.msra.mxu0 0.0
      %1930 = vmatprep.subr.mxu0 0.0
      %1931 = vmatpush1.msra.mxu0 0.0
      %1932 = vmatprep.subr.mxu0 0.0
      %1933 = vmatpush1.msra.mxu0 0.0
      %1934 = vmatprep.subr.mxu0 0.0
      %1935 = vmatpush1.msra.mxu0 0.0
      %1936 = vmatprep.subr.mxu0 0.0
      %1937 = vmatpush1.msra.mxu0 0.0
      %1938 = vmatprep.subr.mxu0 0.0
      %1939 = vmatpush1.msra.mxu0 0.0
      %1940 = vmatprep.subr.mxu0 0.0
      %1941 = vmatpush1.msra.mxu0 0.0
      %1942 = vmatprep.subr.mxu0 0.0
      %1943 = vmatpush1.msra.mxu0 0.0
      %1944 = vmatprep.subr.mxu0 0.0
      %1945 = vmatpush1.msra.mxu0 0.0
      %1946 = vmatprep.subr.mxu0 0.0
      %1947 = vmatpush1.msra.mxu0 0.0
      %1948 = vmatprep.subr.mxu0 0.0
      %1949 = vmatpush1.msra.mxu0 0.0
      %1950 = vmatprep.subr.mxu0 0.0
      %1951 = vmatpush1.msra.mxu0 0.0
      %1952 = vmatprep.subr.mxu0 0.0
      %1953 = vmatpush1.msra.mxu0 0.0
      %1954 = vmatprep.subr.mxu0 0.0
      %1955 = vmatpush1.msra.mxu0 0.0
      %1956 = vmatprep.subr.mxu0 0.0
      %1957 = vmatpush1.msra.mxu0 0.0
      %1958 = vmatprep.subr.mxu0 0.0
      %1959 = vmatpush1.msra.mxu0 0.0
      %1960 = vmatprep.subr.mxu0 0.0
      %1961 = vmatpush1.msra.mxu0 0.0
      %1962 = vmatprep.subr.mxu0 0.0
      %1963 = vmatpush1.msra.mxu0 0.0
      %1964 = vmatprep.subr.mxu0 0.0
      %1965 = vmatpush1.msra.mxu0 0.0
      %1966 = vmatprep.subr.mxu0 0.0
      %1967 = vmatpush1.msra.mxu0 0.0
      %1968 = vmatprep.subr.mxu0 0.0
      %1969 = vmatpush1.msra.mxu0 0.0
      %1970 = vmatprep.subr.mxu0 0.0
      %1971 = vmatpush1.msra.mxu0 0.0
      %1972 = vmatprep.subr.mxu0 0.0
      %1973 = vmatpush1.msra.mxu0 0.0
      %1974 = vmatprep.mubr.f32.mxu0 0.0
      %1975 = vmatmul.mubr.f32.gmra.mrb[0].mxu0 %v1838
      %v1976 = vpop.f32.mrb[0].mxu0
      %v1977 = vadd.f32 0.0, %v1976
      %v1978 = vpop.f32.mrb[0].mxu0
      %1979 = vdwg.mxu0
      %1980 = vmatprep.subr.mxu0 0.0
      %1981 = vmatpush1.msra.mxu0 %v1257
      %1982 = vmatprep.subr.mxu0 0.0
      %1983 = vmatpush1.msra.mxu0 0.0
      %1984 = vmatprep.subr.mxu0 0.0
      %1985 = vmatpush1.msra.mxu0 0.0
      %1986 = vmatprep.subr.mxu0 0.0
      %1987 = vmatpush1.msra.mxu0 0.0
      %1988 = vmatprep.subr.mxu0 0.0
      %1989 = vmatpush1.msra.mxu0 0.0
      %1990 = vmatprep.subr.mxu0 0.0
      %1991 = vmatpush1.msra.mxu0 0.0
      %1992 = vmatprep.subr.mxu0 0.0
      %1993 = vmatpush1.msra.mxu0 0.0
      %1994 = vmatprep.subr.mxu0 0.0
      %1995 = vmatpush1.msra.mxu0 0.0
      %1996 = vmatprep.subr.mxu0 0.0
      %1997 = vmatpush1.msra.mxu0 0.0
      %1998 = vmatprep.subr.mxu0 0.0
      %1999 = vmatpush1.msra.mxu0 0.0
      %2000 = vmatprep.subr.mxu0 0.0
      %2001 = vmatpush1.msra.mxu0 0.0
      %2002 = vmatprep.subr.mxu0 0.0
      %2003 = vmatpush1.msra.mxu0 0.0
      %2004 = vmatprep.subr.mxu0 0.0
      %2005 = vmatpush1.msra.mxu0 0.0
      %2006 = vmatprep.subr.mxu0 0.0
      %2007 = vmatpush1.msra.mxu0 0.0
      %2008 = vmatprep.subr.mxu0 0.0
      %2009 = vmatpush1.msra.mxu0 0.0
      %2010 = vmatprep.subr.mxu0 0.0
      %2011 = vmatpush1.msra.mxu0 0.0
      %2012 = vmatprep.subr.mxu0 0.0
      %2013 = vmatpush1.msra.mxu0 0.0
      %2014 = vmatprep.subr.mxu0 0.0
      %2015 = vmatpush1.msra.mxu0 0.0
      %2016 = vmatprep.subr.mxu0 0.0
      %2017 = vmatpush1.msra.mxu0 0.0
      %2018 = vmatprep.subr.mxu0 0.0
      %2019 = vmatpush1.msra.mxu0 0.0
      %2020 = vmatprep.subr.mxu0 0.0
      %2021 = vmatpush1.msra.mxu0 0.0
      %2022 = vmatprep.subr.mxu0 0.0
      %2023 = vmatpush1.msra.mxu0 0.0
      %2024 = vmatprep.subr.mxu0 0.0
      %2025 = vmatpush1.msra.mxu0 0.0
      %2026 = vmatprep.subr.mxu0 0.0
      %2027 = vmatpush1.msra.mxu0 0.0
      %2028 = vmatprep.subr.mxu0 0.0
      %2029 = vmatpush1.msra.mxu0 0.0
      %2030 = vmatprep.subr.mxu0 0.0
      %2031 = vmatpush1.msra.mxu0 0.0
      %2032 = vmatprep.subr.mxu0 0.0
      %2033 = vmatpush1.msra.mxu0 0.0
      %2034 = vmatprep.subr.mxu0 0.0
      %2035 = vmatpush1.msra.mxu0 0.0
      %2036 = vmatprep.subr.mxu0 0.0
      %2037 = vmatpush1.msra.mxu0 0.0
      %2038 = vmatprep.subr.mxu0 0.0
      %2039 = vmatpush1.msra.mxu0 0.0
      %2040 = vmatprep.subr.mxu0 0.0
      %2041 = vmatpush1.msra.mxu0 0.0
      %2042 = vmatprep.subr.mxu0 0.0
      %2043 = vmatpush1.msra.mxu0 0.0
      %2044 = vmatprep.mubr.f32.mxu0 0.0
      %2045 = vmatmul.mubr.f32.gmra.mrb[0].mxu0 %v1838
      %v2046 = vpop.f32.mrb[0].mxu0
      %v2047 = vadd.f32 0.0, %v2046
      %v2048 = vpop.f32.mrb[0].mxu0
      %2049 = vdwg.mxu0
      %2050 = vmatprep.subr.mxu0 0.0
      %2051 = vmatpush1.msra.mxu0 %v1258
      %2052 = vmatprep.subr.mxu0 0.0
      %2053 = vmatpush1.msra.mxu0 0.0
      %2054 = vmatprep.subr.mxu0 0.0
      %2055 = vmatpush1.msra.mxu0 0.0
      %2056 = vmatprep.subr.mxu0 0.0
      %2057 = vmatpush1.msra.mxu0 0.0
      %2058 = vmatprep.subr.mxu0 0.0
      %2059 = vmatpush1.msra.mxu0 0.0
      %2060 = vmatprep.subr.mxu0 0.0
      %2061 = vmatpush1.msra.mxu0 0.0
      %2062 = vmatprep.subr.mxu0 0.0
      %2063 = vmatpush1.msra.mxu0 0.0
      %2064 = vmatprep.subr.mxu0 0.0
      %2065 = vmatpush1.msra.mxu0 0.0
      %2066 = vmatprep.subr.mxu0 0.0
      %2067 = vmatpush1.msra.mxu0 0.0
      %2068 = vmatprep.subr.mxu0 0.0
      %2069 = vmatpush1.msra.mxu0 0.0
      %2070 = vmatprep.subr.mxu0 0.0
      %2071 = vmatpush1.msra.mxu0 0.0
      %2072 = vmatprep.subr.mxu0 0.0
      %2073 = vmatpush1.msra.mxu0 0.0
      %2074 = vmatprep.subr.mxu0 0.0
      %2075 = vmatpush1.msra.mxu0 0.0
      %2076 = vmatprep.subr.mxu0 0.0
      %2077 = vmatpush1.msra.mxu0 0.0
      %2078 = vmatprep.subr.mxu0 0.0
      %2079 = vmatpush1.msra.mxu0 0.0
      %2080 = vmatprep.subr.mxu0 0.0
      %2081 = vmatpush1.msra.mxu0 0.0
      %2082 = vmatprep.subr.mxu0 0.0
      %2083 = vmatpush1.msra.mxu0 0.0
      %2084 = vmatprep.subr.mxu0 0.0
      %2085 = vmatpush1.msra.mxu0 0.0
      %2086 = vmatprep.subr.mxu0 0.0
      %2087 = vmatpush1.msra.mxu0 0.0
      %2088 = vmatprep.subr.mxu0 0.0
      %2089 = vmatpush1.msra.mxu0 0.0
      %2090 = vmatprep.subr.mxu0 0.0
      %2091 = vmatpush1.msra.mxu0 0.0
      %2092 = vmatprep.subr.mxu0 0.0
      %2093 = vmatpush1.msra.mxu0 0.0
      %2094 = vmatprep.subr.mxu0 0.0
      %2095 = vmatpush1.msra.mxu0 0.0
      %2096 = vmatprep.subr.mxu0 0.0
      %2097 = vmatpush1.msra.mxu0 0.0
      %2098 = vmatprep.subr.mxu0 0.0
      %2099 = vmatpush1.msra.mxu0 0.0
      %2100 = vmatprep.subr.mxu0 0.0
      %2101 = vmatpush1.msra.mxu0 0.0
      %2102 = vmatprep.subr.mxu0 0.0
      %2103 = vmatpush1.msra.mxu0 0.0
      %2104 = vmatprep.subr.mxu0 0.0
      %2105 = vmatpush1.msra.mxu0 0.0
      %2106 = vmatprep.subr.mxu0 0.0
      %2107 = vmatpush1.msra.mxu0 0.0
      %2108 = vmatprep.subr.mxu0 0.0
      %2109 = vmatpush1.msra.mxu0 0.0
      %2110 = vmatprep.subr.mxu0 0.0
      %2111 = vmatpush1.msra.mxu0 0.0
      %2112 = vmatprep.subr.mxu0 0.0
      %2113 = vmatpush1.msra.mxu0 0.0
      %2114 = vmatprep.mubr.f32.mxu0 0.0
      %2115 = vmatmul.mubr.f32.gmra.mrb[0].mxu0 %v1838
      %v2116 = vpop.f32.mrb[0].mxu0
      %v2117 = vadd.f32 0.0, %v2116
      %v2118 = vpop.f32.mrb[0].mxu0
      %2119 = vdwg.mxu0
      %2120 = vmatprep.subr.mxu0 0.0
      %2121 = vmatpush1.msra.mxu0 %v1259
      %2122 = vmatprep.subr.mxu0 0.0
      %2123 = vmatpush1.msra.mxu0 0.0
      %2124 = vmatprep.subr.mxu0 0.0
      %2125 = vmatpush1.msra.mxu0 0.0
      %2126 = vmatprep.subr.mxu0 0.0
      %2127 = vmatpush1.msra.mxu0 0.0
      %2128 = vmatprep.subr.mxu0 0.0
      %2129 = vmatpush1.msra.mxu0 0.0
      %2130 = vmatprep.subr.mxu0 0.0
      %2131 = vmatpush1.msra.mxu0 0.0
      %2132 = vmatprep.subr.mxu0 0.0
      %2133 = vmatpush1.msra.mxu0 0.0
      %2134 = vmatprep.subr.mxu0 0.0
      %2135 = vmatpush1.msra.mxu0 0.0
      %2136 = vmatprep.subr.mxu0 0.0
      %2137 = vmatpush1.msra.mxu0 0.0
      %2138 = vmatprep.subr.mxu0 0.0
      %2139 = vmatpush1.msra.mxu0 0.0
      %2140 = vmatprep.subr.mxu0 0.0
      %2141 = vmatpush1.msra.mxu0 0.0
      %2142 = vmatprep.subr.mxu0 0.0
      %2143 = vmatpush1.msra.mxu0 0.0
      %2144 = vmatprep.subr.mxu0 0.0
      %2145 = vmatpush1.msra.mxu0 0.0
      %2146 = vmatprep.subr.mxu0 0.0
      %2147 = vmatpush1.msra.mxu0 0.0
      %2148 = vmatprep.subr.mxu0 0.0
      %2149 = vmatpush1.msra.mxu0 0.0
      %2150 = vmatprep.subr.mxu0 0.0
      %2151 = vmatpush1.msra.mxu0 0.0
      %2152 = vmatprep.subr.mxu0 0.0
      %2153 = vmatpush1.msra.mxu0 0.0
      %2154 = vmatprep.subr.mxu0 0.0
      %2155 = vmatpush1.msra.mxu0 0.0
      %2156 = vmatprep.subr.mxu0 0.0
      %2157 = vmatpush1.msra.mxu0 0.0
      %2158 = vmatprep.subr.mxu0 0.0
      %2159 = vmatpush1.msra.mxu0 0.0
      %2160 = vmatprep.subr.mxu0 0.0
      %2161 = vmatpush1.msra.mxu0 0.0
      %2162 = vmatprep.subr.mxu0 0.0
      %2163 = vmatpush1.msra.mxu0 0.0
      %2164 = vmatprep.subr.mxu0 0.0
      %2165 = vmatpush1.msra.mxu0 0.0
      %2166 = vmatprep.subr.mxu0 0.0
      %2167 = vmatpush1.msra.mxu0 0.0
      %2168 = vmatprep.subr.mxu0 0.0
      %2169 = vmatpush1.msra.mxu0 0.0
      %2170 = vmatprep.subr.mxu0 0.0
      %2171 = vmatpush1.msra.mxu0 0.0
      %2172 = vmatprep.subr.mxu0 0.0
      %2173 = vmatpush1.msra.mxu0 0.0
      %2174 = vmatprep.subr.mxu0 0.0
      %2175 = vmatpush1.msra.mxu0 0.0
      %2176 = vmatprep.subr.mxu0 0.0
      %2177 = vmatpush1.msra.mxu0 0.0
      %2178 = vmatprep.subr.mxu0 0.0
      %2179 = vmatpush1.msra.mxu0 0.0
      %2180 = vmatprep.subr.mxu0 0.0
      %2181 = vmatpush1.msra.mxu0 0.0
      %2182 = vmatprep.subr.mxu0 0.0
      %2183 = vmatpush1.msra.mxu0 0.0
      %2184 = vmatprep.mubr.f32.mxu0 0.0
      %2185 = vmatmul.mubr.f32.gmra.mrb[0].mxu0 %v1838
      %v2186 = vpop.f32.mrb[0].mxu0
      %v2187 = vadd.f32 0.0, %v2186
      %v2188 = vpop.f32.mrb[0].mxu0
      %2189 = vdwg.mxu0
      %2190 = vmatprep.subr.mxu0 0.0
      %2191 = vmatpush1.msra.mxu0 %v1260
      %2192 = vmatprep.subr.mxu0 0.0
      %2193 = vmatpush1.msra.mxu0 0.0
      %2194 = vmatprep.subr.mxu0 0.0
      %2195 = vmatpush1.msra.mxu0 0.0
      %2196 = vmatprep.subr.mxu0 0.0
      %2197 = vmatpush1.msra.mxu0 0.0
      %2198 = vmatprep.subr.mxu0 0.0
      %2199 = vmatpush1.msra.mxu0 0.0
      %2200 = vmatprep.subr.mxu0 0.0
      %2201 = vmatpush1.msra.mxu0 0.0
      %2202 = vmatprep.subr.mxu0 0.0
      %2203 = vmatpush1.msra.mxu0 0.0
      %2204 = vmatprep.subr.mxu0 0.0
      %2205 = vmatpush1.msra.mxu0 0.0
      %2206 = vmatprep.subr.mxu0 0.0
      %2207 = vmatpush1.msra.mxu0 0.0
      %2208 = vmatprep.subr.mxu0 0.0
      %2209 = vmatpush1.msra.mxu0 0.0
      %2210 = vmatprep.subr.mxu0 0.0
      %2211 = vmatpush1.msra.mxu0 0.0
      %2212 = vmatprep.subr.mxu0 0.0
      %2213 = vmatpush1.msra.mxu0 0.0
      %2214 = vmatprep.subr.mxu0 0.0
      %2215 = vmatpush1.msra.mxu0 0.0
      %2216 = vmatprep.subr.mxu0 0.0
      %2217 = vmatpush1.msra.mxu0 0.0
      %2218 = vmatprep.subr.mxu0 0.0
      %2219 = vmatpush1.msra.mxu0 0.0
      %2220 = vmatprep.subr.mxu0 0.0
      %2221 = vmatpush1.msra.mxu0 0.0
      %2222 = vmatprep.subr.mxu0 0.0
      %2223 = vmatpush1.msra.mxu0 0.0
      %2224 = vmatprep.subr.mxu0 0.0
      %2225 = vmatpush1.msra.mxu0 0.0
      %2226 = vmatprep.subr.mxu0 0.0
      %2227 = vmatpush1.msra.mxu0 0.0
      %2228 = vmatprep.subr.mxu0 0.0
      %2229 = vmatpush1.msra.mxu0 0.0
      %2230 = vmatprep.subr.mxu0 0.0
      %2231 = vmatpush1.msra.mxu0 0.0
      %2232 = vmatprep.subr.mxu0 0.0
      %2233 = vmatpush1.msra.mxu0 0.0
      %2234 = vmatprep.subr.mxu0 0.0
      %2235 = vmatpush1.msra.mxu0 0.0
      %2236 = vmatprep.subr.mxu0 0.0
      %2237 = vmatpush1.msra.mxu0 0.0
      %2238 = vmatprep.subr.mxu0 0.0
      %2239 = vmatpush1.msra.mxu0 0.0
      %2240 = vmatprep.subr.mxu0 0.0
      %2241 = vmatpush1.msra.mxu0 0.0
      %2242 = vmatprep.subr.mxu0 0.0
      %2243 = vmatpush1.msra.mxu0 0.0
      %2244 = vmatprep.subr.mxu0 0.0
      %2245 = vmatpush1.msra.mxu0 0.0
      %2246 = vmatprep.subr.mxu0 0.0
      %2247 = vmatpush1.msra.mxu0 0.0
      %2248 = vmatprep.subr.mxu0 0.0
      %2249 = vmatpush1.msra.mxu0 0.0
      %2250 = vmatprep.subr.mxu0 0.0
      %2251 = vmatpush1.msra.mxu0 0.0
      %2252 = vmatprep.subr.mxu0 0.0
      %2253 = vmatpush1.msra.mxu0 0.0
      %2254 = vmatprep.mubr.f32.mxu0 0.0
      %2255 = vmatmul.mubr.f32.gmra.mrb[0].mxu0 %v1838
      %v2256 = vpop.f32.mrb[0].mxu0
      %v2257 = vadd.f32 0.0, %v2256
      %v2258 = vpop.f32.mrb[0].mxu0
      %2259 = vdwg.mxu0
      %2260 = vmatprep.subr.mxu0 0.0
      %2261 = vmatpush1.msra.mxu0 %v1261
      %2262 = vmatprep.subr.mxu0 0.0
      %2263 = vmatpush1.msra.mxu0 0.0
      %2264 = vmatprep.subr.mxu0 0.0
      %2265 = vmatpush1.msra.mxu0 0.0
      %2266 = vmatprep.subr.mxu0 0.0
      %2267 = vmatpush1.msra.mxu0 0.0
      %2268 = vmatprep.subr.mxu0 0.0
      %2269 = vmatpush1.msra.mxu0 0.0
      %2270 = vmatprep.subr.mxu0 0.0
      %2271 = vmatpush1.msra.mxu0 0.0
      %2272 = vmatprep.subr.mxu0 0.0
      %2273 = vmatpush1.msra.mxu0 0.0
      %2274 = vmatprep.subr.mxu0 0.0
      %2275 = vmatpush1.msra.mxu0 0.0
      %2276 = vmatprep.subr.mxu0 0.0
      %2277 = vmatpush1.msra.mxu0 0.0
      %2278 = vmatprep.subr.mxu0 0.0
      %2279 = vmatpush1.msra.mxu0 0.0
      %2280 = vmatprep.subr.mxu0 0.0
      %2281 = vmatpush1.msra.mxu0 0.0
      %2282 = vmatprep.subr.mxu0 0.0
      %2283 = vmatpush1.msra.mxu0 0.0
      %2284 = vmatprep.subr.mxu0 0.0
      %2285 = vmatpush1.msra.mxu0 0.0
      %2286 = vmatprep.subr.mxu0 0.0
      %2287 = vmatpush1.msra.mxu0 0.0
      %2288 = vmatprep.subr.mxu0 0.0
      %2289 = vmatpush1.msra.mxu0 0.0
      %2290 = vmatprep.subr.mxu0 0.0
      %2291 = vmatpush1.msra.mxu0 0.0
      %2292 = vmatprep.subr.mxu0 0.0
      %2293 = vmatpush1.msra.mxu0 0.0
      %2294 = vmatprep.subr.mxu0 0.0
      %2295 = vmatpush1.msra.mxu0 0.0
      %2296 = vmatprep.subr.mxu0 0.0
      %2297 = vmatpush1.msra.mxu0 0.0
      %2298 = vmatprep.subr.mxu0 0.0
      %2299 = vmatpush1.msra.mxu0 0.0
      %2300 = vmatprep.subr.mxu0 0.0
      %2301 = vmatpush1.msra.mxu0 0.0
      %2302 = vmatprep.subr.mxu0 0.0
      %2303 = vmatpush1.msra.mxu0 0.0
      %2304 = vmatprep.subr.mxu0 0.0
      %2305 = vmatpush1.msra.mxu0 0.0
      %2306 = vmatprep.subr.mxu0 0.0
      %2307 = vmatpush1.msra.mxu0 0.0
      %2308 = vmatprep.subr.mxu0 0.0
      %2309 = vmatpush1.msra.mxu0 0.0
      %2310 = vmatprep.subr.mxu0 0.0
      %2311 = vmatpush1.msra.mxu0 0.0
      %2312 = vmatprep.subr.mxu0 0.0
      %2313 = vmatpush1.msra.mxu0 0.0
      %2314 = vmatprep.subr.mxu0 0.0
      %2315 = vmatpush1.msra.mxu0 0.0
      %2316 = vmatprep.subr.mxu0 0.0
      %2317 = vmatpush1.msra.mxu0 0.0
      %2318 = vmatprep.subr.mxu0 0.0
      %2319 = vmatpush1.msra.mxu0 0.0
      %2320 = vmatprep.subr.mxu0 0.0
      %2321 = vmatpush1.msra.mxu0 0.0
      %2322 = vmatprep.subr.mxu0 0.0
      %2323 = vmatpush1.msra.mxu0 0.0
      %2324 = vmatprep.mubr.f32.mxu0 0.0
      %2325 = vmatmul.mubr.f32.gmra.mrb[0].mxu0 %v1838
      %v2326 = vpop.f32.mrb[0].mxu0
      %v2327 = vadd.f32 0.0, %v2326
      %v2328 = vpop.f32.mrb[0].mxu0
      %2329 = vdwg.mxu0
      %2330 = vmatprep.subr.mxu0 0.0
      %2331 = vmatpush1.msra.mxu0 %v1262
      %2332 = vmatprep.subr.mxu0 0.0
      %2333 = vmatpush1.msra.mxu0 0.0
      %2334 = vmatprep.subr.mxu0 0.0
      %2335 = vmatpush1.msra.mxu0 0.0
      %2336 = vmatprep.subr.mxu0 0.0
      %2337 = vmatpush1.msra.mxu0 0.0
      %2338 = vmatprep.subr.mxu0 0.0
      %2339 = vmatpush1.msra.mxu0 0.0
      %2340 = vmatprep.subr.mxu0 0.0
      %2341 = vmatpush1.msra.mxu0 0.0
      %2342 = vmatprep.subr.mxu0 0.0
      %2343 = vmatpush1.msra.mxu0 0.0
      %2344 = vmatprep.subr.mxu0 0.0
      %2345 = vmatpush1.msra.mxu0 0.0
      %2346 = vmatprep.subr.mxu0 0.0
      %2347 = vmatpush1.msra.mxu0 0.0
      %2348 = vmatprep.subr.mxu0 0.0
      %2349 = vmatpush1.msra.mxu0 0.0
      %2350 = vmatprep.subr.mxu0 0.0
      %2351 = vmatpush1.msra.mxu0 0.0
      %2352 = vmatprep.subr.mxu0 0.0
      %2353 = vmatpush1.msra.mxu0 0.0
      %2354 = vmatprep.subr.mxu0 0.0
      %2355 = vmatpush1.msra.mxu0 0.0
      %2356 = vmatprep.subr.mxu0 0.0
      %2357 = vmatpush1.msra.mxu0 0.0
      %2358 = vmatprep.subr.mxu0 0.0
      %2359 = vmatpush1.msra.mxu0 0.0
      %2360 = vmatprep.subr.mxu0 0.0
      %2361 = vmatpush1.msra.mxu0 0.0
      %2362 = vmatprep.subr.mxu0 0.0
      %2363 = vmatpush1.msra.mxu0 0.0
      %2364 = vmatprep.subr.mxu0 0.0
      %2365 = vmatpush1.msra.mxu0 0.0
      %2366 = vmatprep.subr.mxu0 0.0
      %2367 = vmatpush1.msra.mxu0 0.0
      %2368 = vmatprep.subr.mxu0 0.0
      %2369 = vmatpush1.msra.mxu0 0.0
      %2370 = vmatprep.subr.mxu0 0.0
      %2371 = vmatpush1.msra.mxu0 0.0
      %2372 = vmatprep.subr.mxu0 0.0
      %2373 = vmatpush1.msra.mxu0 0.0
      %2374 = vmatprep.subr.mxu0 0.0
      %2375 = vmatpush1.msra.mxu0 0.0
      %2376 = vmatprep.subr.mxu0 0.0
      %2377 = vmatpush1.msra.mxu0 0.0
      %2378 = vmatprep.subr.mxu0 0.0
      %2379 = vmatpush1.msra.mxu0 0.0
      %2380 = vmatprep.subr.mxu0 0.0
      %2381 = vmatpush1.msra.mxu0 0.0
      %2382 = vmatprep.subr.mxu0 0.0
      %2383 = vmatpush1.msra.mxu0 0.0
      %2384 = vmatprep.subr.mxu0 0.0
      %2385 = vmatpush1.msra.mxu0 0.0
      %2386 = vmatprep.subr.mxu0 0.0
      %2387 = vmatpush1.msra.mxu0 0.0
      %2388 = vmatprep.subr.mxu0 0.0
      %2389 = vmatpush1.msra.mxu0 0.0
      %2390 = vmatprep.subr.mxu0 0.0
      %2391 = vmatpush1.msra.mxu0 0.0
      %2392 = vmatprep.subr.mxu0 0.0
      %2393 = vmatpush1.msra.mxu0 0.0
      %2394 = vmatprep.mubr.f32.mxu0 0.0
      %2395 = vmatmul.mubr.f32.gmra.mrb[0].mxu0 %v1838
      %v2396 = vpop.f32.mrb[0].mxu0
      %v2397 = vadd.f32 0.0, %v2396
      %v2398 = vpop.f32.mrb[0].mxu0
      %2399 = vdwg.mxu0
      %v2400 = vadd.s32 %v1267, 1
      %vm2401 = vcmp.eq.s32.totalorder %v1266, %v2400
      %v2402 = vsel %vm2401, 1.0, 0.0
      %v2404 = vsel %vm1271, %v2402, 0
      %2406 = vmatprep.subr.mxu0 0.0
      %2407 = vmatpush1.msra.mxu0 %v1255
      %2408 = vmatprep.subr.mxu0 0.0
      %2409 = vmatpush1.msra.mxu0 0.0
      %2410 = vmatprep.subr.mxu0 0.0
      %2411 = vmatpush1.msra.mxu0 0.0
      %2412 = vmatprep.subr.mxu0 0.0
      %2413 = vmatpush1.msra.mxu0 0.0
      %2414 = vmatprep.subr.mxu0 0.0
      %2415 = vmatpush1.msra.mxu0 0.0
      %2416 = vmatprep.subr.mxu0 0.0
      %2417 = vmatpush1.msra.mxu0 0.0
      %2418 = vmatprep.subr.mxu0 0.0
      %2419 = vmatpush1.msra.mxu0 0.0
      %2420 = vmatprep.subr.mxu0 0.0
      %2421 = vmatpush1.msra.mxu0 0.0
      %2422 = vmatprep.subr.mxu0 0.0
      %2423 = vmatpush1.msra.mxu0 0.0
      %2424 = vmatprep.subr.mxu0 0.0
      %2425 = vmatpush1.msra.mxu0 0.0
      %2426 = vmatprep.subr.mxu0 0.0
      %2427 = vmatpush1.msra.mxu0 0.0
      %2428 = vmatprep.subr.mxu0 0.0
      %2429 = vmatpush1.msra.mxu0 0.0
      %2430 = vmatprep.subr.mxu0 0.0
      %2431 = vmatpush1.msra.mxu0 0.0
      %2432 = vmatprep.subr.mxu0 0.0
      %2433 = vmatpush1.msra.mxu0 0.0
      %2434 = vmatprep.subr.mxu0 0.0
      %2435 = vmatpush1.msra.mxu0 0.0
      %2436 = vmatprep.subr.mxu0 0.0
      %2437 = vmatpush1.msra.mxu0 0.0
      %2438 = vmatprep.subr.mxu0 0.0
      %2439 = vmatpush1.msra.mxu0 0.0
      %2440 = vmatprep.subr.mxu0 0.0
      %2441 = vmatpush1.msra.mxu0 0.0
      %2442 = vmatprep.subr.mxu0 0.0
      %2443 = vmatpush1.msra.mxu0 0.0
      %2444 = vmatprep.subr.mxu0 0.0
      %2445 = vmatpush1.msra.mxu0 0.0
      %2446 = vmatprep.subr.mxu0 0.0
      %2447 = vmatpush1.msra.mxu0 0.0
      %2448 = vmatprep.subr.mxu0 0.0
      %2449 = vmatpush1.msra.mxu0 0.0
      %2450 = vmatprep.subr.mxu0 0.0
      %2451 = vmatpush1.msra.mxu0 0.0
      %2452 = vmatprep.subr.mxu0 0.0
      %2453 = vmatpush1.msra.mxu0 0.0
      %2454 = vmatprep.subr.mxu0 0.0
      %2455 = vmatpush1.msra.mxu0 0.0
      %2456 = vmatprep.subr.mxu0 0.0
      %2457 = vmatpush1.msra.mxu0 0.0
      %2458 = vmatprep.subr.mxu0 0.0
      %2459 = vmatpush1.msra.mxu0 0.0
      %2460 = vmatprep.subr.mxu0 0.0
      %2461 = vmatpush1.msra.mxu0 0.0
      %2462 = vmatprep.subr.mxu0 0.0
      %2463 = vmatpush1.msra.mxu0 0.0
      %2464 = vmatprep.subr.mxu0 0.0
      %2465 = vmatpush1.msra.mxu0 0.0
      %2466 = vmatprep.subr.mxu0 0.0
      %2467 = vmatpush1.msra.mxu0 0.0
      %2468 = vmatprep.subr.mxu0 0.0
      %2469 = vmatpush1.msra.mxu0 0.0
      %2470 = vmatprep.mubr.f32.mxu0 0.0
      %2471 = vmatmul.mubr.f32.gmra.mrb[0].mxu0 %v2404
      %v2472 = vpop.f32.mrb[0].mxu0
      %v2473 = vadd.f32 0.0, %v2472
      %v2474 = vpop.f32.mrb[0].mxu0
      %2475 = vdwg.mxu0
      %2476 = vmatprep.subr.mxu0 0.0
      %2477 = vmatpush1.msra.mxu0 %v1256
      %2478 = vmatprep.subr.mxu0 0.0
      %2479 = vmatpush1.msra.mxu0 0.0
      %2480 = vmatprep.subr.mxu0 0.0
      %2481 = vmatpush1.msra.mxu0 0.0
      %2482 = vmatprep.subr.mxu0 0.0
      %2483 = vmatpush1.msra.mxu0 0.0
      %2484 = vmatprep.subr.mxu0 0.0
      %2485 = vmatpush1.msra.mxu0 0.0
      %2486 = vmatprep.subr.mxu0 0.0
      %2487 = vmatpush1.msra.mxu0 0.0
      %2488 = vmatprep.subr.mxu0 0.0
      %2489 = vmatpush1.msra.mxu0 0.0
      %2490 = vmatprep.subr.mxu0 0.0
      %2491 = vmatpush1.msra.mxu0 0.0
      %2492 = vmatprep.subr.mxu0 0.0
      %2493 = vmatpush1.msra.mxu0 0.0
      %2494 = vmatprep.subr.mxu0 0.0
      %2495 = vmatpush1.msra.mxu0 0.0
      %2496 = vmatprep.subr.mxu0 0.0
      %2497 = vmatpush1.msra.mxu0 0.0
      %2498 = vmatprep.subr.mxu0 0.0
      %2499 = vmatpush1.msra.mxu0 0.0
      %2500 = vmatprep.subr.mxu0 0.0
      %2501 = vmatpush1.msra.mxu0 0.0
      %2502 = vmatprep.subr.mxu0 0.0
      %2503 = vmatpush1.msra.mxu0 0.0
      %2504 = vmatprep.subr.mxu0 0.0
      %2505 = vmatpush1.msra.mxu0 0.0
      %2506 = vmatprep.subr.mxu0 0.0
      %2507 = vmatpush1.msra.mxu0 0.0
      %2508 = vmatprep.subr.mxu0 0.0
      %2509 = vmatpush1.msra.mxu0 0.0
      %2510 = vmatprep.subr.mxu0 0.0
      %2511 = vmatpush1.msra.mxu0 0.0
      %2512 = vmatprep.subr.mxu0 0.0
      %2513 = vmatpush1.msra.mxu0 0.0
      %2514 = vmatprep.subr.mxu0 0.0
      %2515 = vmatpush1.msra.mxu0 0.0
      %2516 = vmatprep.subr.mxu0 0.0
      %2517 = vmatpush1.msra.mxu0 0.0
      %2518 = vmatprep.subr.mxu0 0.0
      %2519 = vmatpush1.msra.mxu0 0.0
      %2520 = vmatprep.subr.mxu0 0.0
      %2521 = vmatpush1.msra.mxu0 0.0
      %2522 = vmatprep.subr.mxu0 0.0
      %2523 = vmatpush1.msra.mxu0 0.0
      %2524 = vmatprep.subr.mxu0 0.0
      %2525 = vmatpush1.msra.mxu0 0.0
      %2526 = vmatprep.subr.mxu0 0.0
      %2527 = vmatpush1.msra.mxu0 0.0
      %2528 = vmatprep.subr.mxu0 0.0
      %2529 = vmatpush1.msra.mxu0 0.0
      %2530 = vmatprep.subr.mxu0 0.0
      %2531 = vmatpush1.msra.mxu0 0.0
      %2532 = vmatprep.subr.mxu0 0.0
      %2533 = vmatpush1.msra.mxu0 0.0
      %2534 = vmatprep.subr.mxu0 0.0
      %2535 = vmatpush1.msra.mxu0 0.0
      %2536 = vmatprep.subr.mxu0 0.0
      %2537 = vmatpush1.msra.mxu0 0.0
      %2538 = vmatprep.subr.mxu0 0.0
      %2539 = vmatpush1.msra.mxu0 0.0
      %2540 = vmatprep.mubr.f32.mxu0 0.0
      %2541 = vmatmul.mubr.f32.gmra.mrb[0].mxu0 %v2404
      %v2542 = vpop.f32.mrb[0].mxu0
      %v2543 = vadd.f32 0.0, %v2542
      %v2544 = vpop.f32.mrb[0].mxu0
      %2545 = vdwg.mxu0
      %2546 = vmatprep.subr.mxu0 0.0
      %2547 = vmatpush1.msra.mxu0 %v1257
      %2548 = vmatprep.subr.mxu0 0.0
      %2549 = vmatpush1.msra.mxu0 0.0
      %2550 = vmatprep.subr.mxu0 0.0
      %2551 = vmatpush1.msra.mxu0 0.0
      %2552 = vmatprep.subr.mxu0 0.0
      %2553 = vmatpush1.msra.mxu0 0.0
      %2554 = vmatprep.subr.mxu0 0.0
      %2555 = vmatpush1.msra.mxu0 0.0
      %2556 = vmatprep.subr.mxu0 0.0
      %2557 = vmatpush1.msra.mxu0 0.0
      %2558 = vmatprep.subr.mxu0 0.0
      %2559 = vmatpush1.msra.mxu0 0.0
      %2560 = vmatprep.subr.mxu0 0.0
      %2561 = vmatpush1.msra.mxu0 0.0
      %2562 = vmatprep.subr.mxu0 0.0
      %2563 = vmatpush1.msra.mxu0 0.0
      %2564 = vmatprep.subr.mxu0 0.0
      %2565 = vmatpush1.msra.mxu0 0.0
      %2566 = vmatprep.subr.mxu0 0.0
      %2567 = vmatpush1.msra.mxu0 0.0
      %2568 = vmatprep.subr.mxu0 0.0
      %2569 = vmatpush1.msra.mxu0 0.0
      %2570 = vmatprep.subr.mxu0 0.0
      %2571 = vmatpush1.msra.mxu0 0.0
      %2572 = vmatprep.subr.mxu0 0.0
      %2573 = vmatpush1.msra.mxu0 0.0
      %2574 = vmatprep.subr.mxu0 0.0
      %2575 = vmatpush1.msra.mxu0 0.0
      %2576 = vmatprep.subr.mxu0 0.0
      %2577 = vmatpush1.msra.mxu0 0.0
      %2578 = vmatprep.subr.mxu0 0.0
      %2579 = vmatpush1.msra.mxu0 0.0
      %2580 = vmatprep.subr.mxu0 0.0
      %2581 = vmatpush1.msra.mxu0 0.0
      %2582 = vmatprep.subr.mxu0 0.0
      %2583 = vmatpush1.msra.mxu0 0.0
      %2584 = vmatprep.subr.mxu0 0.0
      %2585 = vmatpush1.msra.mxu0 0.0
      %2586 = vmatprep.subr.mxu0 0.0
      %2587 = vmatpush1.msra.mxu0 0.0
      %2588 = vmatprep.subr.mxu0 0.0
      %2589 = vmatpush1.msra.mxu0 0.0
      %2590 = vmatprep.subr.mxu0 0.0
      %2591 = vmatpush1.msra.mxu0 0.0
      %2592 = vmatprep.subr.mxu0 0.0
      %2593 = vmatpush1.msra.mxu0 0.0
      %2594 = vmatprep.subr.mxu0 0.0
      %2595 = vmatpush1.msra.mxu0 0.0
      %2596 = vmatprep.subr.mxu0 0.0
      %2597 = vmatpush1.msra.mxu0 0.0
      %2598 = vmatprep.subr.mxu0 0.0
      %2599 = vmatpush1.msra.mxu0 0.0
      %2600 = vmatprep.subr.mxu0 0.0
      %2601 = vmatpush1.msra.mxu0 0.0
      %2602 = vmatprep.subr.mxu0 0.0
      %2603 = vmatpush1.msra.mxu0 0.0
      %2604 = vmatprep.subr.mxu0 0.0
      %2605 = vmatpush1.msra.mxu0 0.0
      %2606 = vmatprep.subr.mxu0 0.0
      %2607 = vmatpush1.msra.mxu0 0.0
      %2608 = vmatprep.subr.mxu0 0.0
      %2609 = vmatpush1.msra.mxu0 0.0
      %2610 = vmatprep.mubr.f32.mxu0 0.0
      %2611 = vmatmul.mubr.f32.gmra.mrb[0].mxu0 %v2404
      %v2612 = vpop.f32.mrb[0].mxu0
      %v2613 = vadd.f32 0.0, %v2612
      %v2614 = vpop.f32.mrb[0].mxu0
      %2615 = vdwg.mxu0
      %2616 = vmatprep.subr.mxu0 0.0
      %2617 = vmatpush1.msra.mxu0 %v1258
      %2618 = vmatprep.subr.mxu0 0.0
      %2619 = vmatpush1.msra.mxu0 0.0
      %2620 = vmatprep.subr.mxu0 0.0
      %2621 = vmatpush1.msra.mxu0 0.0
      %2622 = vmatprep.subr.mxu0 0.0
      %2623 = vmatpush1.msra.mxu0 0.0
      %2624 = vmatprep.subr.mxu0 0.0
      %2625 = vmatpush1.msra.mxu0 0.0
      %2626 = vmatprep.subr.mxu0 0.0
      %2627 = vmatpush1.msra.mxu0 0.0
      %2628 = vmatprep.subr.mxu0 0.0
      %2629 = vmatpush1.msra.mxu0 0.0
      %2630 = vmatprep.subr.mxu0 0.0
      %2631 = vmatpush1.msra.mxu0 0.0
      %2632 = vmatprep.subr.mxu0 0.0
      %2633 = vmatpush1.msra.mxu0 0.0
      %2634 = vmatprep.subr.mxu0 0.0
      %2635 = vmatpush1.msra.mxu0 0.0
      %2636 = vmatprep.subr.mxu0 0.0
      %2637 = vmatpush1.msra.mxu0 0.0
      %2638 = vmatprep.subr.mxu0 0.0
      %2639 = vmatpush1.msra.mxu0 0.0
      %2640 = vmatprep.subr.mxu0 0.0
      %2641 = vmatpush1.msra.mxu0 0.0
      %2642 = vmatprep.subr.mxu0 0.0
      %2643 = vmatpush1.msra.mxu0 0.0
      %2644 = vmatprep.subr.mxu0 0.0
      %2645 = vmatpush1.msra.mxu0 0.0
      %2646 = vmatprep.subr.mxu0 0.0
      %2647 = vmatpush1.msra.mxu0 0.0
      %2648 = vmatprep.subr.mxu0 0.0
      %2649 = vmatpush1.msra.mxu0 0.0
      %2650 = vmatprep.subr.mxu0 0.0
      %2651 = vmatpush1.msra.mxu0 0.0
      %2652 = vmatprep.subr.mxu0 0.0
      %2653 = vmatpush1.msra.mxu0 0.0
      %2654 = vmatprep.subr.mxu0 0.0
      %2655 = vmatpush1.msra.mxu0 0.0
      %2656 = vmatprep.subr.mxu0 0.0
      %2657 = vmatpush1.msra.mxu0 0.0
      %2658 = vmatprep.subr.mxu0 0.0
      %2659 = vmatpush1.msra.mxu0 0.0
      %2660 = vmatprep.subr.mxu0 0.0
      %2661 = vmatpush1.msra.mxu0 0.0
      %2662 = vmatprep.subr.mxu0 0.0
      %2663 = vmatpush1.msra.mxu0 0.0
      %2664 = vmatprep.subr.mxu0 0.0
      %2665 = vmatpush1.msra.mxu0 0.0
      %2666 = vmatprep.subr.mxu0 0.0
      %2667 = vmatpush1.msra.mxu0 0.0
      %2668 = vmatprep.subr.mxu0 0.0
      %2669 = vmatpush1.msra.mxu0 0.0
      %2670 = vmatprep.subr.mxu0 0.0
      %2671 = vmatpush1.msra.mxu0 0.0
      %2672 = vmatprep.subr.mxu0 0.0
      %2673 = vmatpush1.msra.mxu0 0.0
      %2674 = vmatprep.subr.mxu0 0.0
      %2675 = vmatpush1.msra.mxu0 0.0
      %2676 = vmatprep.subr.mxu0 0.0
      %2677 = vmatpush1.msra.mxu0 0.0
      %2678 = vmatprep.subr.mxu0 0.0
      %2679 = vmatpush1.msra.mxu0 0.0
      %2680 = vmatprep.mubr.f32.mxu0 0.0
      %2681 = vmatmul.mubr.f32.gmra.mrb[0].mxu0 %v2404
      %v2682 = vpop.f32.mrb[0].mxu0
      %v2683 = vadd.f32 0.0, %v2682
      %v2684 = vpop.f32.mrb[0].mxu0
      %2685 = vdwg.mxu0
      %2686 = vmatprep.subr.mxu0 0.0
      %2687 = vmatpush1.msra.mxu0 %v1259
      %2688 = vmatprep.subr.mxu0 0.0
      %2689 = vmatpush1.msra.mxu0 0.0
      %2690 = vmatprep.subr.mxu0 0.0
      %2691 = vmatpush1.msra.mxu0 0.0
      %2692 = vmatprep.subr.mxu0 0.0
      %2693 = vmatpush1.msra.mxu0 0.0
      %2694 = vmatprep.subr.mxu0 0.0
      %2695 = vmatpush1.msra.mxu0 0.0
      %2696 = vmatprep.subr.mxu0 0.0
      %2697 = vmatpush1.msra.mxu0 0.0
      %2698 = vmatprep.subr.mxu0 0.0
      %2699 = vmatpush1.msra.mxu0 0.0
      %2700 = vmatprep.subr.mxu0 0.0
      %2701 = vmatpush1.msra.mxu0 0.0
      %2702 = vmatprep.subr.mxu0 0.0
      %2703 = vmatpush1.msra.mxu0 0.0
      %2704 = vmatprep.subr.mxu0 0.0
      %2705 = vmatpush1.msra.mxu0 0.0
      %2706 = vmatprep.subr.mxu0 0.0
      %2707 = vmatpush1.msra.mxu0 0.0
      %2708 = vmatprep.subr.mxu0 0.0
      %2709 = vmatpush1.msra.mxu0 0.0
      %2710 = vmatprep.subr.mxu0 0.0
      %2711 = vmatpush1.msra.mxu0 0.0
      %2712 = vmatprep.subr.mxu0 0.0
      %2713 = vmatpush1.msra.mxu0 0.0
      %2714 = vmatprep.subr.mxu0 0.0
      %2715 = vmatpush1.msra.mxu0 0.0
      %2716 = vmatprep.subr.mxu0 0.0
      %2717 = vmatpush1.msra.mxu0 0.0
      %2718 = vmatprep.subr.mxu0 0.0
      %2719 = vmatpush1.msra.mxu0 0.0
      %2720 = vmatprep.subr.mxu0 0.0
      %2721 = vmatpush1.msra.mxu0 0.0
      %2722 = vmatprep.subr.mxu0 0.0
      %2723 = vmatpush1.msra.mxu0 0.0
      %2724 = vmatprep.subr.mxu0 0.0
      %2725 = vmatpush1.msra.mxu0 0.0
      %2726 = vmatprep.subr.mxu0 0.0
      %2727 = vmatpush1.msra.mxu0 0.0
      %2728 = vmatprep.subr.mxu0 0.0
      %2729 = vmatpush1.msra.mxu0 0.0
      %2730 = vmatprep.subr.mxu0 0.0
      %2731 = vmatpush1.msra.mxu0 0.0
      %2732 = vmatprep.subr.mxu0 0.0
      %2733 = vmatpush1.msra.mxu0 0.0
      %2734 = vmatprep.subr.mxu0 0.0
      %2735 = vmatpush1.msra.mxu0 0.0
      %2736 = vmatprep.subr.mxu0 0.0
      %2737 = vmatpush1.msra.mxu0 0.0
      %2738 = vmatprep.subr.mxu0 0.0
      %2739 = vmatpush1.msra.mxu0 0.0
      %2740 = vmatprep.subr.mxu0 0.0
      %2741 = vmatpush1.msra.mxu0 0.0
      %2742 = vmatprep.subr.mxu0 0.0
      %2743 = vmatpush1.msra.mxu0 0.0
      %2744 = vmatprep.subr.mxu0 0.0
      %2745 = vmatpush1.msra.mxu0 0.0
      %2746 = vmatprep.subr.mxu0 0.0
      %2747 = vmatpush1.msra.mxu0 0.0
      %2748 = vmatprep.subr.mxu0 0.0
      %2749 = vmatpush1.msra.mxu0 0.0
      %2750 = vmatprep.mubr.f32.mxu0 0.0
      %2751 = vmatmul.mubr.f32.gmra.mrb[0].mxu0 %v2404
      %v2752 = vpop.f32.mrb[0].mxu0
      %v2753 = vadd.f32 0.0, %v2752
      %v2754 = vpop.f32.mrb[0].mxu0
      %2755 = vdwg.mxu0
      %2756 = vmatprep.subr.mxu0 0.0
      %2757 = vmatpush1.msra.mxu0 %v1260
      %2758 = vmatprep.subr.mxu0 0.0
      %2759 = vmatpush1.msra.mxu0 0.0
      %2760 = vmatprep.subr.mxu0 0.0
      %2761 = vmatpush1.msra.mxu0 0.0
      %2762 = vmatprep.subr.mxu0 0.0
      %2763 = vmatpush1.msra.mxu0 0.0
      %2764 = vmatprep.subr.mxu0 0.0
      %2765 = vmatpush1.msra.mxu0 0.0
      %2766 = vmatprep.subr.mxu0 0.0
      %2767 = vmatpush1.msra.mxu0 0.0
      %2768 = vmatprep.subr.mxu0 0.0
      %2769 = vmatpush1.msra.mxu0 0.0
      %2770 = vmatprep.subr.mxu0 0.0
      %2771 = vmatpush1.msra.mxu0 0.0
      %2772 = vmatprep.subr.mxu0 0.0
      %2773 = vmatpush1.msra.mxu0 0.0
      %2774 = vmatprep.subr.mxu0 0.0
      %2775 = vmatpush1.msra.mxu0 0.0
      %2776 = vmatprep.subr.mxu0 0.0
      %2777 = vmatpush1.msra.mxu0 0.0
      %2778 = vmatprep.subr.mxu0 0.0
      %2779 = vmatpush1.msra.mxu0 0.0
      %2780 = vmatprep.subr.mxu0 0.0
      %2781 = vmatpush1.msra.mxu0 0.0
      %2782 = vmatprep.subr.mxu0 0.0
      %2783 = vmatpush1.msra.mxu0 0.0
      %2784 = vmatprep.subr.mxu0 0.0
      %2785 = vmatpush1.msra.mxu0 0.0
      %2786 = vmatprep.subr.mxu0 0.0
      %2787 = vmatpush1.msra.mxu0 0.0
      %2788 = vmatprep.subr.mxu0 0.0
      %2789 = vmatpush1.msra.mxu0 0.0
      %2790 = vmatprep.subr.mxu0 0.0
      %2791 = vmatpush1.msra.mxu0 0.0
      %2792 = vmatprep.subr.mxu0 0.0
      %2793 = vmatpush1.msra.mxu0 0.0
      %2794 = vmatprep.subr.mxu0 0.0
      %2795 = vmatpush1.msra.mxu0 0.0
      %2796 = vmatprep.subr.mxu0 0.0
      %2797 = vmatpush1.msra.mxu0 0.0
      %2798 = vmatprep.subr.mxu0 0.0
      %2799 = vmatpush1.msra.mxu0 0.0
      %2800 = vmatprep.subr.mxu0 0.0
      %2801 = vmatpush1.msra.mxu0 0.0
      %2802 = vmatprep.subr.mxu0 0.0
      %2803 = vmatpush1.msra.mxu0 0.0
      %2804 = vmatprep.subr.mxu0 0.0
      %2805 = vmatpush1.msra.mxu0 0.0
      %2806 = vmatprep.subr.mxu0 0.0
      %2807 = vmatpush1.msra.mxu0 0.0
      %2808 = vmatprep.subr.mxu0 0.0
      %2809 = vmatpush1.msra.mxu0 0.0
      %2810 = vmatprep.subr.mxu0 0.0
      %2811 = vmatpush1.msra.mxu0 0.0
      %2812 = vmatprep.subr.mxu0 0.0
      %2813 = vmatpush1.msra.mxu0 0.0
      %2814 = vmatprep.subr.mxu0 0.0
      %2815 = vmatpush1.msra.mxu0 0.0
      %2816 = vmatprep.subr.mxu0 0.0
      %2817 = vmatpush1.msra.mxu0 0.0
      %2818 = vmatprep.subr.mxu0 0.0
      %2819 = vmatpush1.msra.mxu0 0.0
      %2820 = vmatprep.mubr.f32.mxu0 0.0
      %2821 = vmatmul.mubr.f32.gmra.mrb[0].mxu0 %v2404
      %v2822 = vpop.f32.mrb[0].mxu0
      %v2823 = vadd.f32 0.0, %v2822
      %v2824 = vpop.f32.mrb[0].mxu0
      %2825 = vdwg.mxu0
      %2826 = vmatprep.subr.mxu0 0.0
      %2827 = vmatpush1.msra.mxu0 %v1261
      %2828 = vmatprep.subr.mxu0 0.0
      %2829 = vmatpush1.msra.mxu0 0.0
      %2830 = vmatprep.subr.mxu0 0.0
      %2831 = vmatpush1.msra.mxu0 0.0
      %2832 = vmatprep.subr.mxu0 0.0
      %2833 = vmatpush1.msra.mxu0 0.0
      %2834 = vmatprep.subr.mxu0 0.0
      %2835 = vmatpush1.msra.mxu0 0.0
      %2836 = vmatprep.subr.mxu0 0.0
      %2837 = vmatpush1.msra.mxu0 0.0
      %2838 = vmatprep.subr.mxu0 0.0
      %2839 = vmatpush1.msra.mxu0 0.0
      %2840 = vmatprep.subr.mxu0 0.0
      %2841 = vmatpush1.msra.mxu0 0.0
      %2842 = vmatprep.subr.mxu0 0.0
      %2843 = vmatpush1.msra.mxu0 0.0
      %2844 = vmatprep.subr.mxu0 0.0
      %2845 = vmatpush1.msra.mxu0 0.0
      %2846 = vmatprep.subr.mxu0 0.0
      %2847 = vmatpush1.msra.mxu0 0.0
      %2848 = vmatprep.subr.mxu0 0.0
      %2849 = vmatpush1.msra.mxu0 0.0
      %2850 = vmatprep.subr.mxu0 0.0
      %2851 = vmatpush1.msra.mxu0 0.0
      %2852 = vmatprep.subr.mxu0 0.0
      %2853 = vmatpush1.msra.mxu0 0.0
      %2854 = vmatprep.subr.mxu0 0.0
      %2855 = vmatpush1.msra.mxu0 0.0
      %2856 = vmatprep.subr.mxu0 0.0
      %2857 = vmatpush1.msra.mxu0 0.0
      %2858 = vmatprep.subr.mxu0 0.0
      %2859 = vmatpush1.msra.mxu0 0.0
      %2860 = vmatprep.subr.mxu0 0.0
      %2861 = vmatpush1.msra.mxu0 0.0
      %2862 = vmatprep.subr.mxu0 0.0
      %2863 = vmatpush1.msra.mxu0 0.0
      %2864 = vmatprep.subr.mxu0 0.0
      %2865 = vmatpush1.msra.mxu0 0.0
      %2866 = vmatprep.subr.mxu0 0.0
      %2867 = vmatpush1.msra.mxu0 0.0
      %2868 = vmatprep.subr.mxu0 0.0
      %2869 = vmatpush1.msra.mxu0 0.0
      %2870 = vmatprep.subr.mxu0 0.0
      %2871 = vmatpush1.msra.mxu0 0.0
      %2872 = vmatprep.subr.mxu0 0.0
      %2873 = vmatpush1.msra.mxu0 0.0
      %2874 = vmatprep.subr.mxu0 0.0
      %2875 = vmatpush1.msra.mxu0 0.0
      %2876 = vmatprep.subr.mxu0 0.0
      %2877 = vmatpush1.msra.mxu0 0.0
      %2878 = vmatprep.subr.mxu0 0.0
      %2879 = vmatpush1.msra.mxu0 0.0
      %2880 = vmatprep.subr.mxu0 0.0
      %2881 = vmatpush1.msra.mxu0 0.0
      %2882 = vmatprep.subr.mxu0 0.0
      %2883 = vmatpush1.msra.mxu0 0.0
      %2884 = vmatprep.subr.mxu0 0.0
      %2885 = vmatpush1.msra.mxu0 0.0
      %2886 = vmatprep.subr.mxu0 0.0
      %2887 = vmatpush1.msra.mxu0 0.0
      %2888 = vmatprep.subr.mxu0 0.0
      %2889 = vmatpush1.msra.mxu0 0.0
      %2890 = vmatprep.mubr.f32.mxu0 0.0
      %2891 = vmatmul.mubr.f32.gmra.mrb[0].mxu0 %v2404
      %v2892 = vpop.f32.mrb[0].mxu0
      %v2893 = vadd.f32 0.0, %v2892
      %v2894 = vpop.f32.mrb[0].mxu0
      %2895 = vdwg.mxu0
      %2896 = vmatprep.subr.mxu0 0.0
      %2897 = vmatpush1.msra.mxu0 %v1262
      %2898 = vmatprep.subr.mxu0 0.0
      %2899 = vmatpush1.msra.mxu0 0.0
      %2900 = vmatprep.subr.mxu0 0.0
      %2901 = vmatpush1.msra.mxu0 0.0
      %2902 = vmatprep.subr.mxu0 0.0
      %2903 = vmatpush1.msra.mxu0 0.0
      %2904 = vmatprep.subr.mxu0 0.0
      %2905 = vmatpush1.msra.mxu0 0.0
      %2906 = vmatprep.subr.mxu0 0.0
      %2907 = vmatpush1.msra.mxu0 0.0
      %2908 = vmatprep.subr.mxu0 0.0
      %2909 = vmatpush1.msra.mxu0 0.0
      %2910 = vmatprep.subr.mxu0 0.0
      %2911 = vmatpush1.msra.mxu0 0.0
      %2912 = vmatprep.subr.mxu0 0.0
      %2913 = vmatpush1.msra.mxu0 0.0
      %2914 = vmatprep.subr.mxu0 0.0
      %2915 = vmatpush1.msra.mxu0 0.0
      %2916 = vmatprep.subr.mxu0 0.0
      %2917 = vmatpush1.msra.mxu0 0.0
      %2918 = vmatprep.subr.mxu0 0.0
      %2919 = vmatpush1.msra.mxu0 0.0
      %2920 = vmatprep.subr.mxu0 0.0
      %2921 = vmatpush1.msra.mxu0 0.0
      %2922 = vmatprep.subr.mxu0 0.0
      %2923 = vmatpush1.msra.mxu0 0.0
      %2924 = vmatprep.subr.mxu0 0.0
      %2925 = vmatpush1.msra.mxu0 0.0
      %2926 = vmatprep.subr.mxu0 0.0
      %2927 = vmatpush1.msra.mxu0 0.0
      %2928 = vmatprep.subr.mxu0 0.0
      %2929 = vmatpush1.msra.mxu0 0.0
      %2930 = vmatprep.subr.mxu0 0.0
      %2931 = vmatpush1.msra.mxu0 0.0
      %2932 = vmatprep.subr.mxu0 0.0
      %2933 = vmatpush1.msra.mxu0 0.0
      %2934 = vmatprep.subr.mxu0 0.0
      %2935 = vmatpush1.msra.mxu0 0.0
      %2936 = vmatprep.subr.mxu0 0.0
      %2937 = vmatpush1.msra.mxu0 0.0
      %2938 = vmatprep.subr.mxu0 0.0
      %2939 = vmatpush1.msra.mxu0 0.0
      %2940 = vmatprep.subr.mxu0 0.0
      %2941 = vmatpush1.msra.mxu0 0.0
      %2942 = vmatprep.subr.mxu0 0.0
      %2943 = vmatpush1.msra.mxu0 0.0
      %2944 = vmatprep.subr.mxu0 0.0
      %2945 = vmatpush1.msra.mxu0 0.0
      %2946 = vmatprep.subr.mxu0 0.0
      %2947 = vmatpush1.msra.mxu0 0.0
      %2948 = vmatprep.subr.mxu0 0.0
      %2949 = vmatpush1.msra.mxu0 0.0
      %2950 = vmatprep.subr.mxu0 0.0
      %2951 = vmatpush1.msra.mxu0 0.0
      %2952 = vmatprep.subr.mxu0 0.0
      %2953 = vmatpush1.msra.mxu0 0.0
      %2954 = vmatprep.subr.mxu0 0.0
      %2955 = vmatpush1.msra.mxu0 0.0
      %2956 = vmatprep.subr.mxu0 0.0
      %2957 = vmatpush1.msra.mxu0 0.0
      %2958 = vmatprep.subr.mxu0 0.0
      %2959 = vmatpush1.msra.mxu0 0.0
      %2960 = vmatprep.mubr.f32.mxu0 0.0
      %2961 = vmatmul.mubr.f32.gmra.mrb[0].mxu0 %v2404
      %v2962 = vpop.f32.mrb[0].mxu0
      %v2963 = vadd.f32 0.0, %v2962
      %v2964 = vpop.f32.mrb[0].mxu0
      %2965 = vdwg.mxu0
      %2970 = vrot.lane.b32.xlu0 0.0, 16
      %v2971 = vpop.permute.xlu0 %2970
      %2972 = vrot.lane.b32.xlu0 %v1977, 16
      %v2973 = vpop.permute.xlu0 %2972
      %2974 = vrot.lane.b32.xlu0 %v2117, 16
      %v2975 = vpop.permute.xlu0 %2974
      %2976 = vrot.lane.b32.xlu0 %v2257, 16
      %v2977 = vpop.permute.xlu0 %2976
      %2985 = vrot.lane.b32.xlu0 0.0, 32
      %v2986 = vpop.permute.xlu0 %2985
      %2987 = vrot.lane.b32.xlu0 %v2543, 32
      %v2988 = vpop.permute.xlu0 %2987
      %2989 = vrot.lane.b32.xlu0 %v2683, 32
      %v2990 = vpop.permute.xlu0 %2989
      %2991 = vrot.lane.b32.xlu0 %v2823, 32
      %v2992 = vpop.permute.xlu0 %2991
      %3001 = vrot.lane.b32.xlu0 %v1342, 48
      %v3002 = vpop.permute.xlu0 %3001
      %3003 = vrot.lane.b32.xlu0 %v1482, 48
      %v3004 = vpop.permute.xlu0 %3003
      %3005 = vrot.lane.b32.xlu0 %v1622, 48
      %v3006 = vpop.permute.xlu0 %3005
      %3007 = vrot.lane.b32.xlu0 %v1762, 48
      %v3008 = vpop.permute.xlu0 %3007
      %3017 = vrot.lane.b32.xlu0 %v1907, 64
      %v3018 = vpop.permute.xlu0 %3017
      %3019 = vrot.lane.b32.xlu0 %v2047, 64
      %v3020 = vpop.permute.xlu0 %3019
      %3021 = vrot.lane.b32.xlu0 %v2187, 64
      %v3022 = vpop.permute.xlu0 %3021
      %3023 = vrot.lane.b32.xlu0 %v2327, 64
      %v3024 = vpop.permute.xlu0 %3023
      %3033 = vrot.lane.b32.xlu0 %v2473, 80
      %v3034 = vpop.permute.xlu0 %3033
      %3035 = vrot.lane.b32.xlu0 %v2613, 80
      %v3036 = vpop.permute.xlu0 %3035
      %3037 = vrot.lane.b32.xlu0 %v2753, 80
      %v3038 = vpop.permute.xlu0 %3037
      %3039 = vrot.lane.b32.xlu0 %v2893, 80
      %v3040 = vpop.permute.xlu0 %3039
      %3049 = vrot.lane.b32.xlu0 %v1412, 96
      %v3050 = vpop.permute.xlu0 %3049
      %3051 = vrot.lane.b32.xlu0 %v1552, 96
      %v3052 = vpop.permute.xlu0 %3051
      %3053 = vrot.lane.b32.xlu0 %v1692, 96
      %v3054 = vpop.permute.xlu0 %3053
      %3055 = vrot.lane.b32.xlu0 %v1832, 96
      %v3056 = vpop.permute.xlu0 %3055
      %3062 = vrot.lane.b32.xlu0 %v1977, 112
      %v3063 = vpop.permute.xlu0 %3062
      %3064 = vrot.lane.b32.xlu0 %v2117, 112
      %v3065 = vpop.permute.xlu0 %3064
      %3066 = vrot.lane.b32.xlu0 %v2257, 112
      %v3067 = vpop.permute.xlu0 %3066
      %3068 = vrot.lane.b32.xlu0 %v2397, 112
      %v3069 = vpop.permute.xlu0 %3068
      %vm3074 = vcmask 130048
      %v3075 = vsel %vm3074, 0.0, %v2971
      %v3076 = vsel %vm3074, %v1412, %v2973
      %v3077 = vsel %vm3074, %v1552, %v2975
      %v3078 = vsel %vm3074, %v1692, %v2977
      %vm3079 = vcmask 261120
      %v3080 = vsel %vm3079, %v3075, %v2986
      %v3081 = vsel %vm3079, %v3076, %v2988
      %v3082 = vsel %vm3079, %v3077, %v2990
      %v3083 = vsel %vm3079, %v3078, %v2992
      %vm3084 = vcmask 392192
      %v3085 = vsel %vm3084, %v3080, %v3002
      %v3086 = vsel %vm3084, %v3081, %v3004
      %v3087 = vsel %vm3084, %v3082, %v3006
      %v3088 = vsel %vm3084, %v3083, %v3008
      %vm3089 = vcmask 523264
      %v3090 = vsel %vm3089, %v3085, %v3018
      %v3091 = vsel %vm3089, %v3086, %v3020
      %v3092 = vsel %vm3089, %v3087, %v3022
      %v3093 = vsel %vm3089, %v3088, %v3024
      %vm3094 = vcmask 654336
      %v3095 = vsel %vm3094, %v3090, %v3034
      %v3096 = vsel %vm3094, %v3091, %v3036
      %v3097 = vsel %vm3094, %v3092, %v3038
      %v3098 = vsel %vm3094, %v3093, %v3040
      %vm3099 = vcmask 785408
      %v3100 = vsel %vm3099, %v3095, %v3050
      %v3101 = vsel %vm3099, %v3096, %v3052
      %v3102 = vsel %vm3099, %v3097, %v3054
      %v3103 = vsel %vm3099, %v3098, %v3056
      %vm3104 = vcmask 916480
      %v3105 = vsel %vm3104, %v3100, %v3063
      %v3106 = vsel %vm3104, %v3101, %v3065
      %v3107 = vsel %vm3104, %v3102, %v3067
      %v3108 = vsel %vm3104, %v3103, %v3069
      %v3109 = vld [vmem:[%s5] sm:$0xff]
      %v3110 = vld [vmem:[%s5 + $0x8] sm:$0xff]
      %v3111 = vld [vmem:[%s5 + $0x10] sm:$0xff]
      %v3112 = vld [vmem:[%s5 + $0x18] sm:$0xff]
      %v3113 = vld [vmem:[%s5 + $0x20] sm:$0xff]
      %v3114 = vld [vmem:[%s5 + $0x28] sm:$0xff]
      %v3115 = vld [vmem:[%s5 + $0x30] sm:$0xff]
      %v3116 = vld [vmem:[%s5 + $0x38] sm:$0xff]
      %v3117 = vld [vmem:[%s5 + $0x40] sm:$0xff]
      %v3118 = vld [vmem:[%s5 + $0x48] sm:$0xff]
      %v3119 = vld [vmem:[%s5 + $0x50] sm:$0xff]
      %v3120 = vld [vmem:[%s5 + $0x58] sm:$0xff]
      %v3121 = vld [vmem:[%s5 + $0x60] sm:$0xff]
      %v3122 = vld [vmem:[%s5 + $0x68] sm:$0xff]
      %v3123 = vld [vmem:[%s5 + $0x70] sm:$0xff]
      %v3124 = vld [vmem:[%s5 + $0x78] sm:$0xff]
      %v3125 = vld [vmem:[%s5 + $0x80] sm:$0xff]
      %v3126 = vld [vmem:[%s5 + $0x88] sm:$0xff]
      %v3127 = vld [vmem:[%s6] sm:$0x1]
      %v3129 = vlaneseq
      %v3130 = vshrl.u32 %v3129, 7
      %v3131 = vsub.s32 0, %v3130
      %v3132 = vrot.slane %v3127, %v3131
      %v3134 = vsel %vm3074, %v2543, 0
      %3136 = vmatprep.subr.mxu0 0.0
      %3137 = vmatpush1.msra.mxu0 %v3109
      %3138 = vmatprep.subr.mxu0 0.0
      %3139 = vmatpush1.msra.mxu0 %v3110
      %3140 = vmatprep.subr.mxu0 0.0
      %3141 = vmatpush1.msra.mxu0 %v3111
      %3142 = vmatprep.subr.mxu0 0.0
      %3143 = vmatpush1.msra.mxu0 %v3112
      %3144 = vmatprep.subr.mxu0 0.0
      %3145 = vmatpush1.msra.mxu0 %v3113
      %3146 = vmatprep.subr.mxu0 0.0
      %3147 = vmatpush1.msra.mxu0 %v3114
      %3148 = vmatprep.subr.mxu0 0.0
      %3149 = vmatpush1.msra.mxu0 %v3115
      %3150 = vmatprep.subr.mxu0 0.0
      %3151 = vmatpush1.msra.mxu0 %v3116
      %3152 = vmatprep.subr.mxu0 0.0
      %3153 = vmatpush1.msra.mxu0 %v3117
      %3154 = vmatprep.subr.mxu0 0.0
      %3155 = vmatpush1.msra.mxu0 %v3118
      %3156 = vmatprep.subr.mxu0 0.0
      %3157 = vmatpush1.msra.mxu0 %v3119
      %3158 = vmatprep.subr.mxu0 0.0
      %3159 = vmatpush1.msra.mxu0 %v3120
      %3160 = vmatprep.subr.mxu0 0.0
      %3161 = vmatpush1.msra.mxu0 %v3121
      %3162 = vmatprep.subr.mxu0 0.0
      %3163 = vmatpush1.msra.mxu0 %v3122
      %3164 = vmatprep.subr.mxu0 0.0
      %3165 = vmatpush1.msra.mxu0 %v3123
      %3166 = vmatprep.subr.mxu0 0.0
      %3167 = vmatpush1.msra.mxu0 %v3124
      %3168 = vmatprep.subr.mxu0 0.0
      %3169 = vmatpush1.msra.mxu0 %v3125
      %3170 = vmatprep.subr.mxu0 0.0
      %3171 = vmatpush1.msra.mxu0 %v3126
      %3172 = vmatprep.subr.mxu0 0.0
      %3173 = vmatpush1.msra.mxu0 0.0
      %3174 = vmatprep.subr.mxu0 0.0
      %3175 = vmatpush1.msra.mxu0 0.0
      %3176 = vmatprep.subr.mxu0 0.0
      %3177 = vmatpush1.msra.mxu0 0.0
      %3178 = vmatprep.subr.mxu0 0.0
      %3179 = vmatpush1.msra.mxu0 0.0
      %3180 = vmatprep.subr.mxu0 0.0
      %3181 = vmatpush1.msra.mxu0 0.0
      %3182 = vmatprep.subr.mxu0 0.0
      %3183 = vmatpush1.msra.mxu0 0.0
      %3184 = vmatprep.subr.mxu0 0.0
      %3185 = vmatpush1.msra.mxu0 0.0
      %3186 = vmatprep.subr.mxu0 0.0
      %3187 = vmatpush1.msra.mxu0 0.0
      %3188 = vmatprep.subr.mxu0 0.0
      %3189 = vmatpush1.msra.mxu0 0.0
      %3190 = vmatprep.subr.mxu0 0.0
      %3191 = vmatpush1.msra.mxu0 0.0
      %3192 = vmatprep.subr.mxu0 0.0
      %3193 = vmatpush1.msra.mxu0 0.0
      %3194 = vmatprep.subr.mxu0 0.0
      %3195 = vmatpush1.msra.mxu0 0.0
      %3196 = vmatprep.subr.mxu0 0.0
      %3197 = vmatpush1.msra.mxu0 0.0
      %3198 = vmatprep.subr.mxu0 0.0
      %3199 = vmatpush1.msra.mxu0 0.0
      %3200 = vmatprep.mubr.f32.mxu0 %v3134
      %3201 = vmatmul.mubr.f32.gmra.mrb[0].mxu0 %v3105
      %v3202 = vpop.f32.mrb[0].mxu0
      %v3203 = vadd.f32 %v3132, %v3202
      %v3204 = vpop.f32.mrb[0].mxu0
      %3205 = vdwg.mxu0
      %v3206 = vsel %vm3074, %v2683, 0
      %3208 = vmatprep.subr.mxu0 0.0
      %3209 = vmatpush1.msra.mxu0 %v3109
      %3210 = vmatprep.subr.mxu0 0.0
      %3211 = vmatpush1.msra.mxu0 %v3110
      %3212 = vmatprep.subr.mxu0 0.0
      %3213 = vmatpush1.msra.mxu0 %v3111
      %3214 = vmatprep.subr.mxu0 0.0
      %3215 = vmatpush1.msra.mxu0 %v3112
      %3216 = vmatprep.subr.mxu0 0.0
      %3217 = vmatpush1.msra.mxu0 %v3113
      %3218 = vmatprep.subr.mxu0 0.0
      %3219 = vmatpush1.msra.mxu0 %v3114
      %3220 = vmatprep.subr.mxu0 0.0
      %3221 = vmatpush1.msra.mxu0 %v3115
      %3222 = vmatprep.subr.mxu0 0.0
      %3223 = vmatpush1.msra.mxu0 %v3116
      %3224 = vmatprep.subr.mxu0 0.0
      %3225 = vmatpush1.msra.mxu0 %v3117
      %3226 = vmatprep.subr.mxu0 0.0
      %3227 = vmatpush1.msra.mxu0 %v3118
      %3228 = vmatprep.subr.mxu0 0.0
      %3229 = vmatpush1.msra.mxu0 %v3119
      %3230 = vmatprep.subr.mxu0 0.0
      %3231 = vmatpush1.msra.mxu0 %v3120
      %3232 = vmatprep.subr.mxu0 0.0
      %3233 = vmatpush1.msra.mxu0 %v3121
      %3234 = vmatprep.subr.mxu0 0.0
      %3235 = vmatpush1.msra.mxu0 %v3122
      %3236 = vmatprep.subr.mxu0 0.0
      %3237 = vmatpush1.msra.mxu0 %v3123
      %3238 = vmatprep.subr.mxu0 0.0
      %3239 = vmatpush1.msra.mxu0 %v3124
      %3240 = vmatprep.subr.mxu0 0.0
      %3241 = vmatpush1.msra.mxu0 %v3125
      %3242 = vmatprep.subr.mxu0 0.0
      %3243 = vmatpush1.msra.mxu0 %v3126
      %3244 = vmatprep.subr.mxu0 0.0
      %3245 = vmatpush1.msra.mxu0 0.0
      %3246 = vmatprep.subr.mxu0 0.0
      %3247 = vmatpush1.msra.mxu0 0.0
      %3248 = vmatprep.subr.mxu0 0.0
      %3249 = vmatpush1.msra.mxu0 0.0
      %3250 = vmatprep.subr.mxu0 0.0
      %3251 = vmatpush1.msra.mxu0 0.0
      %3252 = vmatprep.subr.mxu0 0.0
      %3253 = vmatpush1.msra.mxu0 0.0
      %3254 = vmatprep.subr.mxu0 0.0
      %3255 = vmatpush1.msra.mxu0 0.0
      %3256 = vmatprep.subr.mxu0 0.0
      %3257 = vmatpush1.msra.mxu0 0.0
      %3258 = vmatprep.subr.mxu0 0.0
      %3259 = vmatpush1.msra.mxu0 0.0
      %3260 = vmatprep.subr.mxu0 0.0
      %3261 = vmatpush1.msra.mxu0 0.0
      %3262 = vmatprep.subr.mxu0 0.0
      %3263 = vmatpush1.msra.mxu0 0.0
      %3264 = vmatprep.subr.mxu0 0.0
      %3265 = vmatpush1.msra.mxu0 0.0
      %3266 = vmatprep.subr.mxu0 0.0
      %3267 = vmatpush1.msra.mxu0 0.0
      %3268 = vmatprep.subr.mxu0 0.0
      %3269 = vmatpush1.msra.mxu0 0.0
      %3270 = vmatprep.subr.mxu0 0.0
      %3271 = vmatpush1.msra.mxu0 0.0
      %3272 = vmatprep.mubr.f32.mxu0 %v3206
      %3273 = vmatmul.mubr.f32.gmra.mrb[0].mxu0 %v3106
      %v3274 = vpop.f32.mrb[0].mxu0
      %v3275 = vadd.f32 %v3132, %v3274
      %v3276 = vpop.f32.mrb[0].mxu0
      %3277 = vdwg.mxu0
      %v3278 = vsel %vm3074, %v2823, 0
      %3280 = vmatprep.subr.mxu0 0.0
      %3281 = vmatpush1.msra.mxu0 %v3109
      %3282 = vmatprep.subr.mxu0 0.0
      %3283 = vmatpush1.msra.mxu0 %v3110
      %3284 = vmatprep.subr.mxu0 0.0
      %3285 = vmatpush1.msra.mxu0 %v3111
      %3286 = vmatprep.subr.mxu0 0.0
      %3287 = vmatpush1.msra.mxu0 %v3112
      %3288 = vmatprep.subr.mxu0 0.0
      %3289 = vmatpush1.msra.mxu0 %v3113
      %3290 = vmatprep.subr.mxu0 0.0
      %3291 = vmatpush1.msra.mxu0 %v3114
      %3292 = vmatprep.subr.mxu0 0.0
      %3293 = vmatpush1.msra.mxu0 %v3115
      %3294 = vmatprep.subr.mxu0 0.0
      %3295 = vmatpush1.msra.mxu0 %v3116
      %3296 = vmatprep.subr.mxu0 0.0
      %3297 = vmatpush1.msra.mxu0 %v3117
      %3298 = vmatprep.subr.mxu0 0.0
      %3299 = vmatpush1.msra.mxu0 %v3118
      %3300 = vmatprep.subr.mxu0 0.0
      %3301 = vmatpush1.msra.mxu0 %v3119
      %3302 = vmatprep.subr.mxu0 0.0
      %3303 = vmatpush1.msra.mxu0 %v3120
      %3304 = vmatprep.subr.mxu0 0.0
      %3305 = vmatpush1.msra.mxu0 %v3121
      %3306 = vmatprep.subr.mxu0 0.0
      %3307 = vmatpush1.msra.mxu0 %v3122
      %3308 = vmatprep.subr.mxu0 0.0
      %3309 = vmatpush1.msra.mxu0 %v3123
      %3310 = vmatprep.subr.mxu0 0.0
      %3311 = vmatpush1.msra.mxu0 %v3124
      %3312 = vmatprep.subr.mxu0 0.0
      %3313 = vmatpush1.msra.mxu0 %v3125
      %3314 = vmatprep.subr.mxu0 0.0
      %3315 = vmatpush1.msra.mxu0 %v3126
      %3316 = vmatprep.subr.mxu0 0.0
      %3317 = vmatpush1.msra.mxu0 0.0
      %3318 = vmatprep.subr.mxu0 0.0
      %3319 = vmatpush1.msra.mxu0 0.0
      %3320 = vmatprep.subr.mxu0 0.0
      %3321 = vmatpush1.msra.mxu0 0.0
      %3322 = vmatprep.subr.mxu0 0.0
      %3323 = vmatpush1.msra.mxu0 0.0
      %3324 = vmatprep.subr.mxu0 0.0
      %3325 = vmatpush1.msra.mxu0 0.0
      %3326 = vmatprep.subr.mxu0 0.0
      %3327 = vmatpush1.msra.mxu0 0.0
      %3328 = vmatprep.subr.mxu0 0.0
      %3329 = vmatpush1.msra.mxu0 0.0
      %3330 = vmatprep.subr.mxu0 0.0
      %3331 = vmatpush1.msra.mxu0 0.0
      %3332 = vmatprep.subr.mxu0 0.0
      %3333 = vmatpush1.msra.mxu0 0.0
      %3334 = vmatprep.subr.mxu0 0.0
      %3335 = vmatpush1.msra.mxu0 0.0
      %3336 = vmatprep.subr.mxu0 0.0
      %3337 = vmatpush1.msra.mxu0 0.0
      %3338 = vmatprep.subr.mxu0 0.0
      %3339 = vmatpush1.msra.mxu0 0.0
      %3340 = vmatprep.subr.mxu0 0.0
      %3341 = vmatpush1.msra.mxu0 0.0
      %3342 = vmatprep.subr.mxu0 0.0
      %3343 = vmatpush1.msra.mxu0 0.0
      %3344 = vmatprep.mubr.f32.mxu0 %v3278
      %3345 = vmatmul.mubr.f32.gmra.mrb[0].mxu0 %v3107
      %v3346 = vpop.f32.mrb[0].mxu0
      %v3347 = vadd.f32 %v3132, %v3346
      %v3348 = vpop.f32.mrb[0].mxu0
      %3349 = vdwg.mxu0
      %v3351 = vsel %vm3074, %v2963, 0
      %3353 = vmatprep.subr.mxu0 0.0
      %3354 = vmatpush1.msra.mxu0 %v3109
      %3355 = vmatprep.subr.mxu0 0.0
      %3356 = vmatpush1.msra.mxu0 %v3110
      %3357 = vmatprep.subr.mxu0 0.0
      %3358 = vmatpush1.msra.mxu0 %v3111
      %3359 = vmatprep.subr.mxu0 0.0
      %3360 = vmatpush1.msra.mxu0 %v3112
      %3361 = vmatprep.subr.mxu0 0.0
      %3362 = vmatpush1.msra.mxu0 %v3113
      %3363 = vmatprep.subr.mxu0 0.0
      %3364 = vmatpush1.msra.mxu0 %v3114
      %3365 = vmatprep.subr.mxu0 0.0
      %3366 = vmatpush1.msra.mxu0 %v3115
      %3367 = vmatprep.subr.mxu0 0.0
      %3368 = vmatpush1.msra.mxu0 %v3116
      %3369 = vmatprep.subr.mxu0 0.0
      %3370 = vmatpush1.msra.mxu0 %v3117
      %3371 = vmatprep.subr.mxu0 0.0
      %3372 = vmatpush1.msra.mxu0 %v3118
      %3373 = vmatprep.subr.mxu0 0.0
      %3374 = vmatpush1.msra.mxu0 %v3119
      %3375 = vmatprep.subr.mxu0 0.0
      %3376 = vmatpush1.msra.mxu0 %v3120
      %3377 = vmatprep.subr.mxu0 0.0
      %3378 = vmatpush1.msra.mxu0 %v3121
      %3379 = vmatprep.subr.mxu0 0.0
      %3380 = vmatpush1.msra.mxu0 %v3122
      %3381 = vmatprep.subr.mxu0 0.0
      %3382 = vmatpush1.msra.mxu0 %v3123
      %3383 = vmatprep.subr.mxu0 0.0
      %3384 = vmatpush1.msra.mxu0 %v3124
      %3385 = vmatprep.subr.mxu0 0.0
      %3386 = vmatpush1.msra.mxu0 %v3125
      %3387 = vmatprep.subr.mxu0 0.0
      %3388 = vmatpush1.msra.mxu0 %v3126
      %3389 = vmatprep.subr.mxu0 0.0
      %3390 = vmatpush1.msra.mxu0 0.0
      %3391 = vmatprep.subr.mxu0 0.0
      %3392 = vmatpush1.msra.mxu0 0.0
      %3393 = vmatprep.subr.mxu0 0.0
      %3394 = vmatpush1.msra.mxu0 0.0
      %3395 = vmatprep.subr.mxu0 0.0
      %3396 = vmatpush1.msra.mxu0 0.0
      %3397 = vmatprep.subr.mxu0 0.0
      %3398 = vmatpush1.msra.mxu0 0.0
      %3399 = vmatprep.subr.mxu0 0.0
      %3400 = vmatpush1.msra.mxu0 0.0
      %3401 = vmatprep.subr.mxu0 0.0
      %3402 = vmatpush1.msra.mxu0 0.0
      %3403 = vmatprep.subr.mxu0 0.0
      %3404 = vmatpush1.msra.mxu0 0.0
      %3405 = vmatprep.subr.mxu0 0.0
      %3406 = vmatpush1.msra.mxu0 0.0
      %3407 = vmatprep.subr.mxu0 0.0
      %3408 = vmatpush1.msra.mxu0 0.0
      %3409 = vmatprep.subr.mxu0 0.0
      %3410 = vmatpush1.msra.mxu0 0.0
      %3411 = vmatprep.subr.mxu0 0.0
      %3412 = vmatpush1.msra.mxu0 0.0
      %3413 = vmatprep.subr.mxu0 0.0
      %3414 = vmatpush1.msra.mxu0 0.0
      %3415 = vmatprep.subr.mxu0 0.0
      %3416 = vmatpush1.msra.mxu0 0.0
      %3417 = vmatprep.mubr.f32.mxu0 %v3351
      %3418 = vmatmul.mubr.f32.gmra.mrb[0].mxu0 %v3108
      %v3419 = vpop.f32.mrb[0].mxu0
      %v3420 = vadd.f32 %v3132, %v3419
      %v3421 = vpop.f32.mrb[0].mxu0
      %3422 = vdwg.mxu0
      %vm3423 = vcmp.ge.f32.partialorder %v3203, 0.0
      %vm3424 = vcmp.ge.f32.partialorder %v3275, 0.0
      %vm3425 = vcmp.ge.f32.partialorder %v3347, 0.0
      %vm3426 = vcmp.ge.f32.partialorder %v3420, 0.0
      %v3427 = vmul.f32 %v3203, 0.2
      %v3428 = vmul.f32 %v3275, 0.2
      %v3429 = vmul.f32 %v3347, 0.2
      %v3430 = vmul.f32 %v3420, 0.2
      %v3431 = vsel %vm3423, %v3203, %v3427
      %v3432 = vsel %vm3424, %v3275, %v3428
      %v3433 = vsel %vm3425, %v3347, %v3429
      %v3434 = vsel %vm3426, %v3420, %v3430
      %v3435 = vld [vmem:[%s7] sm:$0x1]
      %v3437 = vlaneseq
      %v3438 = vshrl.u32 %v3437, 7
      %v3439 = vsub.s32 0, %v3438
      %v3440 = vrot.slane %v3435, %v3439
      %v3442 = vmul.f32 %v3431, %v3440
      %v3443 = vmul.f32 %v3432, %v3440
      %v3444 = vmul.f32 %v3433, %v3440
      %v3445 = vmul.f32 %v3434, %v3440
      %v3446 = vld [vmem:[%s8] sm:$0x1]
      %v3448 = vlaneseq
      %v3449 = vshrl.u32 %v3448, 7
      %v3450 = vsub.s32 0, %v3449
      %v3451 = vrot.slane %v3446, %v3450
      %v3453 = vadd.f32 %v3442, %v3451
      %v3454 = vadd.f32 %v3443, %v3451
      %v3455 = vadd.f32 %v3444, %v3451
      %v3456 = vadd.f32 %v3445, %v3451
      %vm3457 = vcmask 31744
      %v3458 = vsel %vm3457, %v1270, 0
      %vm3460 = vcmask 1043456
      %v3462 = vsel %vm3460, %v3453, 0
      %3464 = vmatprep.subr.mxu0 0.0
      %3465 = vmatpush1.msra.mxu0 %v3462
      %3466 = vmatprep.subr.mxu0 0.0
      %3467 = vmatpush1.msra.mxu0 0.0
      %3468 = vmatprep.subr.mxu0 0.0
      %3469 = vmatpush1.msra.mxu0 0.0
      %3470 = vmatprep.subr.mxu0 0.0
      %3471 = vmatpush1.msra.mxu0 0.0
      %3472 = vmatprep.subr.mxu0 0.0
      %3473 = vmatpush1.msra.mxu0 0.0
      %3474 = vmatprep.subr.mxu0 0.0
      %3475 = vmatpush1.msra.mxu0 0.0
      %3476 = vmatprep.subr.mxu0 0.0
      %3477 = vmatpush1.msra.mxu0 0.0
      %3478 = vmatprep.subr.mxu0 0.0
      %3479 = vmatpush1.msra.mxu0 0.0
      %3480 = vmatprep.subr.mxu0 0.0
      %3481 = vmatpush1.msra.mxu0 0.0
      %3482 = vmatprep.subr.mxu0 0.0
      %3483 = vmatpush1.msra.mxu0 0.0
      %3484 = vmatprep.subr.mxu0 0.0
      %3485 = vmatpush1.msra.mxu0 0.0
      %3486 = vmatprep.subr.mxu0 0.0
      %3487 = vmatpush1.msra.mxu0 0.0
      %3488 = vmatprep.subr.mxu0 0.0
      %3489 = vmatpush1.msra.mxu0 0.0
      %3490 = vmatprep.subr.mxu0 0.0
      %3491 = vmatpush1.msra.mxu0 0.0
      %3492 = vmatprep.subr.mxu0 0.0
      %3493 = vmatpush1.msra.mxu0 0.0
      %3494 = vmatprep.subr.mxu0 0.0
      %3495 = vmatpush1.msra.mxu0 0.0
      %3496 = vmatprep.subr.mxu0 0.0
      %3497 = vmatpush1.msra.mxu0 0.0
      %3498 = vmatprep.subr.mxu0 0.0
      %3499 = vmatpush1.msra.mxu0 0.0
      %3500 = vmatprep.subr.mxu0 0.0
      %3501 = vmatpush1.msra.mxu0 0.0
      %3502 = vmatprep.subr.mxu0 0.0
      %3503 = vmatpush1.msra.mxu0 0.0
      %3504 = vmatprep.subr.mxu0 0.0
      %3505 = vmatpush1.msra.mxu0 0.0
      %3506 = vmatprep.subr.mxu0 0.0
      %3507 = vmatpush1.msra.mxu0 0.0
      %3508 = vmatprep.subr.mxu0 0.0
      %3509 = vmatpush1.msra.mxu0 0.0
      %3510 = vmatprep.subr.mxu0 0.0
      %3511 = vmatpush1.msra.mxu0 0.0
      %3512 = vmatprep.subr.mxu0 0.0
      %3513 = vmatpush1.msra.mxu0 0.0
      %3514 = vmatprep.subr.mxu0 0.0
      %3515 = vmatpush1.msra.mxu0 0.0
      %3516 = vmatprep.subr.mxu0 0.0
      %3517 = vmatpush1.msra.mxu0 0.0
      %3518 = vmatprep.subr.mxu0 0.0
      %3519 = vmatpush1.msra.mxu0 0.0
      %3520 = vmatprep.subr.mxu0 0.0
      %3521 = vmatpush1.msra.mxu0 0.0
      %3522 = vmatprep.subr.mxu0 0.0
      %3523 = vmatpush1.msra.mxu0 0.0
      %3524 = vmatprep.subr.mxu0 0.0
      %3525 = vmatpush1.msra.mxu0 0.0
      %3526 = vmatprep.subr.mxu0 0.0
      %3527 = vmatpush1.msra.mxu0 0.0
      %3528 = vmatprep.mubr.f32.mxu0 0.0
      %3529 = vmatmul.mubr.f32.gmra.mrb[0].mxu0 %v3458
      %v3530 = vpop.f32.mrb[0].mxu0
      %v3531 = vadd.f32 0.0, %v3530
      %v3532 = vpop.f32.mrb[0].mxu0
      %3533 = vdwg.mxu0
      %v3535 = vsel %vm3460, %v3454, 0
      %3537 = vmatprep.subr.mxu0 0.0
      %3538 = vmatpush1.msra.mxu0 %v3535
      %3539 = vmatprep.subr.mxu0 0.0
      %3540 = vmatpush1.msra.mxu0 0.0
      %3541 = vmatprep.subr.mxu0 0.0
      %3542 = vmatpush1.msra.mxu0 0.0
      %3543 = vmatprep.subr.mxu0 0.0
      %3544 = vmatpush1.msra.mxu0 0.0
      %3545 = vmatprep.subr.mxu0 0.0
      %3546 = vmatpush1.msra.mxu0 0.0
      %3547 = vmatprep.subr.mxu0 0.0
      %3548 = vmatpush1.msra.mxu0 0.0
      %3549 = vmatprep.subr.mxu0 0.0
      %3550 = vmatpush1.msra.mxu0 0.0
      %3551 = vmatprep.subr.mxu0 0.0
      %3552 = vmatpush1.msra.mxu0 0.0
      %3553 = vmatprep.subr.mxu0 0.0
      %3554 = vmatpush1.msra.mxu0 0.0
      %3555 = vmatprep.subr.mxu0 0.0
      %3556 = vmatpush1.msra.mxu0 0.0
      %3557 = vmatprep.subr.mxu0 0.0
      %3558 = vmatpush1.msra.mxu0 0.0
      %3559 = vmatprep.subr.mxu0 0.0
      %3560 = vmatpush1.msra.mxu0 0.0
      %3561 = vmatprep.subr.mxu0 0.0
      %3562 = vmatpush1.msra.mxu0 0.0
      %3563 = vmatprep.subr.mxu0 0.0
      %3564 = vmatpush1.msra.mxu0 0.0
      %3565 = vmatprep.subr.mxu0 0.0
      %3566 = vmatpush1.msra.mxu0 0.0
      %3567 = vmatprep.subr.mxu0 0.0
      %3568 = vmatpush1.msra.mxu0 0.0
      %3569 = vmatprep.subr.mxu0 0.0
      %3570 = vmatpush1.msra.mxu0 0.0
      %3571 = vmatprep.subr.mxu0 0.0
      %3572 = vmatpush1.msra.mxu0 0.0
      %3573 = vmatprep.subr.mxu0 0.0
      %3574 = vmatpush1.msra.mxu0 0.0
      %3575 = vmatprep.subr.mxu0 0.0
      %3576 = vmatpush1.msra.mxu0 0.0
      %3577 = vmatprep.subr.mxu0 0.0
      %3578 = vmatpush1.msra.mxu0 0.0
      %3579 = vmatprep.subr.mxu0 0.0
      %3580 = vmatpush1.msra.mxu0 0.0
      %3581 = vmatprep.subr.mxu0 0.0
      %3582 = vmatpush1.msra.mxu0 0.0
      %3583 = vmatprep.subr.mxu0 0.0
      %3584 = vmatpush1.msra.mxu0 0.0
      %3585 = vmatprep.subr.mxu0 0.0
      %3586 = vmatpush1.msra.mxu0 0.0
      %3587 = vmatprep.subr.mxu0 0.0
      %3588 = vmatpush1.msra.mxu0 0.0
      %3589 = vmatprep.subr.mxu0 0.0
      %3590 = vmatpush1.msra.mxu0 0.0
      %3591 = vmatprep.subr.mxu0 0.0
      %3592 = vmatpush1.msra.mxu0 0.0
      %3593 = vmatprep.subr.mxu0 0.0
      %3594 = vmatpush1.msra.mxu0 0.0
      %3595 = vmatprep.subr.mxu0 0.0
      %3596 = vmatpush1.msra.mxu0 0.0
      %3597 = vmatprep.subr.mxu0 0.0
      %3598 = vmatpush1.msra.mxu0 0.0
      %3599 = vmatprep.subr.mxu0 0.0
      %3600 = vmatpush1.msra.mxu0 0.0
      %3601 = vmatprep.mubr.f32.mxu0 0.0
      %3602 = vmatmul.mubr.f32.gmra.mrb[0].mxu0 %v3458
      %v3603 = vpop.f32.mrb[0].mxu0
      %v3604 = vadd.f32 0.0, %v3603
      %v3605 = vpop.f32.mrb[0].mxu0
      %3606 = vdwg.mxu0
      %v3608 = vsel %vm3460, %v3455, 0
      %3610 = vmatprep.subr.mxu0 0.0
      %3611 = vmatpush1.msra.mxu0 %v3608
      %3612 = vmatprep.subr.mxu0 0.0
      %3613 = vmatpush1.msra.mxu0 0.0
      %3614 = vmatprep.subr.mxu0 0.0
      %3615 = vmatpush1.msra.mxu0 0.0
      %3616 = vmatprep.subr.mxu0 0.0
      %3617 = vmatpush1.msra.mxu0 0.0
      %3618 = vmatprep.subr.mxu0 0.0
      %3619 = vmatpush1.msra.mxu0 0.0
      %3620 = vmatprep.subr.mxu0 0.0
      %3621 = vmatpush1.msra.mxu0 0.0
      %3622 = vmatprep.subr.mxu0 0.0
      %3623 = vmatpush1.msra.mxu0 0.0
      %3624 = vmatprep.subr.mxu0 0.0
      %3625 = vmatpush1.msra.mxu0 0.0
      %3626 = vmatprep.subr.mxu0 0.0
      %3627 = vmatpush1.msra.mxu0 0.0
      %3628 = vmatprep.subr.mxu0 0.0
      %3629 = vmatpush1.msra.mxu0 0.0
      %3630 = vmatprep.subr.mxu0 0.0
      %3631 = vmatpush1.msra.mxu0 0.0
      %3632 = vmatprep.subr.mxu0 0.0
      %3633 = vmatpush1.msra.mxu0 0.0
      %3634 = vmatprep.subr.mxu0 0.0
      %3635 = vmatpush1.msra.mxu0 0.0
      %3636 = vmatprep.subr.mxu0 0.0
      %3637 = vmatpush1.msra.mxu0 0.0
      %3638 = vmatprep.subr.mxu0 0.0
      %3639 = vmatpush1.msra.mxu0 0.0
      %3640 = vmatprep.subr.mxu0 0.0
      %3641 = vmatpush1.msra.mxu0 0.0
      %3642 = vmatprep.subr.mxu0 0.0
      %3643 = vmatpush1.msra.mxu0 0.0
      %3644 = vmatprep.subr.mxu0 0.0
      %3645 = vmatpush1.msra.mxu0 0.0
      %3646 = vmatprep.subr.mxu0 0.0
      %3647 = vmatpush1.msra.mxu0 0.0
      %3648 = vmatprep.subr.mxu0 0.0
      %3649 = vmatpush1.msra.mxu0 0.0
      %3650 = vmatprep.subr.mxu0 0.0
      %3651 = vmatpush1.msra.mxu0 0.0
      %3652 = vmatprep.subr.mxu0 0.0
      %3653 = vmatpush1.msra.mxu0 0.0
      %3654 = vmatprep.subr.mxu0 0.0
      %3655 = vmatpush1.msra.mxu0 0.0
      %3656 = vmatprep.subr.mxu0 0.0
      %3657 = vmatpush1.msra.mxu0 0.0
      %3658 = vmatprep.subr.mxu0 0.0
      %3659 = vmatpush1.msra.mxu0 0.0
      %3660 = vmatprep.subr.mxu0 0.0
      %3661 = vmatpush1.msra.mxu0 0.0
      %3662 = vmatprep.subr.mxu0 0.0
      %3663 = vmatpush1.msra.mxu0 0.0
      %3664 = vmatprep.subr.mxu0 0.0
      %3665 = vmatpush1.msra.mxu0 0.0
      %3666 = vmatprep.subr.mxu0 0.0
      %3667 = vmatpush1.msra.mxu0 0.0
      %3668 = vmatprep.subr.mxu0 0.0
      %3669 = vmatpush1.msra.mxu0 0.0
      %3670 = vmatprep.subr.mxu0 0.0
      %3671 = vmatpush1.msra.mxu0 0.0
      %3672 = vmatprep.subr.mxu0 0.0
      %3673 = vmatpush1.msra.mxu0 0.0
      %3674 = vmatprep.mubr.f32.mxu0 0.0
      %3675 = vmatmul.mubr.f32.gmra.mrb[0].mxu0 %v3458
      %v3676 = vpop.f32.mrb[0].mxu0
      %v3677 = vadd.f32 0.0, %v3676
      %v3678 = vpop.f32.mrb[0].mxu0
      %3679 = vdwg.mxu0
      %v3681 = vsel %vm3460, %v3456, 0
      %3683 = vmatprep.subr.mxu0 0.0
      %3684 = vmatpush1.msra.mxu0 %v3681
      %3685 = vmatprep.subr.mxu0 0.0
      %3686 = vmatpush1.msra.mxu0 0.0
      %3687 = vmatprep.subr.mxu0 0.0
      %3688 = vmatpush1.msra.mxu0 0.0
      %3689 = vmatprep.subr.mxu0 0.0
      %3690 = vmatpush1.msra.mxu0 0.0
      %3691 = vmatprep.subr.mxu0 0.0
      %3692 = vmatpush1.msra.mxu0 0.0
      %3693 = vmatprep.subr.mxu0 0.0
      %3694 = vmatpush1.msra.mxu0 0.0
      %3695 = vmatprep.subr.mxu0 0.0
      %3696 = vmatpush1.msra.mxu0 0.0
      %3697 = vmatprep.subr.mxu0 0.0
      %3698 = vmatpush1.msra.mxu0 0.0
      %3699 = vmatprep.subr.mxu0 0.0
      %3700 = vmatpush1.msra.mxu0 0.0
      %3701 = vmatprep.subr.mxu0 0.0
      %3702 = vmatpush1.msra.mxu0 0.0
      %3703 = vmatprep.subr.mxu0 0.0
      %3704 = vmatpush1.msra.mxu0 0.0
      %3705 = vmatprep.subr.mxu0 0.0
      %3706 = vmatpush1.msra.mxu0 0.0
      %3707 = vmatprep.subr.mxu0 0.0
      %3708 = vmatpush1.msra.mxu0 0.0
      %3709 = vmatprep.subr.mxu0 0.0
      %3710 = vmatpush1.msra.mxu0 0.0
      %3711 = vmatprep.subr.mxu0 0.0
      %3712 = vmatpush1.msra.mxu0 0.0
      %3713 = vmatprep.subr.mxu0 0.0
      %3714 = vmatpush1.msra.mxu0 0.0
      %3715 = vmatprep.subr.mxu0 0.0
      %3716 = vmatpush1.msra.mxu0 0.0
      %3717 = vmatprep.subr.mxu0 0.0
      %3718 = vmatpush1.msra.mxu0 0.0
      %3719 = vmatprep.subr.mxu0 0.0
      %3720 = vmatpush1.msra.mxu0 0.0
      %3721 = vmatprep.subr.mxu0 0.0
      %3722 = vmatpush1.msra.mxu0 0.0
      %3723 = vmatprep.subr.mxu0 0.0
      %3724 = vmatpush1.msra.mxu0 0.0
      %3725 = vmatprep.subr.mxu0 0.0
      %3726 = vmatpush1.msra.mxu0 0.0
      %3727 = vmatprep.subr.mxu0 0.0
      %3728 = vmatpush1.msra.mxu0 0.0
      %3729 = vmatprep.subr.mxu0 0.0
      %3730 = vmatpush1.msra.mxu0 0.0
      %3731 = vmatprep.subr.mxu0 0.0
      %3732 = vmatpush1.msra.mxu0 0.0
      %3733 = vmatprep.subr.mxu0 0.0
      %3734 = vmatpush1.msra.mxu0 0.0
      %3735 = vmatprep.subr.mxu0 0.0
      %3736 = vmatpush1.msra.mxu0 0.0
      %3737 = vmatprep.subr.mxu0 0.0
      %3738 = vmatpush1.msra.mxu0 0.0
      %3739 = vmatprep.subr.mxu0 0.0
      %3740 = vmatpush1.msra.mxu0 0.0
      %3741 = vmatprep.subr.mxu0 0.0
      %3742 = vmatpush1.msra.mxu0 0.0
      %3743 = vmatprep.subr.mxu0 0.0
      %3744 = vmatpush1.msra.mxu0 0.0
      %3745 = vmatprep.subr.mxu0 0.0
      %3746 = vmatpush1.msra.mxu0 0.0
      %3747 = vmatprep.mubr.f32.mxu0 0.0
      %3748 = vmatmul.mubr.f32.gmra.mrb[0].mxu0 %v3458
      %v3749 = vpop.f32.mrb[0].mxu0
      %v3750 = vadd.f32 0.0, %v3749
      %v3751 = vpop.f32.mrb[0].mxu0
      %3752 = vdwg.mxu0
      %v3753 = vsel %vm3457, %v1836, 0
      %3755 = vmatprep.subr.mxu0 0.0
      %3756 = vmatpush1.msra.mxu0 %v3462
      %3757 = vmatprep.subr.mxu0 0.0
      %3758 = vmatpush1.msra.mxu0 0.0
      %3759 = vmatprep.subr.mxu0 0.0
      %3760 = vmatpush1.msra.mxu0 0.0
      %3761 = vmatprep.subr.mxu0 0.0
      %3762 = vmatpush1.msra.mxu0 0.0
      %3763 = vmatprep.subr.mxu0 0.0
      %3764 = vmatpush1.msra.mxu0 0.0
      %3765 = vmatprep.subr.mxu0 0.0
      %3766 = vmatpush1.msra.mxu0 0.0
      %3767 = vmatprep.subr.mxu0 0.0
      %3768 = vmatpush1.msra.mxu0 0.0
      %3769 = vmatprep.subr.mxu0 0.0
      %3770 = vmatpush1.msra.mxu0 0.0
      %3771 = vmatprep.subr.mxu0 0.0
      %3772 = vmatpush1.msra.mxu0 0.0
      %3773 = vmatprep.subr.mxu0 0.0
      %3774 = vmatpush1.msra.mxu0 0.0
      %3775 = vmatprep.subr.mxu0 0.0
      %3776 = vmatpush1.msra.mxu0 0.0
      %3777 = vmatprep.subr.mxu0 0.0
      %3778 = vmatpush1.msra.mxu0 0.0
      %3779 = vmatprep.subr.mxu0 0.0
      %3780 = vmatpush1.msra.mxu0 0.0
      %3781 = vmatprep.subr.mxu0 0.0
      %3782 = vmatpush1.msra.mxu0 0.0
      %3783 = vmatprep.subr.mxu0 0.0
      %3784 = vmatpush1.msra.mxu0 0.0
      %3785 = vmatprep.subr.mxu0 0.0
      %3786 = vmatpush1.msra.mxu0 0.0
      %3787 = vmatprep.subr.mxu0 0.0
      %3788 = vmatpush1.msra.mxu0 0.0
      %3789 = vmatprep.subr.mxu0 0.0
      %3790 = vmatpush1.msra.mxu0 0.0
      %3791 = vmatprep.subr.mxu0 0.0
      %3792 = vmatpush1.msra.mxu0 0.0
      %3793 = vmatprep.subr.mxu0 0.0
      %3794 = vmatpush1.msra.mxu0 0.0
      %3795 = vmatprep.subr.mxu0 0.0
      %3796 = vmatpush1.msra.mxu0 0.0
      %3797 = vmatprep.subr.mxu0 0.0
      %3798 = vmatpush1.msra.mxu0 0.0
      %3799 = vmatprep.subr.mxu0 0.0
      %3800 = vmatpush1.msra.mxu0 0.0
      %3801 = vmatprep.subr.mxu0 0.0
      %3802 = vmatpush1.msra.mxu0 0.0
      %3803 = vmatprep.subr.mxu0 0.0
      %3804 = vmatpush1.msra.mxu0 0.0
      %3805 = vmatprep.subr.mxu0 0.0
      %3806 = vmatpush1.msra.mxu0 0.0
      %3807 = vmatprep.subr.mxu0 0.0
      %3808 = vmatpush1.msra.mxu0 0.0
      %3809 = vmatprep.subr.mxu0 0.0
      %3810 = vmatpush1.msra.mxu0 0.0
      %3811 = vmatprep.subr.mxu0 0.0
      %3812 = vmatpush1.msra.mxu0 0.0
      %3813 = vmatprep.subr.mxu0 0.0
      %3814 = vmatpush1.msra.mxu0 0.0
      %3815 = vmatprep.subr.mxu0 0.0
      %3816 = vmatpush1.msra.mxu0 0.0
      %3817 = vmatprep.subr.mxu0 0.0
      %3818 = vmatpush1.msra.mxu0 0.0
      %3819 = vmatprep.mubr.f32.mxu0 0.0
      %3820 = vmatmul.mubr.f32.gmra.mrb[0].mxu0 %v3753
      %v3821 = vpop.f32.mrb[0].mxu0
      %v3822 = vadd.f32 0.0, %v3821
      %v3823 = vpop.f32.mrb[0].mxu0
      %3824 = vdwg.mxu0
      %3825 = vmatprep.subr.mxu0 0.0
      %3826 = vmatpush1.msra.mxu0 %v3535
      %3827 = vmatprep.subr.mxu0 0.0
      %3828 = vmatpush1.msra.mxu0 0.0
      %3829 = vmatprep.subr.mxu0 0.0
      %3830 = vmatpush1.msra.mxu0 0.0
      %3831 = vmatprep.subr.mxu0 0.0
      %3832 = vmatpush1.msra.mxu0 0.0
      %3833 = vmatprep.subr.mxu0 0.0
      %3834 = vmatpush1.msra.mxu0 0.0
      %3835 = vmatprep.subr.mxu0 0.0
      %3836 = vmatpush1.msra.mxu0 0.0
      %3837 = vmatprep.subr.mxu0 0.0
      %3838 = vmatpush1.msra.mxu0 0.0
      %3839 = vmatprep.subr.mxu0 0.0
      %3840 = vmatpush1.msra.mxu0 0.0
      %3841 = vmatprep.subr.mxu0 0.0
      %3842 = vmatpush1.msra.mxu0 0.0
      %3843 = vmatprep.subr.mxu0 0.0
      %3844 = vmatpush1.msra.mxu0 0.0
      %3845 = vmatprep.subr.mxu0 0.0
      %3846 = vmatpush1.msra.mxu0 0.0
      %3847 = vmatprep.subr.mxu0 0.0
      %3848 = vmatpush1.msra.mxu0 0.0
      %3849 = vmatprep.subr.mxu0 0.0
      %3850 = vmatpush1.msra.mxu0 0.0
      %3851 = vmatprep.subr.mxu0 0.0
      %3852 = vmatpush1.msra.mxu0 0.0
      %3853 = vmatprep.subr.mxu0 0.0
      %3854 = vmatpush1.msra.mxu0 0.0
      %3855 = vmatprep.subr.mxu0 0.0
      %3856 = vmatpush1.msra.mxu0 0.0
      %3857 = vmatprep.subr.mxu0 0.0
      %3858 = vmatpush1.msra.mxu0 0.0
      %3859 = vmatprep.subr.mxu0 0.0
      %3860 = vmatpush1.msra.mxu0 0.0
      %3861 = vmatprep.subr.mxu0 0.0
      %3862 = vmatpush1.msra.mxu0 0.0
      %3863 = vmatprep.subr.mxu0 0.0
      %3864 = vmatpush1.msra.mxu0 0.0
      %3865 = vmatprep.subr.mxu0 0.0
      %3866 = vmatpush1.msra.mxu0 0.0
      %3867 = vmatprep.subr.mxu0 0.0
      %3868 = vmatpush1.msra.mxu0 0.0
      %3869 = vmatprep.subr.mxu0 0.0
      %3870 = vmatpush1.msra.mxu0 0.0
      %3871 = vmatprep.subr.mxu0 0.0
      %3872 = vmatpush1.msra.mxu0 0.0
      %3873 = vmatprep.subr.mxu0 0.0
      %3874 = vmatpush1.msra.mxu0 0.0
      %3875 = vmatprep.subr.mxu0 0.0
      %3876 = vmatpush1.msra.mxu0 0.0
      %3877 = vmatprep.subr.mxu0 0.0
      %3878 = vmatpush1.msra.mxu0 0.0
      %3879 = vmatprep.subr.mxu0 0.0
      %3880 = vmatpush1.msra.mxu0 0.0
      %3881 = vmatprep.subr.mxu0 0.0
      %3882 = vmatpush1.msra.mxu0 0.0
      %3883 = vmatprep.subr.mxu0 0.0
      %3884 = vmatpush1.msra.mxu0 0.0
      %3885 = vmatprep.subr.mxu0 0.0
      %3886 = vmatpush1.msra.mxu0 0.0
      %3887 = vmatprep.subr.mxu0 0.0
      %3888 = vmatpush1.msra.mxu0 0.0
      %3889 = vmatprep.mubr.f32.mxu0 0.0
      %3890 = vmatmul.mubr.f32.gmra.mrb[0].mxu0 %v3753
      %v3891 = vpop.f32.mrb[0].mxu0
      %v3892 = vadd.f32 0.0, %v3891
      %v3893 = vpop.f32.mrb[0].mxu0
      %3894 = vdwg.mxu0
      %3895 = vmatprep.subr.mxu0 0.0
      %3896 = vmatpush1.msra.mxu0 %v3608
      %3897 = vmatprep.subr.mxu0 0.0
      %3898 = vmatpush1.msra.mxu0 0.0
      %3899 = vmatprep.subr.mxu0 0.0
      %3900 = vmatpush1.msra.mxu0 0.0
      %3901 = vmatprep.subr.mxu0 0.0
      %3902 = vmatpush1.msra.mxu0 0.0
      %3903 = vmatprep.subr.mxu0 0.0
      %3904 = vmatpush1.msra.mxu0 0.0
      %3905 = vmatprep.subr.mxu0 0.0
      %3906 = vmatpush1.msra.mxu0 0.0
      %3907 = vmatprep.subr.mxu0 0.0
      %3908 = vmatpush1.msra.mxu0 0.0
      %3909 = vmatprep.subr.mxu0 0.0
      %3910 = vmatpush1.msra.mxu0 0.0
      %3911 = vmatprep.subr.mxu0 0.0
      %3912 = vmatpush1.msra.mxu0 0.0
      %3913 = vmatprep.subr.mxu0 0.0
      %3914 = vmatpush1.msra.mxu0 0.0
      %3915 = vmatprep.subr.mxu0 0.0
      %3916 = vmatpush1.msra.mxu0 0.0
      %3917 = vmatprep.subr.mxu0 0.0
      %3918 = vmatpush1.msra.mxu0 0.0
      %3919 = vmatprep.subr.mxu0 0.0
      %3920 = vmatpush1.msra.mxu0 0.0
      %3921 = vmatprep.subr.mxu0 0.0
      %3922 = vmatpush1.msra.mxu0 0.0
      %3923 = vmatprep.subr.mxu0 0.0
      %3924 = vmatpush1.msra.mxu0 0.0
      %3925 = vmatprep.subr.mxu0 0.0
      %3926 = vmatpush1.msra.mxu0 0.0
      %3927 = vmatprep.subr.mxu0 0.0
      %3928 = vmatpush1.msra.mxu0 0.0
      %3929 = vmatprep.subr.mxu0 0.0
      %3930 = vmatpush1.msra.mxu0 0.0
      %3931 = vmatprep.subr.mxu0 0.0
      %3932 = vmatpush1.msra.mxu0 0.0
      %3933 = vmatprep.subr.mxu0 0.0
      %3934 = vmatpush1.msra.mxu0 0.0
      %3935 = vmatprep.subr.mxu0 0.0
      %3936 = vmatpush1.msra.mxu0 0.0
      %3937 = vmatprep.subr.mxu0 0.0
      %3938 = vmatpush1.msra.mxu0 0.0
      %3939 = vmatprep.subr.mxu0 0.0
      %3940 = vmatpush1.msra.mxu0 0.0
      %3941 = vmatprep.subr.mxu0 0.0
      %3942 = vmatpush1.msra.mxu0 0.0
      %3943 = vmatprep.subr.mxu0 0.0
      %3944 = vmatpush1.msra.mxu0 0.0
      %3945 = vmatprep.subr.mxu0 0.0
      %3946 = vmatpush1.msra.mxu0 0.0
      %3947 = vmatprep.subr.mxu0 0.0
      %3948 = vmatpush1.msra.mxu0 0.0
      %3949 = vmatprep.subr.mxu0 0.0
      %3950 = vmatpush1.msra.mxu0 0.0
      %3951 = vmatprep.subr.mxu0 0.0
      %3952 = vmatpush1.msra.mxu0 0.0
      %3953 = vmatprep.subr.mxu0 0.0
      %3954 = vmatpush1.msra.mxu0 0.0
      %3955 = vmatprep.subr.mxu0 0.0
      %3956 = vmatpush1.msra.mxu0 0.0
      %3957 = vmatprep.subr.mxu0 0.0
      %3958 = vmatpush1.msra.mxu0 0.0
      %3959 = vmatprep.mubr.f32.mxu0 0.0
      %3960 = vmatmul.mubr.f32.gmra.mrb[0].mxu0 %v3753
      %v3961 = vpop.f32.mrb[0].mxu0
      %v3962 = vadd.f32 0.0, %v3961
      %v3963 = vpop.f32.mrb[0].mxu0
      %3964 = vdwg.mxu0
      %3965 = vmatprep.subr.mxu0 0.0
      %3966 = vmatpush1.msra.mxu0 %v3681
      %3967 = vmatprep.subr.mxu0 0.0
      %3968 = vmatpush1.msra.mxu0 0.0
      %3969 = vmatprep.subr.mxu0 0.0
      %3970 = vmatpush1.msra.mxu0 0.0
      %3971 = vmatprep.subr.mxu0 0.0
      %3972 = vmatpush1.msra.mxu0 0.0
      %3973 = vmatprep.subr.mxu0 0.0
      %3974 = vmatpush1.msra.mxu0 0.0
      %3975 = vmatprep.subr.mxu0 0.0
      %3976 = vmatpush1.msra.mxu0 0.0
      %3977 = vmatprep.subr.mxu0 0.0
      %3978 = vmatpush1.msra.mxu0 0.0
      %3979 = vmatprep.subr.mxu0 0.0
      %3980 = vmatpush1.msra.mxu0 0.0
      %3981 = vmatprep.subr.mxu0 0.0
      %3982 = vmatpush1.msra.mxu0 0.0
      %3983 = vmatprep.subr.mxu0 0.0
      %3984 = vmatpush1.msra.mxu0 0.0
      %3985 = vmatprep.subr.mxu0 0.0
      %3986 = vmatpush1.msra.mxu0 0.0
      %3987 = vmatprep.subr.mxu0 0.0
      %3988 = vmatpush1.msra.mxu0 0.0
      %3989 = vmatprep.subr.mxu0 0.0
      %3990 = vmatpush1.msra.mxu0 0.0
      %3991 = vmatprep.subr.mxu0 0.0
      %3992 = vmatpush1.msra.mxu0 0.0
      %3993 = vmatprep.subr.mxu0 0.0
      %3994 = vmatpush1.msra.mxu0 0.0
      %3995 = vmatprep.subr.mxu0 0.0
      %3996 = vmatpush1.msra.mxu0 0.0
      %3997 = vmatprep.subr.mxu0 0.0
      %3998 = vmatpush1.msra.mxu0 0.0
      %3999 = vmatprep.subr.mxu0 0.0
      %4000 = vmatpush1.msra.mxu0 0.0
      %4001 = vmatprep.subr.mxu0 0.0
      %4002 = vmatpush1.msra.mxu0 0.0
      %4003 = vmatprep.subr.mxu0 0.0
      %4004 = vmatpush1.msra.mxu0 0.0
      %4005 = vmatprep.subr.mxu0 0.0
      %4006 = vmatpush1.msra.mxu0 0.0
      %4007 = vmatprep.subr.mxu0 0.0
      %4008 = vmatpush1.msra.mxu0 0.0
      %4009 = vmatprep.subr.mxu0 0.0
      %4010 = vmatpush1.msra.mxu0 0.0
      %4011 = vmatprep.subr.mxu0 0.0
      %4012 = vmatpush1.msra.mxu0 0.0
      %4013 = vmatprep.subr.mxu0 0.0
      %4014 = vmatpush1.msra.mxu0 0.0
      %4015 = vmatprep.subr.mxu0 0.0
      %4016 = vmatpush1.msra.mxu0 0.0
      %4017 = vmatprep.subr.mxu0 0.0
      %4018 = vmatpush1.msra.mxu0 0.0
      %4019 = vmatprep.subr.mxu0 0.0
      %4020 = vmatpush1.msra.mxu0 0.0
      %4021 = vmatprep.subr.mxu0 0.0
      %4022 = vmatpush1.msra.mxu0 0.0
      %4023 = vmatprep.subr.mxu0 0.0
      %4024 = vmatpush1.msra.mxu0 0.0
      %4025 = vmatprep.subr.mxu0 0.0
      %4026 = vmatpush1.msra.mxu0 0.0
      %4027 = vmatprep.subr.mxu0 0.0
      %4028 = vmatpush1.msra.mxu0 0.0
      %4029 = vmatprep.mubr.f32.mxu0 0.0
      %4030 = vmatmul.mubr.f32.gmra.mrb[0].mxu0 %v3753
      %v4031 = vpop.f32.mrb[0].mxu0
      %v4032 = vadd.f32 0.0, %v4031
      %v4033 = vpop.f32.mrb[0].mxu0
      %4034 = vdwg.mxu0
      %v4035 = vsel %vm3457, %v2402, 0
      %4037 = vmatprep.subr.mxu0 0.0
      %4038 = vmatpush1.msra.mxu0 %v3462
      %4039 = vmatprep.subr.mxu0 0.0
      %4040 = vmatpush1.msra.mxu0 0.0
      %4041 = vmatprep.subr.mxu0 0.0
      %4042 = vmatpush1.msra.mxu0 0.0
      %4043 = vmatprep.subr.mxu0 0.0
      %4044 = vmatpush1.msra.mxu0 0.0
      %4045 = vmatprep.subr.mxu0 0.0
      %4046 = vmatpush1.msra.mxu0 0.0
      %4047 = vmatprep.subr.mxu0 0.0
      %4048 = vmatpush1.msra.mxu0 0.0
      %4049 = vmatprep.subr.mxu0 0.0
      %4050 = vmatpush1.msra.mxu0 0.0
      %4051 = vmatprep.subr.mxu0 0.0
      %4052 = vmatpush1.msra.mxu0 0.0
      %4053 = vmatprep.subr.mxu0 0.0
      %4054 = vmatpush1.msra.mxu0 0.0
      %4055 = vmatprep.subr.mxu0 0.0
      %4056 = vmatpush1.msra.mxu0 0.0
      %4057 = vmatprep.subr.mxu0 0.0
      %4058 = vmatpush1.msra.mxu0 0.0
      %4059 = vmatprep.subr.mxu0 0.0
      %4060 = vmatpush1.msra.mxu0 0.0
      %4061 = vmatprep.subr.mxu0 0.0
      %4062 = vmatpush1.msra.mxu0 0.0
      %4063 = vmatprep.subr.mxu0 0.0
      %4064 = vmatpush1.msra.mxu0 0.0
      %4065 = vmatprep.subr.mxu0 0.0
      %4066 = vmatpush1.msra.mxu0 0.0
      %4067 = vmatprep.subr.mxu0 0.0
      %4068 = vmatpush1.msra.mxu0 0.0
      %4069 = vmatprep.subr.mxu0 0.0
      %4070 = vmatpush1.msra.mxu0 0.0
      %4071 = vmatprep.subr.mxu0 0.0
      %4072 = vmatpush1.msra.mxu0 0.0
      %4073 = vmatprep.subr.mxu0 0.0
      %4074 = vmatpush1.msra.mxu0 0.0
      %4075 = vmatprep.subr.mxu0 0.0
      %4076 = vmatpush1.msra.mxu0 0.0
      %4077 = vmatprep.subr.mxu0 0.0
      %4078 = vmatpush1.msra.mxu0 0.0
      %4079 = vmatprep.subr.mxu0 0.0
      %4080 = vmatpush1.msra.mxu0 0.0
      %4081 = vmatprep.subr.mxu0 0.0
      %4082 = vmatpush1.msra.mxu0 0.0
      %4083 = vmatprep.subr.mxu0 0.0
      %4084 = vmatpush1.msra.mxu0 0.0
      %4085 = vmatprep.subr.mxu0 0.0
      %4086 = vmatpush1.msra.mxu0 0.0
      %4087 = vmatprep.subr.mxu0 0.0
      %4088 = vmatpush1.msra.mxu0 0.0
      %4089 = vmatprep.subr.mxu0 0.0
      %4090 = vmatpush1.msra.mxu0 0.0
      %4091 = vmatprep.subr.mxu0 0.0
      %4092 = vmatpush1.msra.mxu0 0.0
      %4093 = vmatprep.subr.mxu0 0.0
      %4094 = vmatpush1.msra.mxu0 0.0
      %4095 = vmatprep.subr.mxu0 0.0
      %4096 = vmatpush1.msra.mxu0 0.0
      %4097 = vmatprep.subr.mxu0 0.0
      %4098 = vmatpush1.msra.mxu0 0.0
      %4099 = vmatprep.subr.mxu0 0.0
      %4100 = vmatpush1.msra.mxu0 0.0
      %4101 = vmatprep.mubr.f32.mxu0 0.0
      %4102 = vmatmul.mubr.f32.gmra.mrb[0].mxu0 %v4035
      %v4103 = vpop.f32.mrb[0].mxu0
      %v4104 = vadd.f32 0.0, %v4103
      %v4105 = vpop.f32.mrb[0].mxu0
      %4106 = vdwg.mxu0
      %4107 = vmatprep.subr.mxu0 0.0
      %4108 = vmatpush1.msra.mxu0 %v3535
      %4109 = vmatprep.subr.mxu0 0.0
      %4110 = vmatpush1.msra.mxu0 0.0
      %4111 = vmatprep.subr.mxu0 0.0
      %4112 = vmatpush1.msra.mxu0 0.0
      %4113 = vmatprep.subr.mxu0 0.0
      %4114 = vmatpush1.msra.mxu0 0.0
      %4115 = vmatprep.subr.mxu0 0.0
      %4116 = vmatpush1.msra.mxu0 0.0
      %4117 = vmatprep.subr.mxu0 0.0
      %4118 = vmatpush1.msra.mxu0 0.0
      %4119 = vmatprep.subr.mxu0 0.0
      %4120 = vmatpush1.msra.mxu0 0.0
      %4121 = vmatprep.subr.mxu0 0.0
      %4122 = vmatpush1.msra.mxu0 0.0
      %4123 = vmatprep.subr.mxu0 0.0
      %4124 = vmatpush1.msra.mxu0 0.0
      %4125 = vmatprep.subr.mxu0 0.0
      %4126 = vmatpush1.msra.mxu0 0.0
      %4127 = vmatprep.subr.mxu0 0.0
      %4128 = vmatpush1.msra.mxu0 0.0
      %4129 = vmatprep.subr.mxu0 0.0
      %4130 = vmatpush1.msra.mxu0 0.0
      %4131 = vmatprep.subr.mxu0 0.0
      %4132 = vmatpush1.msra.mxu0 0.0
      %4133 = vmatprep.subr.mxu0 0.0
      %4134 = vmatpush1.msra.mxu0 0.0
      %4135 = vmatprep.subr.mxu0 0.0
      %4136 = vmatpush1.msra.mxu0 0.0
      %4137 = vmatprep.subr.mxu0 0.0
      %4138 = vmatpush1.msra.mxu0 0.0
      %4139 = vmatprep.subr.mxu0 0.0
      %4140 = vmatpush1.msra.mxu0 0.0
      %4141 = vmatprep.subr.mxu0 0.0
      %4142 = vmatpush1.msra.mxu0 0.0
      %4143 = vmatprep.subr.mxu0 0.0
      %4144 = vmatpush1.msra.mxu0 0.0
      %4145 = vmatprep.subr.mxu0 0.0
      %4146 = vmatpush1.msra.mxu0 0.0
      %4147 = vmatprep.subr.mxu0 0.0
      %4148 = vmatpush1.msra.mxu0 0.0
      %4149 = vmatprep.subr.mxu0 0.0
      %4150 = vmatpush1.msra.mxu0 0.0
      %4151 = vmatprep.subr.mxu0 0.0
      %4152 = vmatpush1.msra.mxu0 0.0
      %4153 = vmatprep.subr.mxu0 0.0
      %4154 = vmatpush1.msra.mxu0 0.0
      %4155 = vmatprep.subr.mxu0 0.0
      %4156 = vmatpush1.msra.mxu0 0.0
      %4157 = vmatprep.subr.mxu0 0.0
      %4158 = vmatpush1.msra.mxu0 0.0
      %4159 = vmatprep.subr.mxu0 0.0
      %4160 = vmatpush1.msra.mxu0 0.0
      %4161 = vmatprep.subr.mxu0 0.0
      %4162 = vmatpush1.msra.mxu0 0.0
      %4163 = vmatprep.subr.mxu0 0.0
      %4164 = vmatpush1.msra.mxu0 0.0
      %4165 = vmatprep.subr.mxu0 0.0
      %4166 = vmatpush1.msra.mxu0 0.0
      %4167 = vmatprep.subr.mxu0 0.0
      %4168 = vmatpush1.msra.mxu0 0.0
      %4169 = vmatprep.subr.mxu0 0.0
      %4170 = vmatpush1.msra.mxu0 0.0
      %4171 = vmatprep.mubr.f32.mxu0 0.0
      %4172 = vmatmul.mubr.f32.gmra.mrb[0].mxu0 %v4035
      %v4173 = vpop.f32.mrb[0].mxu0
      %v4174 = vadd.f32 0.0, %v4173
      %v4175 = vpop.f32.mrb[0].mxu0
      %4176 = vdwg.mxu0
      %4177 = vmatprep.subr.mxu0 0.0
      %4178 = vmatpush1.msra.mxu0 %v3608
      %4179 = vmatprep.subr.mxu0 0.0
      %4180 = vmatpush1.msra.mxu0 0.0
      %4181 = vmatprep.subr.mxu0 0.0
      %4182 = vmatpush1.msra.mxu0 0.0
      %4183 = vmatprep.subr.mxu0 0.0
      %4184 = vmatpush1.msra.mxu0 0.0
      %4185 = vmatprep.subr.mxu0 0.0
      %4186 = vmatpush1.msra.mxu0 0.0
      %4187 = vmatprep.subr.mxu0 0.0
      %4188 = vmatpush1.msra.mxu0 0.0
      %4189 = vmatprep.subr.mxu0 0.0
      %4190 = vmatpush1.msra.mxu0 0.0
      %4191 = vmatprep.subr.mxu0 0.0
      %4192 = vmatpush1.msra.mxu0 0.0
      %4193 = vmatprep.subr.mxu0 0.0
      %4194 = vmatpush1.msra.mxu0 0.0
      %4195 = vmatprep.subr.mxu0 0.0
      %4196 = vmatpush1.msra.mxu0 0.0
      %4197 = vmatprep.subr.mxu0 0.0
      %4198 = vmatpush1.msra.mxu0 0.0
      %4199 = vmatprep.subr.mxu0 0.0
      %4200 = vmatpush1.msra.mxu0 0.0
      %4201 = vmatprep.subr.mxu0 0.0
      %4202 = vmatpush1.msra.mxu0 0.0
      %4203 = vmatprep.subr.mxu0 0.0
      %4204 = vmatpush1.msra.mxu0 0.0
      %4205 = vmatprep.subr.mxu0 0.0
      %4206 = vmatpush1.msra.mxu0 0.0
      %4207 = vmatprep.subr.mxu0 0.0
      %4208 = vmatpush1.msra.mxu0 0.0
      %4209 = vmatprep.subr.mxu0 0.0
      %4210 = vmatpush1.msra.mxu0 0.0
      %4211 = vmatprep.subr.mxu0 0.0
      %4212 = vmatpush1.msra.mxu0 0.0
      %4213 = vmatprep.subr.mxu0 0.0
      %4214 = vmatpush1.msra.mxu0 0.0
      %4215 = vmatprep.subr.mxu0 0.0
      %4216 = vmatpush1.msra.mxu0 0.0
      %4217 = vmatprep.subr.mxu0 0.0
      %4218 = vmatpush1.msra.mxu0 0.0
      %4219 = vmatprep.subr.mxu0 0.0
      %4220 = vmatpush1.msra.mxu0 0.0
      %4221 = vmatprep.subr.mxu0 0.0
      %4222 = vmatpush1.msra.mxu0 0.0
      %4223 = vmatprep.subr.mxu0 0.0
      %4224 = vmatpush1.msra.mxu0 0.0
      %4225 = vmatprep.subr.mxu0 0.0
      %4226 = vmatpush1.msra.mxu0 0.0
      %4227 = vmatprep.subr.mxu0 0.0
      %4228 = vmatpush1.msra.mxu0 0.0
      %4229 = vmatprep.subr.mxu0 0.0
      %4230 = vmatpush1.msra.mxu0 0.0
      %4231 = vmatprep.subr.mxu0 0.0
      %4232 = vmatpush1.msra.mxu0 0.0
      %4233 = vmatprep.subr.mxu0 0.0
      %4234 = vmatpush1.msra.mxu0 0.0
      %4235 = vmatprep.subr.mxu0 0.0
      %4236 = vmatpush1.msra.mxu0 0.0
      %4237 = vmatprep.subr.mxu0 0.0
      %4238 = vmatpush1.msra.mxu0 0.0
      %4239 = vmatprep.subr.mxu0 0.0
      %4240 = vmatpush1.msra.mxu0 0.0
      %4241 = vmatprep.mubr.f32.mxu0 0.0
      %4242 = vmatmul.mubr.f32.gmra.mrb[0].mxu0 %v4035
      %v4243 = vpop.f32.mrb[0].mxu0
      %v4244 = vadd.f32 0.0, %v4243
      %v4245 = vpop.f32.mrb[0].mxu0
      %4246 = vdwg.mxu0
      %4247 = vmatprep.subr.mxu0 0.0
      %4248 = vmatpush1.msra.mxu0 %v3681
      %4249 = vmatprep.subr.mxu0 0.0
      %4250 = vmatpush1.msra.mxu0 0.0
      %4251 = vmatprep.subr.mxu0 0.0
      %4252 = vmatpush1.msra.mxu0 0.0
      %4253 = vmatprep.subr.mxu0 0.0
      %4254 = vmatpush1.msra.mxu0 0.0
      %4255 = vmatprep.subr.mxu0 0.0
      %4256 = vmatpush1.msra.mxu0 0.0
      %4257 = vmatprep.subr.mxu0 0.0
      %4258 = vmatpush1.msra.mxu0 0.0
      %4259 = vmatprep.subr.mxu0 0.0
      %4260 = vmatpush1.msra.mxu0 0.0
      %4261 = vmatprep.subr.mxu0 0.0
      %4262 = vmatpush1.msra.mxu0 0.0
      %4263 = vmatprep.subr.mxu0 0.0
      %4264 = vmatpush1.msra.mxu0 0.0
      %4265 = vmatprep.subr.mxu0 0.0
      %4266 = vmatpush1.msra.mxu0 0.0
      %4267 = vmatprep.subr.mxu0 0.0
      %4268 = vmatpush1.msra.mxu0 0.0
      %4269 = vmatprep.subr.mxu0 0.0
      %4270 = vmatpush1.msra.mxu0 0.0
      %4271 = vmatprep.subr.mxu0 0.0
      %4272 = vmatpush1.msra.mxu0 0.0
      %4273 = vmatprep.subr.mxu0 0.0
      %4274 = vmatpush1.msra.mxu0 0.0
      %4275 = vmatprep.subr.mxu0 0.0
      %4276 = vmatpush1.msra.mxu0 0.0
      %4277 = vmatprep.subr.mxu0 0.0
      %4278 = vmatpush1.msra.mxu0 0.0
      %4279 = vmatprep.subr.mxu0 0.0
      %4280 = vmatpush1.msra.mxu0 0.0
      %4281 = vmatprep.subr.mxu0 0.0
      %4282 = vmatpush1.msra.mxu0 0.0
      %4283 = vmatprep.subr.mxu0 0.0
      %4284 = vmatpush1.msra.mxu0 0.0
      %4285 = vmatprep.subr.mxu0 0.0
      %4286 = vmatpush1.msra.mxu0 0.0
      %4287 = vmatprep.subr.mxu0 0.0
      %4288 = vmatpush1.msra.mxu0 0.0
      %4289 = vmatprep.subr.mxu0 0.0
      %4290 = vmatpush1.msra.mxu0 0.0
      %4291 = vmatprep.subr.mxu0 0.0
      %4292 = vmatpush1.msra.mxu0 0.0
      %4293 = vmatprep.subr.mxu0 0.0
      %4294 = vmatpush1.msra.mxu0 0.0
      %4295 = vmatprep.subr.mxu0 0.0
      %4296 = vmatpush1.msra.mxu0 0.0
      %4297 = vmatprep.subr.mxu0 0.0
      %4298 = vmatpush1.msra.mxu0 0.0
      %4299 = vmatprep.subr.mxu0 0.0
      %4300 = vmatpush1.msra.mxu0 0.0
      %4301 = vmatprep.subr.mxu0 0.0
      %4302 = vmatpush1.msra.mxu0 0.0
      %4303 = vmatprep.subr.mxu0 0.0
      %4304 = vmatpush1.msra.mxu0 0.0
      %4305 = vmatprep.subr.mxu0 0.0
      %4306 = vmatpush1.msra.mxu0 0.0
      %4307 = vmatprep.subr.mxu0 0.0
      %4308 = vmatpush1.msra.mxu0 0.0
      %4309 = vmatprep.subr.mxu0 0.0
      %4310 = vmatpush1.msra.mxu0 0.0
      %4311 = vmatprep.mubr.f32.mxu0 0.0
      %4312 = vmatmul.mubr.f32.gmra.mrb[0].mxu0 %v4035
      %v4313 = vpop.f32.mrb[0].mxu0
      %v4314 = vadd.f32 0.0, %v4313
      %v4315 = vpop.f32.mrb[0].mxu0
      %4316 = vdwg.mxu0
      %4318 = vrot.lane.b32.xlu0 %v3892, 32
      %v4319 = vpop.permute.xlu0 %4318
      %4322 = vrot.lane.b32.xlu0 0.0, 64
      %v4323 = vpop.permute.xlu0 %4322
      %4324 = vrot.lane.b32.xlu0 %v4174, 64
      %v4325 = vpop.permute.xlu0 %4324
      %4330 = vrot.lane.b32.xlu0 %v3531, 96
      %v4331 = vpop.permute.xlu0 %4330
      %4332 = vrot.lane.b32.xlu0 %v3677, 96
      %v4333 = vpop.permute.xlu0 %4332
      %4338 = vrot.lane.b32.xlu0 %v4104, 32
      %v4339 = vpop.permute.xlu0 %4338
      %4340 = vrot.lane.b32.xlu0 %v4244, 32
      %v4341 = vpop.permute.xlu0 %4340
      %4346 = vrot.lane.b32.xlu0 %v3604, 64
      %v4347 = vpop.permute.xlu0 %4346
      %4348 = vrot.lane.b32.xlu0 %v3750, 64
      %v4349 = vpop.permute.xlu0 %4348
      %4353 = vrot.lane.b32.xlu0 %v3892, 96
      %v4354 = vpop.permute.xlu0 %4353
      %4355 = vrot.lane.b32.xlu0 %v4032, 96
      %v4356 = vpop.permute.xlu0 %4355
      %v4359 = vsel %vm3079, 0.0, %v2986
      %v4360 = vsel %vm3079, %v3604, %v4319
      %v4361 = vsel %vm3089, %v4359, %v4323
      %v4362 = vsel %vm3089, %v4360, %v4325
      %v4363 = vsel %vm3099, %v4361, %v4331
      %v4364 = vsel %vm3099, %v4362, %v4333
      %v4365 = vsel %vm3079, %v3822, %v4339
      %v4366 = vsel %vm3079, %v3962, %v4341
      %v4367 = vsel %vm3089, %v4365, %v4347
      %v4368 = vsel %vm3089, %v4366, %v4349
      %v4369 = vsel %vm3099, %v4367, %v4354
      %v4370 = vsel %vm3099, %v4368, %v4356
      %v4371 = vld [vmem:[%s9] sm:$0xff]
      %v4372 = vld [vmem:[%s9 + $0x8] sm:$0xff]
      %v4373 = vld [vmem:[%s9 + $0x10] sm:$0xff]
      %v4374 = vld [vmem:[%s9 + $0x18] sm:$0xff]
      %v4375 = vld [vmem:[%s9 + $0x20] sm:$0xff]
      %v4376 = vld [vmem:[%s9 + $0x28] sm:$0xff]
      %v4377 = vld [vmem:[%s9 + $0x30] sm:$0xff]
      %v4378 = vld [vmem:[%s9 + $0x38] sm:$0xff]
      %v4379 = vld [vmem:[%s9 + $0x40] sm:$0xff]
      %v4380 = vld [vmem:[%s9 + $0x48] sm:$0xff]
      %v4381 = vld [vmem:[%s9 + $0x50] sm:$0xff]
      %v4382 = vld [vmem:[%s9 + $0x58] sm:$0xff]
      %v4383 = vld [vmem:[%s9 + $0x60] sm:$0xff]
      %v4384 = vld [vmem:[%s9 + $0x68] sm:$0xff]
      %v4385 = vld [vmem:[%s9 + $0x70] sm:$0xff]
      %v4386 = vld [vmem:[%s9 + $0x78] sm:$0xff]
      %v4387 = vld [vmem:[%s9 + $0x80] sm:$0xff]
      %v4388 = vld [vmem:[%s9 + $0x88] sm:$0xff]
      %v4389 = vld [vmem:[%s9 + $0x90] sm:$0xff]
      %v4390 = vld [vmem:[%s9 + $0x98] sm:$0xff]
      %v4391 = vld [vmem:[%s9 + $0xa0] sm:$0xff]
      %v4392 = vld [vmem:[%s9 + $0xa8] sm:$0xff]
      %v4393 = vld [vmem:[%s9 + $0xb0] sm:$0xff]
      %v4394 = vld [vmem:[%s9 + $0xb8] sm:$0xff]
      %v4395 = vld [vmem:[%s9 + $0xc0] sm:$0xff]
      %v4396 = vld [vmem:[%s9 + $0xc8] sm:$0xff]
      %v4397 = vld [vmem:[%s9 + $0xd0] sm:$0xff]
      %v4398 = vld [vmem:[%s9 + $0xd8] sm:$0xff]
      %v4399 = vld [vmem:[%s9 + $0xe0] sm:$0xff]
      %v4400 = vld [vmem:[%s9 + $0xe8] sm:$0xff]
      %v4401 = vld [vmem:[%s9 + $0xf0] sm:$0xff]
      %v4402 = vld [vmem:[%s9 + $0xf8] sm:$0xff]
      %v4403 = vld [vmem:[%s9 + $0x100] sm:$0xff]
      %v4404 = vld [vmem:[%s9 + $0x108] sm:$0xff]
      %v4405 = vld [vmem:[%s9 + $0x110] sm:$0xff]
      %v4406 = vld [vmem:[%s9 + $0x118] sm:$0xff]
      %v4407 = vld [vmem:[%s10] sm:$0x1]
      %v4409 = vlaneseq
      %v4410 = vshrl.u32 %v4409, 7
      %v4411 = vsub.s32 0, %v4410
      %v4412 = vrot.slane %v4407, %v4411
      %v4414 = vsel %vm3079, %v4174, 0
      %4416 = vmatprep.subr.mxu0 0.0
      %4417 = vmatpush1.msra.mxu0 %v4371
      %4418 = vmatprep.subr.mxu0 0.0
      %4419 = vmatpush1.msra.mxu0 %v4372
      %4420 = vmatprep.subr.mxu0 0.0
      %4421 = vmatpush1.msra.mxu0 %v4373
      %4422 = vmatprep.subr.mxu0 0.0
      %4423 = vmatpush1.msra.mxu0 %v4374
      %4424 = vmatprep.subr.mxu0 0.0
      %4425 = vmatpush1.msra.mxu0 %v4375
      %4426 = vmatprep.subr.mxu0 0.0
      %4427 = vmatpush1.msra.mxu0 %v4376
      %4428 = vmatprep.subr.mxu0 0.0
      %4429 = vmatpush1.msra.mxu0 %v4377
      %4430 = vmatprep.subr.mxu0 0.0
      %4431 = vmatpush1.msra.mxu0 %v4378
      %4432 = vmatprep.subr.mxu0 0.0
      %4433 = vmatpush1.msra.mxu0 %v4379
      %4434 = vmatprep.subr.mxu0 0.0
      %4435 = vmatpush1.msra.mxu0 %v4380
      %4436 = vmatprep.subr.mxu0 0.0
      %4437 = vmatpush1.msra.mxu0 %v4381
      %4438 = vmatprep.subr.mxu0 0.0
      %4439 = vmatpush1.msra.mxu0 %v4382
      %4440 = vmatprep.subr.mxu0 0.0
      %4441 = vmatpush1.msra.mxu0 %v4383
      %4442 = vmatprep.subr.mxu0 0.0
      %4443 = vmatpush1.msra.mxu0 %v4384
      %4444 = vmatprep.subr.mxu0 0.0
      %4445 = vmatpush1.msra.mxu0 %v4385
      %4446 = vmatprep.subr.mxu0 0.0
      %4447 = vmatpush1.msra.mxu0 %v4386
      %4448 = vmatprep.subr.mxu0 0.0
      %4449 = vmatpush1.msra.mxu0 %v4387
      %4450 = vmatprep.subr.mxu0 0.0
      %4451 = vmatpush1.msra.mxu0 %v4388
      %4452 = vmatprep.subr.mxu0 0.0
      %4453 = vmatpush1.msra.mxu0 %v4389
      %4454 = vmatprep.subr.mxu0 0.0
      %4455 = vmatpush1.msra.mxu0 %v4390
      %4456 = vmatprep.subr.mxu0 0.0
      %4457 = vmatpush1.msra.mxu0 %v4391
      %4458 = vmatprep.subr.mxu0 0.0
      %4459 = vmatpush1.msra.mxu0 %v4392
      %4460 = vmatprep.subr.mxu0 0.0
      %4461 = vmatpush1.msra.mxu0 %v4393
      %4462 = vmatprep.subr.mxu0 0.0
      %4463 = vmatpush1.msra.mxu0 %v4394
      %4464 = vmatprep.subr.mxu0 0.0
      %4465 = vmatpush1.msra.mxu0 %v4395
      %4466 = vmatprep.subr.mxu0 0.0
      %4467 = vmatpush1.msra.mxu0 %v4396
      %4468 = vmatprep.subr.mxu0 0.0
      %4469 = vmatpush1.msra.mxu0 %v4397
      %4470 = vmatprep.subr.mxu0 0.0
      %4471 = vmatpush1.msra.mxu0 %v4398
      %4472 = vmatprep.subr.mxu0 0.0
      %4473 = vmatpush1.msra.mxu0 %v4399
      %4474 = vmatprep.subr.mxu0 0.0
      %4475 = vmatpush1.msra.mxu0 %v4400
      %4476 = vmatprep.subr.mxu0 0.0
      %4477 = vmatpush1.msra.mxu0 %v4401
      %4478 = vmatprep.subr.mxu0 0.0
      %4479 = vmatpush1.msra.mxu0 %v4402
      %4480 = vmatprep.mubr.f32.mxu0 %v4369
      %4481 = vmatmul.mubr.f32.gmra.mrb[0].mxu0 %v4363
      %v4482 = vpop.f32.mrb[0].mxu0
      %v4483 = vadd.f32 %v4412, %v4482
      %v4484 = vpop.f32.mrb[0].mxu0
      %4485 = vdwg.mxu0
      %4486 = vmatprep.subr.mxu0 0.0
      %4487 = vmatpush1.msra.mxu0 %v4403
      %4488 = vmatprep.subr.mxu0 0.0
      %4489 = vmatpush1.msra.mxu0 %v4404
      %4490 = vmatprep.subr.mxu0 0.0
      %4491 = vmatpush1.msra.mxu0 %v4405
      %4492 = vmatprep.subr.mxu0 0.0
      %4493 = vmatpush1.msra.mxu0 %v4406
      %4494 = vmatprep.subr.mxu0 0.0
      %4495 = vmatpush1.msra.mxu0 0.0
      %4496 = vmatprep.subr.mxu0 0.0
      %4497 = vmatpush1.msra.mxu0 0.0
      %4498 = vmatprep.subr.mxu0 0.0
      %4499 = vmatpush1.msra.mxu0 0.0
      %4500 = vmatprep.subr.mxu0 0.0
      %4501 = vmatpush1.msra.mxu0 0.0
      %4502 = vmatprep.subr.mxu0 0.0
      %4503 = vmatpush1.msra.mxu0 0.0
      %4504 = vmatprep.subr.mxu0 0.0
      %4505 = vmatpush1.msra.mxu0 0.0
      %4506 = vmatprep.subr.mxu0 0.0
      %4507 = vmatpush1.msra.mxu0 0.0
      %4508 = vmatprep.subr.mxu0 0.0
      %4509 = vmatpush1.msra.mxu0 0.0
      %4510 = vmatprep.subr.mxu0 0.0
      %4511 = vmatpush1.msra.mxu0 0.0
      %4512 = vmatprep.subr.mxu0 0.0
      %4513 = vmatpush1.msra.mxu0 0.0
      %4514 = vmatprep.subr.mxu0 0.0
      %4515 = vmatpush1.msra.mxu0 0.0
      %4516 = vmatprep.subr.mxu0 0.0
      %4517 = vmatpush1.msra.mxu0 0.0
      %4518 = vmatprep.subr.mxu0 0.0
      %4519 = vmatpush1.msra.mxu0 0.0
      %4520 = vmatprep.subr.mxu0 0.0
      %4521 = vmatpush1.msra.mxu0 0.0
      %4522 = vmatprep.subr.mxu0 0.0
      %4523 = vmatpush1.msra.mxu0 0.0
      %4524 = vmatprep.subr.mxu0 0.0
      %4525 = vmatpush1.msra.mxu0 0.0
      %4526 = vmatprep.subr.mxu0 0.0
      %4527 = vmatpush1.msra.mxu0 0.0
      %4528 = vmatprep.subr.mxu0 0.0
      %4529 = vmatpush1.msra.mxu0 0.0
      %4530 = vmatprep.subr.mxu0 0.0
      %4531 = vmatpush1.msra.mxu0 0.0
      %4532 = vmatprep.subr.mxu0 0.0
      %4533 = vmatpush1.msra.mxu0 0.0
      %4534 = vmatprep.subr.mxu0 0.0
      %4535 = vmatpush1.msra.mxu0 0.0
      %4536 = vmatprep.subr.mxu0 0.0
      %4537 = vmatpush1.msra.mxu0 0.0
      %4538 = vmatprep.subr.mxu0 0.0
      %4539 = vmatpush1.msra.mxu0 0.0
      %4540 = vmatprep.subr.mxu0 0.0
      %4541 = vmatpush1.msra.mxu0 0.0
      %4542 = vmatprep.subr.mxu0 0.0
      %4543 = vmatpush1.msra.mxu0 0.0
      %4544 = vmatprep.subr.mxu0 0.0
      %4545 = vmatpush1.msra.mxu0 0.0
      %4546 = vmatprep.subr.mxu0 0.0
      %4547 = vmatpush1.msra.mxu0 0.0
      %4548 = vmatprep.subr.mxu0 0.0
      %4549 = vmatpush1.msra.mxu0 0.0
      %4550 = vmatprep.mubr.f32.mxu0 0.0
      %4551 = vmatmul.mubr.f32.gmra.mrb[0].mxu0 %v4414
      %v4552 = vpop.f32.mrb[0].mxu0
      %v4553 = vadd.f32 %v4483, %v4552
      %v4554 = vpop.f32.mrb[0].mxu0
      %4555 = vdwg.mxu0
      %v4557 = vsel %vm3079, %v4314, 0
      %4559 = vmatprep.subr.mxu0 0.0
      %4560 = vmatpush1.msra.mxu0 %v4371
      %4561 = vmatprep.subr.mxu0 0.0
      %4562 = vmatpush1.msra.mxu0 %v4372
      %4563 = vmatprep.subr.mxu0 0.0
      %4564 = vmatpush1.msra.mxu0 %v4373
      %4565 = vmatprep.subr.mxu0 0.0
      %4566 = vmatpush1.msra.mxu0 %v4374
      %4567 = vmatprep.subr.mxu0 0.0
      %4568 = vmatpush1.msra.mxu0 %v4375
      %4569 = vmatprep.subr.mxu0 0.0
      %4570 = vmatpush1.msra.mxu0 %v4376
      %4571 = vmatprep.subr.mxu0 0.0
      %4572 = vmatpush1.msra.mxu0 %v4377
      %4573 = vmatprep.subr.mxu0 0.0
      %4574 = vmatpush1.msra.mxu0 %v4378
      %4575 = vmatprep.subr.mxu0 0.0
      %4576 = vmatpush1.msra.mxu0 %v4379
      %4577 = vmatprep.subr.mxu0 0.0
      %4578 = vmatpush1.msra.mxu0 %v4380
      %4579 = vmatprep.subr.mxu0 0.0
      %4580 = vmatpush1.msra.mxu0 %v4381
      %4581 = vmatprep.subr.mxu0 0.0
      %4582 = vmatpush1.msra.mxu0 %v4382
      %4583 = vmatprep.subr.mxu0 0.0
      %4584 = vmatpush1.msra.mxu0 %v4383
      %4585 = vmatprep.subr.mxu0 0.0
      %4586 = vmatpush1.msra.mxu0 %v4384
      %4587 = vmatprep.subr.mxu0 0.0
      %4588 = vmatpush1.msra.mxu0 %v4385
      %4589 = vmatprep.subr.mxu0 0.0
      %4590 = vmatpush1.msra.mxu0 %v4386
      %4591 = vmatprep.subr.mxu0 0.0
      %4592 = vmatpush1.msra.mxu0 %v4387
      %4593 = vmatprep.subr.mxu0 0.0
      %4594 = vmatpush1.msra.mxu0 %v4388
      %4595 = vmatprep.subr.mxu0 0.0
      %4596 = vmatpush1.msra.mxu0 %v4389
      %4597 = vmatprep.subr.mxu0 0.0
      %4598 = vmatpush1.msra.mxu0 %v4390
      %4599 = vmatprep.subr.mxu0 0.0
      %4600 = vmatpush1.msra.mxu0 %v4391
      %4601 = vmatprep.subr.mxu0 0.0
      %4602 = vmatpush1.msra.mxu0 %v4392
      %4603 = vmatprep.subr.mxu0 0.0
      %4604 = vmatpush1.msra.mxu0 %v4393
      %4605 = vmatprep.subr.mxu0 0.0
      %4606 = vmatpush1.msra.mxu0 %v4394
      %4607 = vmatprep.subr.mxu0 0.0
      %4608 = vmatpush1.msra.mxu0 %v4395
      %4609 = vmatprep.subr.mxu0 0.0
      %4610 = vmatpush1.msra.mxu0 %v4396
      %4611 = vmatprep.subr.mxu0 0.0
      %4612 = vmatpush1.msra.mxu0 %v4397
      %4613 = vmatprep.subr.mxu0 0.0
      %4614 = vmatpush1.msra.mxu0 %v4398
      %4615 = vmatprep.subr.mxu0 0.0
      %4616 = vmatpush1.msra.mxu0 %v4399
      %4617 = vmatprep.subr.mxu0 0.0
      %4618 = vmatpush1.msra.mxu0 %v4400
      %4619 = vmatprep.subr.mxu0 0.0
      %4620 = vmatpush1.msra.mxu0 %v4401
      %4621 = vmatprep.subr.mxu0 0.0
      %4622 = vmatpush1.msra.mxu0 %v4402
      %4623 = vmatprep.mubr.f32.mxu0 %v4370
      %4624 = vmatmul.mubr.f32.gmra.mrb[0].mxu0 %v4364
      %v4625 = vpop.f32.mrb[0].mxu0
      %v4626 = vadd.f32 %v4412, %v4625
      %v4627 = vpop.f32.mrb[0].mxu0
      %4628 = vdwg.mxu0
      %4629 = vmatprep.subr.mxu0 0.0
      %4630 = vmatpush1.msra.mxu0 %v4403
      %4631 = vmatprep.subr.mxu0 0.0
      %4632 = vmatpush1.msra.mxu0 %v4404
      %4633 = vmatprep.subr.mxu0 0.0
      %4634 = vmatpush1.msra.mxu0 %v4405
      %4635 = vmatprep.subr.mxu0 0.0
      %4636 = vmatpush1.msra.mxu0 %v4406
      %4637 = vmatprep.subr.mxu0 0.0
      %4638 = vmatpush1.msra.mxu0 0.0
      %4639 = vmatprep.subr.mxu0 0.0
      %4640 = vmatpush1.msra.mxu0 0.0
      %4641 = vmatprep.subr.mxu0 0.0
      %4642 = vmatpush1.msra.mxu0 0.0
      %4643 = vmatprep.subr.mxu0 0.0
      %4644 = vmatpush1.msra.mxu0 0.0
      %4645 = vmatprep.subr.mxu0 0.0
      %4646 = vmatpush1.msra.mxu0 0.0
      %4647 = vmatprep.subr.mxu0 0.0
      %4648 = vmatpush1.msra.mxu0 0.0
      %4649 = vmatprep.subr.mxu0 0.0
      %4650 = vmatpush1.msra.mxu0 0.0
      %4651 = vmatprep.subr.mxu0 0.0
      %4652 = vmatpush1.msra.mxu0 0.0
      %4653 = vmatprep.subr.mxu0 0.0
      %4654 = vmatpush1.msra.mxu0 0.0
      %4655 = vmatprep.subr.mxu0 0.0
      %4656 = vmatpush1.msra.mxu0 0.0
      %4657 = vmatprep.subr.mxu0 0.0
      %4658 = vmatpush1.msra.mxu0 0.0
      %4659 = vmatprep.subr.mxu0 0.0
      %4660 = vmatpush1.msra.mxu0 0.0
      %4661 = vmatprep.subr.mxu0 0.0
      %4662 = vmatpush1.msra.mxu0 0.0
      %4663 = vmatprep.subr.mxu0 0.0
      %4664 = vmatpush1.msra.mxu0 0.0
      %4665 = vmatprep.subr.mxu0 0.0
      %4666 = vmatpush1.msra.mxu0 0.0
      %4667 = vmatprep.subr.mxu0 0.0
      %4668 = vmatpush1.msra.mxu0 0.0
      %4669 = vmatprep.subr.mxu0 0.0
      %4670 = vmatpush1.msra.mxu0 0.0
      %4671 = vmatprep.subr.mxu0 0.0
      %4672 = vmatpush1.msra.mxu0 0.0
      %4673 = vmatprep.subr.mxu0 0.0
      %4674 = vmatpush1.msra.mxu0 0.0
      %4675 = vmatprep.subr.mxu0 0.0
      %4676 = vmatpush1.msra.mxu0 0.0
      %4677 = vmatprep.subr.mxu0 0.0
      %4678 = vmatpush1.msra.mxu0 0.0
      %4679 = vmatprep.subr.mxu0 0.0
      %4680 = vmatpush1.msra.mxu0 0.0
      %4681 = vmatprep.subr.mxu0 0.0
      %4682 = vmatpush1.msra.mxu0 0.0
      %4683 = vmatprep.subr.mxu0 0.0
      %4684 = vmatpush1.msra.mxu0 0.0
      %4685 = vmatprep.subr.mxu0 0.0
      %4686 = vmatpush1.msra.mxu0 0.0
      %4687 = vmatprep.subr.mxu0 0.0
      %4688 = vmatpush1.msra.mxu0 0.0
      %4689 = vmatprep.subr.mxu0 0.0
      %4690 = vmatpush1.msra.mxu0 0.0
      %4691 = vmatprep.subr.mxu0 0.0
      %4692 = vmatpush1.msra.mxu0 0.0
      %4693 = vmatprep.mubr.f32.mxu0 0.0
      %4694 = vmatmul.mubr.f32.gmra.mrb[0].mxu0 %v4557
      %v4695 = vpop.f32.mrb[0].mxu0
      %v4696 = vadd.f32 %v4626, %v4695
      %v4697 = vpop.f32.mrb[0].mxu0
      %4698 = vdwg.mxu0
      %vm4699 = vcmp.ge.f32.partialorder %v4553, 0.0
      %vm4700 = vcmp.ge.f32.partialorder %v4696, 0.0
      %v4701 = vmul.f32 %v4553, 0.2
      %v4702 = vmul.f32 %v4696, 0.2
      %v4703 = vsel %vm4699, %v4553, %v4701
      %v4704 = vsel %vm4700, %v4696, %v4702
      %v4705 = vld [vmem:[%s11] sm:$0x1]
      %v4707 = vlaneseq
      %v4708 = vshrl.u32 %v4707, 7
      %v4709 = vsub.s32 0, %v4708
      %v4710 = vrot.slane %v4705, %v4709
      %v4712 = vmul.f32 %v4703, %v4710
      %v4713 = vmul.f32 %v4704, %v4710
      %v4714 = vld [vmem:[%s12] sm:$0x1]
      %v4716 = vlaneseq
      %v4717 = vshrl.u32 %v4716, 7
      %v4718 = vsub.s32 0, %v4717
      %v4719 = vrot.slane %v4714, %v4718
      %v4721 = vadd.f32 %v4712, %v4719
      %v4722 = vadd.f32 %v4713, %v4719
      %vm4723 = vcmask 15360
      %v4724 = vsel %vm4723, %v1270, 0
      %vm4726 = vcmask 1041408
      %v4728 = vsel %vm4726, %v4721, 0
      %4730 = vmatprep.subr.mxu0 0.0
      %4731 = vmatpush1.msra.mxu0 %v4728
      %4732 = vmatprep.subr.mxu0 0.0
      %4733 = vmatpush1.msra.mxu0 0.0
      %4734 = vmatprep.subr.mxu0 0.0
      %4735 = vmatpush1.msra.mxu0 0.0
      %4736 = vmatprep.subr.mxu0 0.0
      %4737 = vmatpush1.msra.mxu0 0.0
      %4738 = vmatprep.subr.mxu0 0.0
      %4739 = vmatpush1.msra.mxu0 0.0
      %4740 = vmatprep.subr.mxu0 0.0
      %4741 = vmatpush1.msra.mxu0 0.0
      %4742 = vmatprep.subr.mxu0 0.0
      %4743 = vmatpush1.msra.mxu0 0.0
      %4744 = vmatprep.subr.mxu0 0.0
      %4745 = vmatpush1.msra.mxu0 0.0
      %4746 = vmatprep.subr.mxu0 0.0
      %4747 = vmatpush1.msra.mxu0 0.0
      %4748 = vmatprep.subr.mxu0 0.0
      %4749 = vmatpush1.msra.mxu0 0.0
      %4750 = vmatprep.subr.mxu0 0.0
      %4751 = vmatpush1.msra.mxu0 0.0
      %4752 = vmatprep.subr.mxu0 0.0
      %4753 = vmatpush1.msra.mxu0 0.0
      %4754 = vmatprep.subr.mxu0 0.0
      %4755 = vmatpush1.msra.mxu0 0.0
      %4756 = vmatprep.subr.mxu0 0.0
      %4757 = vmatpush1.msra.mxu0 0.0
      %4758 = vmatprep.subr.mxu0 0.0
      %4759 = vmatpush1.msra.mxu0 0.0
      %4760 = vmatprep.subr.mxu0 0.0
      %4761 = vmatpush1.msra.mxu0 0.0
      %4762 = vmatprep.subr.mxu0 0.0
      %4763 = vmatpush1.msra.mxu0 0.0
      %4764 = vmatprep.subr.mxu0 0.0
      %4765 = vmatpush1.msra.mxu0 0.0
      %4766 = vmatprep.subr.mxu0 0.0
      %4767 = vmatpush1.msra.mxu0 0.0
      %4768 = vmatprep.subr.mxu0 0.0
      %4769 = vmatpush1.msra.mxu0 0.0
      %4770 = vmatprep.subr.mxu0 0.0
      %4771 = vmatpush1.msra.mxu0 0.0
      %4772 = vmatprep.subr.mxu0 0.0
      %4773 = vmatpush1.msra.mxu0 0.0
      %4774 = vmatprep.subr.mxu0 0.0
      %4775 = vmatpush1.msra.mxu0 0.0
      %4776 = vmatprep.subr.mxu0 0.0
      %4777 = vmatpush1.msra.mxu0 0.0
      %4778 = vmatprep.subr.mxu0 0.0
      %4779 = vmatpush1.msra.mxu0 0.0
      %4780 = vmatprep.subr.mxu0 0.0
      %4781 = vmatpush1.msra.mxu0 0.0
      %4782 = vmatprep.subr.mxu0 0.0
      %4783 = vmatpush1.msra.mxu0 0.0
      %4784 = vmatprep.subr.mxu0 0.0
      %4785 = vmatpush1.msra.mxu0 0.0
      %4786 = vmatprep.subr.mxu0 0.0
      %4787 = vmatpush1.msra.mxu0 0.0
      %4788 = vmatprep.subr.mxu0 0.0
      %4789 = vmatpush1.msra.mxu0 0.0
      %4790 = vmatprep.subr.mxu0 0.0
      %4791 = vmatpush1.msra.mxu0 0.0
      %4792 = vmatprep.subr.mxu0 0.0
      %4793 = vmatpush1.msra.mxu0 0.0
      %4794 = vmatprep.mubr.f32.mxu0 0.0
      %4795 = vmatmul.mubr.f32.gmra.mrb[0].mxu0 %v4724
      %v4796 = vpop.f32.mrb[0].mxu0
      %v4797 = vadd.f32 0.0, %v4796
      %v4798 = vpop.f32.mrb[0].mxu0
      %4799 = vdwg.mxu0
      %v4801 = vsel %vm4726, %v4722, 0
      %4803 = vmatprep.subr.mxu0 0.0
      %4804 = vmatpush1.msra.mxu0 %v4801
      %4805 = vmatprep.subr.mxu0 0.0
      %4806 = vmatpush1.msra.mxu0 0.0
      %4807 = vmatprep.subr.mxu0 0.0
      %4808 = vmatpush1.msra.mxu0 0.0
      %4809 = vmatprep.subr.mxu0 0.0
      %4810 = vmatpush1.msra.mxu0 0.0
      %4811 = vmatprep.subr.mxu0 0.0
      %4812 = vmatpush1.msra.mxu0 0.0
      %4813 = vmatprep.subr.mxu0 0.0
      %4814 = vmatpush1.msra.mxu0 0.0
      %4815 = vmatprep.subr.mxu0 0.0
      %4816 = vmatpush1.msra.mxu0 0.0
      %4817 = vmatprep.subr.mxu0 0.0
      %4818 = vmatpush1.msra.mxu0 0.0
      %4819 = vmatprep.subr.mxu0 0.0
      %4820 = vmatpush1.msra.mxu0 0.0
      %4821 = vmatprep.subr.mxu0 0.0
      %4822 = vmatpush1.msra.mxu0 0.0
      %4823 = vmatprep.subr.mxu0 0.0
      %4824 = vmatpush1.msra.mxu0 0.0
      %4825 = vmatprep.subr.mxu0 0.0
      %4826 = vmatpush1.msra.mxu0 0.0
      %4827 = vmatprep.subr.mxu0 0.0
      %4828 = vmatpush1.msra.mxu0 0.0
      %4829 = vmatprep.subr.mxu0 0.0
      %4830 = vmatpush1.msra.mxu0 0.0
      %4831 = vmatprep.subr.mxu0 0.0
      %4832 = vmatpush1.msra.mxu0 0.0
      %4833 = vmatprep.subr.mxu0 0.0
      %4834 = vmatpush1.msra.mxu0 0.0
      %4835 = vmatprep.subr.mxu0 0.0
      %4836 = vmatpush1.msra.mxu0 0.0
      %4837 = vmatprep.subr.mxu0 0.0
      %4838 = vmatpush1.msra.mxu0 0.0
      %4839 = vmatprep.subr.mxu0 0.0
      %4840 = vmatpush1.msra.mxu0 0.0
      %4841 = vmatprep.subr.mxu0 0.0
      %4842 = vmatpush1.msra.mxu0 0.0
      %4843 = vmatprep.subr.mxu0 0.0
      %4844 = vmatpush1.msra.mxu0 0.0
      %4845 = vmatprep.subr.mxu0 0.0
      %4846 = vmatpush1.msra.mxu0 0.0
      %4847 = vmatprep.subr.mxu0 0.0
      %4848 = vmatpush1.msra.mxu0 0.0
      %4849 = vmatprep.subr.mxu0 0.0
      %4850 = vmatpush1.msra.mxu0 0.0
      %4851 = vmatprep.subr.mxu0 0.0
      %4852 = vmatpush1.msra.mxu0 0.0
      %4853 = vmatprep.subr.mxu0 0.0
      %4854 = vmatpush1.msra.mxu0 0.0
      %4855 = vmatprep.subr.mxu0 0.0
      %4856 = vmatpush1.msra.mxu0 0.0
      %4857 = vmatprep.subr.mxu0 0.0
      %4858 = vmatpush1.msra.mxu0 0.0
      %4859 = vmatprep.subr.mxu0 0.0
      %4860 = vmatpush1.msra.mxu0 0.0
      %4861 = vmatprep.subr.mxu0 0.0
      %4862 = vmatpush1.msra.mxu0 0.0
      %4863 = vmatprep.subr.mxu0 0.0
      %4864 = vmatpush1.msra.mxu0 0.0
      %4865 = vmatprep.subr.mxu0 0.0
      %4866 = vmatpush1.msra.mxu0 0.0
      %4867 = vmatprep.mubr.f32.mxu0 0.0
      %4868 = vmatmul.mubr.f32.gmra.mrb[0].mxu0 %v4724
      %v4869 = vpop.f32.mrb[0].mxu0
      %v4870 = vadd.f32 0.0, %v4869
      %v4871 = vpop.f32.mrb[0].mxu0
      %4872 = vdwg.mxu0
      %v4873 = vsel %vm4723, %v1836, 0
      %4875 = vmatprep.subr.mxu0 0.0
      %4876 = vmatpush1.msra.mxu0 %v4728
      %4877 = vmatprep.subr.mxu0 0.0
      %4878 = vmatpush1.msra.mxu0 0.0
      %4879 = vmatprep.subr.mxu0 0.0
      %4880 = vmatpush1.msra.mxu0 0.0
      %4881 = vmatprep.subr.mxu0 0.0
      %4882 = vmatpush1.msra.mxu0 0.0
      %4883 = vmatprep.subr.mxu0 0.0
      %4884 = vmatpush1.msra.mxu0 0.0
      %4885 = vmatprep.subr.mxu0 0.0
      %4886 = vmatpush1.msra.mxu0 0.0
      %4887 = vmatprep.subr.mxu0 0.0
      %4888 = vmatpush1.msra.mxu0 0.0
      %4889 = vmatprep.subr.mxu0 0.0
      %4890 = vmatpush1.msra.mxu0 0.0
      %4891 = vmatprep.subr.mxu0 0.0
      %4892 = vmatpush1.msra.mxu0 0.0
      %4893 = vmatprep.subr.mxu0 0.0
      %4894 = vmatpush1.msra.mxu0 0.0
      %4895 = vmatprep.subr.mxu0 0.0
      %4896 = vmatpush1.msra.mxu0 0.0
      %4897 = vmatprep.subr.mxu0 0.0
      %4898 = vmatpush1.msra.mxu0 0.0
      %4899 = vmatprep.subr.mxu0 0.0
      %4900 = vmatpush1.msra.mxu0 0.0
      %4901 = vmatprep.subr.mxu0 0.0
      %4902 = vmatpush1.msra.mxu0 0.0
      %4903 = vmatprep.subr.mxu0 0.0
      %4904 = vmatpush1.msra.mxu0 0.0
      %4905 = vmatprep.subr.mxu0 0.0
      %4906 = vmatpush1.msra.mxu0 0.0
      %4907 = vmatprep.subr.mxu0 0.0
      %4908 = vmatpush1.msra.mxu0 0.0
      %4909 = vmatprep.subr.mxu0 0.0
      %4910 = vmatpush1.msra.mxu0 0.0
      %4911 = vmatprep.subr.mxu0 0.0
      %4912 = vmatpush1.msra.mxu0 0.0
      %4913 = vmatprep.subr.mxu0 0.0
      %4914 = vmatpush1.msra.mxu0 0.0
      %4915 = vmatprep.subr.mxu0 0.0
      %4916 = vmatpush1.msra.mxu0 0.0
      %4917 = vmatprep.subr.mxu0 0.0
      %4918 = vmatpush1.msra.mxu0 0.0
      %4919 = vmatprep.subr.mxu0 0.0
      %4920 = vmatpush1.msra.mxu0 0.0
      %4921 = vmatprep.subr.mxu0 0.0
      %4922 = vmatpush1.msra.mxu0 0.0
      %4923 = vmatprep.subr.mxu0 0.0
      %4924 = vmatpush1.msra.mxu0 0.0
      %4925 = vmatprep.subr.mxu0 0.0
      %4926 = vmatpush1.msra.mxu0 0.0
      %4927 = vmatprep.subr.mxu0 0.0
      %4928 = vmatpush1.msra.mxu0 0.0
      %4929 = vmatprep.subr.mxu0 0.0
      %4930 = vmatpush1.msra.mxu0 0.0
      %4931 = vmatprep.subr.mxu0 0.0
      %4932 = vmatpush1.msra.mxu0 0.0
      %4933 = vmatprep.subr.mxu0 0.0
      %4934 = vmatpush1.msra.mxu0 0.0
      %4935 = vmatprep.subr.mxu0 0.0
      %4936 = vmatpush1.msra.mxu0 0.0
      %4937 = vmatprep.subr.mxu0 0.0
      %4938 = vmatpush1.msra.mxu0 0.0
      %4939 = vmatprep.mubr.f32.mxu0 0.0
      %4940 = vmatmul.mubr.f32.gmra.mrb[0].mxu0 %v4873
      %v4941 = vpop.f32.mrb[0].mxu0
      %v4942 = vadd.f32 0.0, %v4941
      %v4943 = vpop.f32.mrb[0].mxu0
      %4944 = vdwg.mxu0
      %4945 = vmatprep.subr.mxu0 0.0
      %4946 = vmatpush1.msra.mxu0 %v4801
      %4947 = vmatprep.subr.mxu0 0.0
      %4948 = vmatpush1.msra.mxu0 0.0
      %4949 = vmatprep.subr.mxu0 0.0
      %4950 = vmatpush1.msra.mxu0 0.0
      %4951 = vmatprep.subr.mxu0 0.0
      %4952 = vmatpush1.msra.mxu0 0.0
      %4953 = vmatprep.subr.mxu0 0.0
      %4954 = vmatpush1.msra.mxu0 0.0
      %4955 = vmatprep.subr.mxu0 0.0
      %4956 = vmatpush1.msra.mxu0 0.0
      %4957 = vmatprep.subr.mxu0 0.0
      %4958 = vmatpush1.msra.mxu0 0.0
      %4959 = vmatprep.subr.mxu0 0.0
      %4960 = vmatpush1.msra.mxu0 0.0
      %4961 = vmatprep.subr.mxu0 0.0
      %4962 = vmatpush1.msra.mxu0 0.0
      %4963 = vmatprep.subr.mxu0 0.0
      %4964 = vmatpush1.msra.mxu0 0.0
      %4965 = vmatprep.subr.mxu0 0.0
      %4966 = vmatpush1.msra.mxu0 0.0
      %4967 = vmatprep.subr.mxu0 0.0
      %4968 = vmatpush1.msra.mxu0 0.0
      %4969 = vmatprep.subr.mxu0 0.0
      %4970 = vmatpush1.msra.mxu0 0.0
      %4971 = vmatprep.subr.mxu0 0.0
      %4972 = vmatpush1.msra.mxu0 0.0
      %4973 = vmatprep.subr.mxu0 0.0
      %4974 = vmatpush1.msra.mxu0 0.0
      %4975 = vmatprep.subr.mxu0 0.0
      %4976 = vmatpush1.msra.mxu0 0.0
      %4977 = vmatprep.subr.mxu0 0.0
      %4978 = vmatpush1.msra.mxu0 0.0
      %4979 = vmatprep.subr.mxu0 0.0
      %4980 = vmatpush1.msra.mxu0 0.0
      %4981 = vmatprep.subr.mxu0 0.0
      %4982 = vmatpush1.msra.mxu0 0.0
      %4983 = vmatprep.subr.mxu0 0.0
      %4984 = vmatpush1.msra.mxu0 0.0
      %4985 = vmatprep.subr.mxu0 0.0
      %4986 = vmatpush1.msra.mxu0 0.0
      %4987 = vmatprep.subr.mxu0 0.0
      %4988 = vmatpush1.msra.mxu0 0.0
      %4989 = vmatprep.subr.mxu0 0.0
      %4990 = vmatpush1.msra.mxu0 0.0
      %4991 = vmatprep.subr.mxu0 0.0
      %4992 = vmatpush1.msra.mxu0 0.0
      %4993 = vmatprep.subr.mxu0 0.0
      %4994 = vmatpush1.msra.mxu0 0.0
      %4995 = vmatprep.subr.mxu0 0.0
      %4996 = vmatpush1.msra.mxu0 0.0
      %4997 = vmatprep.subr.mxu0 0.0
      %4998 = vmatpush1.msra.mxu0 0.0
      %4999 = vmatprep.subr.mxu0 0.0
      %5000 = vmatpush1.msra.mxu0 0.0
      %5001 = vmatprep.subr.mxu0 0.0
      %5002 = vmatpush1.msra.mxu0 0.0
      %5003 = vmatprep.subr.mxu0 0.0
      %5004 = vmatpush1.msra.mxu0 0.0
      %5005 = vmatprep.subr.mxu0 0.0
      %5006 = vmatpush1.msra.mxu0 0.0
      %5007 = vmatprep.subr.mxu0 0.0
      %5008 = vmatpush1.msra.mxu0 0.0
      %5009 = vmatprep.mubr.f32.mxu0 0.0
      %5010 = vmatmul.mubr.f32.gmra.mrb[0].mxu0 %v4873
      %v5011 = vpop.f32.mrb[0].mxu0
      %v5012 = vadd.f32 0.0, %v5011
      %v5013 = vpop.f32.mrb[0].mxu0
      %5014 = vdwg.mxu0
      %v5015 = vsel %vm4723, %v2402, 0
      %5017 = vmatprep.subr.mxu0 0.0
      %5018 = vmatpush1.msra.mxu0 %v4728
      %5019 = vmatprep.subr.mxu0 0.0
      %5020 = vmatpush1.msra.mxu0 0.0
      %5021 = vmatprep.subr.mxu0 0.0
      %5022 = vmatpush1.msra.mxu0 0.0
      %5023 = vmatprep.subr.mxu0 0.0
      %5024 = vmatpush1.msra.mxu0 0.0
      %5025 = vmatprep.subr.mxu0 0.0
      %5026 = vmatpush1.msra.mxu0 0.0
      %5027 = vmatprep.subr.mxu0 0.0
      %5028 = vmatpush1.msra.mxu0 0.0
      %5029 = vmatprep.subr.mxu0 0.0
      %5030 = vmatpush1.msra.mxu0 0.0
      %5031 = vmatprep.subr.mxu0 0.0
      %5032 = vmatpush1.msra.mxu0 0.0
      %5033 = vmatprep.subr.mxu0 0.0
      %5034 = vmatpush1.msra.mxu0 0.0
      %5035 = vmatprep.subr.mxu0 0.0
      %5036 = vmatpush1.msra.mxu0 0.0
      %5037 = vmatprep.subr.mxu0 0.0
      %5038 = vmatpush1.msra.mxu0 0.0
      %5039 = vmatprep.subr.mxu0 0.0
      %5040 = vmatpush1.msra.mxu0 0.0
      %5041 = vmatprep.subr.mxu0 0.0
      %5042 = vmatpush1.msra.mxu0 0.0
      %5043 = vmatprep.subr.mxu0 0.0
      %5044 = vmatpush1.msra.mxu0 0.0
      %5045 = vmatprep.subr.mxu0 0.0
      %5046 = vmatpush1.msra.mxu0 0.0
      %5047 = vmatprep.subr.mxu0 0.0
      %5048 = vmatpush1.msra.mxu0 0.0
      %5049 = vmatprep.subr.mxu0 0.0
      %5050 = vmatpush1.msra.mxu0 0.0
      %5051 = vmatprep.subr.mxu0 0.0
      %5052 = vmatpush1.msra.mxu0 0.0
      %5053 = vmatprep.subr.mxu0 0.0
      %5054 = vmatpush1.msra.mxu0 0.0
      %5055 = vmatprep.subr.mxu0 0.0
      %5056 = vmatpush1.msra.mxu0 0.0
      %5057 = vmatprep.subr.mxu0 0.0
      %5058 = vmatpush1.msra.mxu0 0.0
      %5059 = vmatprep.subr.mxu0 0.0
      %5060 = vmatpush1.msra.mxu0 0.0
      %5061 = vmatprep.subr.mxu0 0.0
      %5062 = vmatpush1.msra.mxu0 0.0
      %5063 = vmatprep.subr.mxu0 0.0
      %5064 = vmatpush1.msra.mxu0 0.0
      %5065 = vmatprep.subr.mxu0 0.0
      %5066 = vmatpush1.msra.mxu0 0.0
      %5067 = vmatprep.subr.mxu0 0.0
      %5068 = vmatpush1.msra.mxu0 0.0
      %5069 = vmatprep.subr.mxu0 0.0
      %5070 = vmatpush1.msra.mxu0 0.0
      %5071 = vmatprep.subr.mxu0 0.0
      %5072 = vmatpush1.msra.mxu0 0.0
      %5073 = vmatprep.subr.mxu0 0.0
      %5074 = vmatpush1.msra.mxu0 0.0
      %5075 = vmatprep.subr.mxu0 0.0
      %5076 = vmatpush1.msra.mxu0 0.0
      %5077 = vmatprep.subr.mxu0 0.0
      %5078 = vmatpush1.msra.mxu0 0.0
      %5079 = vmatprep.subr.mxu0 0.0
      %5080 = vmatpush1.msra.mxu0 0.0
      %5081 = vmatprep.mubr.f32.mxu0 0.0
      %5082 = vmatmul.mubr.f32.gmra.mrb[0].mxu0 %v5015
      %v5083 = vpop.f32.mrb[0].mxu0
      %v5084 = vadd.f32 0.0, %v5083
      %v5085 = vpop.f32.mrb[0].mxu0
      %5086 = vdwg.mxu0
      %5087 = vmatprep.subr.mxu0 0.0
      %5088 = vmatpush1.msra.mxu0 %v4801
      %5089 = vmatprep.subr.mxu0 0.0
      %5090 = vmatpush1.msra.mxu0 0.0
      %5091 = vmatprep.subr.mxu0 0.0
      %5092 = vmatpush1.msra.mxu0 0.0
      %5093 = vmatprep.subr.mxu0 0.0
      %5094 = vmatpush1.msra.mxu0 0.0
      %5095 = vmatprep.subr.mxu0 0.0
      %5096 = vmatpush1.msra.mxu0 0.0
      %5097 = vmatprep.subr.mxu0 0.0
      %5098 = vmatpush1.msra.mxu0 0.0
      %5099 = vmatprep.subr.mxu0 0.0
      %5100 = vmatpush1.msra.mxu0 0.0
      %5101 = vmatprep.subr.mxu0 0.0
      %5102 = vmatpush1.msra.mxu0 0.0
      %5103 = vmatprep.subr.mxu0 0.0
      %5104 = vmatpush1.msra.mxu0 0.0
      %5105 = vmatprep.subr.mxu0 0.0
      %5106 = vmatpush1.msra.mxu0 0.0
      %5107 = vmatprep.subr.mxu0 0.0
      %5108 = vmatpush1.msra.mxu0 0.0
      %5109 = vmatprep.subr.mxu0 0.0
      %5110 = vmatpush1.msra.mxu0 0.0
      %5111 = vmatprep.subr.mxu0 0.0
      %5112 = vmatpush1.msra.mxu0 0.0
      %5113 = vmatprep.subr.mxu0 0.0
      %5114 = vmatpush1.msra.mxu0 0.0
      %5115 = vmatprep.subr.mxu0 0.0
      %5116 = vmatpush1.msra.mxu0 0.0
      %5117 = vmatprep.subr.mxu0 0.0
      %5118 = vmatpush1.msra.mxu0 0.0
      %5119 = vmatprep.subr.mxu0 0.0
      %5120 = vmatpush1.msra.mxu0 0.0
      %5121 = vmatprep.subr.mxu0 0.0
      %5122 = vmatpush1.msra.mxu0 0.0
      %5123 = vmatprep.subr.mxu0 0.0
      %5124 = vmatpush1.msra.mxu0 0.0
      %5125 = vmatprep.subr.mxu0 0.0
      %5126 = vmatpush1.msra.mxu0 0.0
      %5127 = vmatprep.subr.mxu0 0.0
      %5128 = vmatpush1.msra.mxu0 0.0
      %5129 = vmatprep.subr.mxu0 0.0
      %5130 = vmatpush1.msra.mxu0 0.0
      %5131 = vmatprep.subr.mxu0 0.0
      %5132 = vmatpush1.msra.mxu0 0.0
      %5133 = vmatprep.subr.mxu0 0.0
      %5134 = vmatpush1.msra.mxu0 0.0
      %5135 = vmatprep.subr.mxu0 0.0
      %5136 = vmatpush1.msra.mxu0 0.0
      %5137 = vmatprep.subr.mxu0 0.0
      %5138 = vmatpush1.msra.mxu0 0.0
      %5139 = vmatprep.subr.mxu0 0.0
      %5140 = vmatpush1.msra.mxu0 0.0
      %5141 = vmatprep.subr.mxu0 0.0
      %5142 = vmatpush1.msra.mxu0 0.0
      %5143 = vmatprep.subr.mxu0 0.0
      %5144 = vmatpush1.msra.mxu0 0.0
      %5145 = vmatprep.subr.mxu0 0.0
      %5146 = vmatpush1.msra.mxu0 0.0
      %5147 = vmatprep.subr.mxu0 0.0
      %5148 = vmatpush1.msra.mxu0 0.0
      %5149 = vmatprep.subr.mxu0 0.0
      %5150 = vmatpush1.msra.mxu0 0.0
      %5151 = vmatprep.mubr.f32.mxu0 0.0
      %5152 = vmatmul.mubr.f32.gmra.mrb[0].mxu0 %v5015
      %v5153 = vpop.f32.mrb[0].mxu0
      %v5154 = vadd.f32 0.0, %v5153
      %v5155 = vpop.f32.mrb[0].mxu0
      %5156 = vdwg.mxu0
      %5158 = vrot.lane.b32.xlu0 %v4797, 64
      %v5159 = vpop.permute.xlu0 %5158
      %5162 = vrot.lane.b32.xlu0 %v5084, 64
      %v5163 = vpop.permute.xlu0 %5162
      %5166 = vrot.lane.b32.xlu0 %v5012, 64
      %v5167 = vpop.permute.xlu0 %5166
      %v5169 = vsel %vm3089, 0.0, %v5159
      %v5170 = vsel %vm3089, %v4942, %v5163
      %v5171 = vsel %vm3089, %v4870, %v5167
      %v5172 = vld [vmem:[%s13] sm:$0xff]
      %v5173 = vld [vmem:[%s13 + $0x8] sm:$0xff]
      %v5174 = vld [vmem:[%s13 + $0x10] sm:$0xff]
      %v5175 = vld [vmem:[%s13 + $0x18] sm:$0xff]
      %v5176 = vld [vmem:[%s13 + $0x20] sm:$0xff]
      %v5177 = vld [vmem:[%s13 + $0x28] sm:$0xff]
      %v5178 = vld [vmem:[%s13 + $0x30] sm:$0xff]
      %v5179 = vld [vmem:[%s13 + $0x38] sm:$0xff]
      %v5180 = vld [vmem:[%s13 + $0x40] sm:$0xff]
      %v5181 = vld [vmem:[%s13 + $0x48] sm:$0xff]
      %v5182 = vld [vmem:[%s13 + $0x50] sm:$0xff]
      %v5183 = vld [vmem:[%s13 + $0x58] sm:$0xff]
      %v5184 = vld [vmem:[%s13 + $0x60] sm:$0xff]
      %v5185 = vld [vmem:[%s13 + $0x68] sm:$0xff]
      %v5186 = vld [vmem:[%s13 + $0x70] sm:$0xff]
      %v5187 = vld [vmem:[%s13 + $0x78] sm:$0xff]
      %v5188 = vld [vmem:[%s13 + $0x80] sm:$0xff]
      %v5189 = vld [vmem:[%s13 + $0x88] sm:$0xff]
      %v5190 = vld [vmem:[%s13 + $0x90] sm:$0xff]
      %v5191 = vld [vmem:[%s13 + $0x98] sm:$0xff]
      %v5192 = vld [vmem:[%s13 + $0xa0] sm:$0xff]
      %v5193 = vld [vmem:[%s13 + $0xa8] sm:$0xff]
      %v5194 = vld [vmem:[%s13 + $0xb0] sm:$0xff]
      %v5195 = vld [vmem:[%s13 + $0xb8] sm:$0xff]
      %v5196 = vld [vmem:[%s13 + $0xc0] sm:$0xff]
      %v5197 = vld [vmem:[%s13 + $0xc8] sm:$0xff]
      %v5198 = vld [vmem:[%s13 + $0xd0] sm:$0xff]
      %v5199 = vld [vmem:[%s13 + $0xd8] sm:$0xff]
      %v5200 = vld [vmem:[%s13 + $0xe0] sm:$0xff]
      %v5201 = vld [vmem:[%s13 + $0xe8] sm:$0xff]
      %v5202 = vld [vmem:[%s13 + $0xf0] sm:$0xff]
      %v5203 = vld [vmem:[%s13 + $0xf8] sm:$0xff]
      %v5204 = vld [vmem:[%s13 + $0x100] sm:$0xff]
      %v5205 = vld [vmem:[%s13 + $0x108] sm:$0xff]
      %v5206 = vld [vmem:[%s13 + $0x110] sm:$0xff]
      %v5207 = vld [vmem:[%s13 + $0x118] sm:$0xff]
      %v5208 = vld [vmem:[%s13 + $0x120] sm:$0xff]
      %v5209 = vld [vmem:[%s13 + $0x128] sm:$0xff]
      %v5210 = vld [vmem:[%s13 + $0x130] sm:$0xff]
      %v5211 = vld [vmem:[%s13 + $0x138] sm:$0xff]
      %v5212 = vld [vmem:[%s13 + $0x140] sm:$0xff]
      %v5213 = vld [vmem:[%s13 + $0x148] sm:$0xff]
      %v5214 = vld [vmem:[%s13 + $0x150] sm:$0xff]
      %v5215 = vld [vmem:[%s13 + $0x158] sm:$0xff]
      %v5216 = vld [vmem:[%s13 + $0x160] sm:$0xff]
      %v5217 = vld [vmem:[%s13 + $0x168] sm:$0xff]
      %v5218 = vld [vmem:[%s13 + $0x170] sm:$0xff]
      %v5219 = vld [vmem:[%s13 + $0x178] sm:$0xff]
      %v5220 = vld [vmem:[%s13 + $0x180] sm:$0xff]
      %v5221 = vld [vmem:[%s13 + $0x188] sm:$0xff]
      %v5222 = vld [vmem:[%s13 + $0x190] sm:$0xff]
      %v5223 = vld [vmem:[%s13 + $0x198] sm:$0xff]
      %v5224 = vld [vmem:[%s13 + $0x1a0] sm:$0xff]
      %v5225 = vld [vmem:[%s13 + $0x1a8] sm:$0xff]
      %v5226 = vld [vmem:[%s13 + $0x1b0] sm:$0xff]
      %v5227 = vld [vmem:[%s13 + $0x1b8] sm:$0xff]
      %v5228 = vld [vmem:[%s13 + $0x1c0] sm:$0xff]
      %v5229 = vld [vmem:[%s13 + $0x1c8] sm:$0xff]
      %v5230 = vld [vmem:[%s13 + $0x1d0] sm:$0xff]
      %v5231 = vld [vmem:[%s13 + $0x1d8] sm:$0xff]
      %v5232 = vld [vmem:[%s13 + $0x1e0] sm:$0xff]
      %v5233 = vld [vmem:[%s13 + $0x1e8] sm:$0xff]
      %v5234 = vld [vmem:[%s13 + $0x1f0] sm:$0xff]
      %v5235 = vld [vmem:[%s13 + $0x1f8] sm:$0xff]
      %v5236 = vld [vmem:[%s13 + $0x200] sm:$0xff]
      %v5237 = vld [vmem:[%s13 + $0x208] sm:$0xff]
      %v5238 = vld [vmem:[%s13 + $0x210] sm:$0xff]
      %v5239 = vld [vmem:[%s13 + $0x218] sm:$0xff]
      %v5240 = vld [vmem:[%s13 + $0x220] sm:$0xff]
      %v5241 = vld [vmem:[%s13 + $0x228] sm:$0xff]
      %v5242 = vld [vmem:[%s13 + $0x230] sm:$0xff]
      %v5243 = vld [vmem:[%s13 + $0x238] sm:$0xff]
      %v5244 = vld [vmem:[%s14] sm:$0x1]
      %v5246 = vsel %vm3089, %v5154, 0
      %5248 = vmatprep.subr.mxu0 0.0
      %5249 = vmatpush1.msra.mxu0 %v5172
      %5250 = vmatprep.subr.mxu0 0.0
      %5251 = vmatpush1.msra.mxu0 %v5173
      %5252 = vmatprep.subr.mxu0 0.0
      %5253 = vmatpush1.msra.mxu0 %v5174
      %5254 = vmatprep.subr.mxu0 0.0
      %5255 = vmatpush1.msra.mxu0 %v5175
      %5256 = vmatprep.subr.mxu0 0.0
      %5257 = vmatpush1.msra.mxu0 %v5176
      %5258 = vmatprep.subr.mxu0 0.0
      %5259 = vmatpush1.msra.mxu0 %v5177
      %5260 = vmatprep.subr.mxu0 0.0
      %5261 = vmatpush1.msra.mxu0 %v5178
      %5262 = vmatprep.subr.mxu0 0.0
      %5263 = vmatpush1.msra.mxu0 %v5179
      %5264 = vmatprep.subr.mxu0 0.0
      %5265 = vmatpush1.msra.mxu0 %v5180
      %5266 = vmatprep.subr.mxu0 0.0
      %5267 = vmatpush1.msra.mxu0 %v5181
      %5268 = vmatprep.subr.mxu0 0.0
      %5269 = vmatpush1.msra.mxu0 %v5182
      %5270 = vmatprep.subr.mxu0 0.0
      %5271 = vmatpush1.msra.mxu0 %v5183
      %5272 = vmatprep.subr.mxu0 0.0
      %5273 = vmatpush1.msra.mxu0 %v5184
      %5274 = vmatprep.subr.mxu0 0.0
      %5275 = vmatpush1.msra.mxu0 %v5185
      %5276 = vmatprep.subr.mxu0 0.0
      %5277 = vmatpush1.msra.mxu0 %v5186
      %5278 = vmatprep.subr.mxu0 0.0
      %5279 = vmatpush1.msra.mxu0 %v5187
      %5280 = vmatprep.subr.mxu0 0.0
      %5281 = vmatpush1.msra.mxu0 %v5188
      %5282 = vmatprep.subr.mxu0 0.0
      %5283 = vmatpush1.msra.mxu0 %v5189
      %5284 = vmatprep.subr.mxu0 0.0
      %5285 = vmatpush1.msra.mxu0 %v5190
      %5286 = vmatprep.subr.mxu0 0.0
      %5287 = vmatpush1.msra.mxu0 %v5191
      %5288 = vmatprep.subr.mxu0 0.0
      %5289 = vmatpush1.msra.mxu0 %v5192
      %5290 = vmatprep.subr.mxu0 0.0
      %5291 = vmatpush1.msra.mxu0 %v5193
      %5292 = vmatprep.subr.mxu0 0.0
      %5293 = vmatpush1.msra.mxu0 %v5194
      %5294 = vmatprep.subr.mxu0 0.0
      %5295 = vmatpush1.msra.mxu0 %v5195
      %5296 = vmatprep.subr.mxu0 0.0
      %5297 = vmatpush1.msra.mxu0 %v5196
      %5298 = vmatprep.subr.mxu0 0.0
      %5299 = vmatpush1.msra.mxu0 %v5197
      %5300 = vmatprep.subr.mxu0 0.0
      %5301 = vmatpush1.msra.mxu0 %v5198
      %5302 = vmatprep.subr.mxu0 0.0
      %5303 = vmatpush1.msra.mxu0 %v5199
      %5304 = vmatprep.subr.mxu0 0.0
      %5305 = vmatpush1.msra.mxu0 %v5200
      %5306 = vmatprep.subr.mxu0 0.0
      %5307 = vmatpush1.msra.mxu0 %v5201
      %5308 = vmatprep.subr.mxu0 0.0
      %5309 = vmatpush1.msra.mxu0 %v5202
      %5310 = vmatprep.subr.mxu0 0.0
      %5311 = vmatpush1.msra.mxu0 %v5203
      %5312 = vmatprep.mubr.f32.mxu0 %v5169
      %5313 = vmatmul.mubr.f32.gmra.mrb[0].mxu0 0.0
      %v5314 = vpop.f32.mrb[0].mxu0
      %v5315 = vadd.f32 %v5244, %v5314
      %v5316 = vpop.f32.mrb[0].mxu0
      %5317 = vdwg.mxu0
      %5318 = vmatprep.subr.mxu0 0.0
      %5319 = vmatpush1.msra.mxu0 %v5204
      %5320 = vmatprep.subr.mxu0 0.0
      %5321 = vmatpush1.msra.mxu0 %v5205
      %5322 = vmatprep.subr.mxu0 0.0
      %5323 = vmatpush1.msra.mxu0 %v5206
      %5324 = vmatprep.subr.mxu0 0.0
      %5325 = vmatpush1.msra.mxu0 %v5207
      %5326 = vmatprep.subr.mxu0 0.0
      %5327 = vmatpush1.msra.mxu0 %v5208
      %5328 = vmatprep.subr.mxu0 0.0
      %5329 = vmatpush1.msra.mxu0 %v5209
      %5330 = vmatprep.subr.mxu0 0.0
      %5331 = vmatpush1.msra.mxu0 %v5210
      %5332 = vmatprep.subr.mxu0 0.0
      %5333 = vmatpush1.msra.mxu0 %v5211
      %5334 = vmatprep.subr.mxu0 0.0
      %5335 = vmatpush1.msra.mxu0 %v5212
      %5336 = vmatprep.subr.mxu0 0.0
      %5337 = vmatpush1.msra.mxu0 %v5213
      %5338 = vmatprep.subr.mxu0 0.0
      %5339 = vmatpush1.msra.mxu0 %v5214
      %5340 = vmatprep.subr.mxu0 0.0
      %5341 = vmatpush1.msra.mxu0 %v5215
      %5342 = vmatprep.subr.mxu0 0.0
      %5343 = vmatpush1.msra.mxu0 %v5216
      %5344 = vmatprep.subr.mxu0 0.0
      %5345 = vmatpush1.msra.mxu0 %v5217
      %5346 = vmatprep.subr.mxu0 0.0
      %5347 = vmatpush1.msra.mxu0 %v5218
      %5348 = vmatprep.subr.mxu0 0.0
      %5349 = vmatpush1.msra.mxu0 %v5219
      %5350 = vmatprep.subr.mxu0 0.0
      %5351 = vmatpush1.msra.mxu0 %v5220
      %5352 = vmatprep.subr.mxu0 0.0
      %5353 = vmatpush1.msra.mxu0 %v5221
      %5354 = vmatprep.subr.mxu0 0.0
      %5355 = vmatpush1.msra.mxu0 %v5222
      %5356 = vmatprep.subr.mxu0 0.0
      %5357 = vmatpush1.msra.mxu0 %v5223
      %5358 = vmatprep.subr.mxu0 0.0
      %5359 = vmatpush1.msra.mxu0 %v5224
      %5360 = vmatprep.subr.mxu0 0.0
      %5361 = vmatpush1.msra.mxu0 %v5225
      %5362 = vmatprep.subr.mxu0 0.0
      %5363 = vmatpush1.msra.mxu0 %v5226
      %5364 = vmatprep.subr.mxu0 0.0
      %5365 = vmatpush1.msra.mxu0 %v5227
      %5366 = vmatprep.subr.mxu0 0.0
      %5367 = vmatpush1.msra.mxu0 %v5228
      %5368 = vmatprep.subr.mxu0 0.0
      %5369 = vmatpush1.msra.mxu0 %v5229
      %5370 = vmatprep.subr.mxu0 0.0
      %5371 = vmatpush1.msra.mxu0 %v5230
      %5372 = vmatprep.subr.mxu0 0.0
      %5373 = vmatpush1.msra.mxu0 %v5231
      %5374 = vmatprep.subr.mxu0 0.0
      %5375 = vmatpush1.msra.mxu0 %v5232
      %5376 = vmatprep.subr.mxu0 0.0
      %5377 = vmatpush1.msra.mxu0 %v5233
      %5378 = vmatprep.subr.mxu0 0.0
      %5379 = vmatpush1.msra.mxu0 %v5234
      %5380 = vmatprep.subr.mxu0 0.0
      %5381 = vmatpush1.msra.mxu0 %v5235
      %5382 = vmatprep.mubr.f32.mxu0 %v5171
      %5383 = vmatmul.mubr.f32.gmra.mrb[0].mxu0 %v5170
      %v5384 = vpop.f32.mrb[0].mxu0
      %v5385 = vadd.f32 %v5315, %v5384
      %v5386 = vpop.f32.mrb[0].mxu0
      %5387 = vdwg.mxu0
      %5388 = vmatprep.subr.mxu0 0.0
      %5389 = vmatpush1.msra.mxu0 %v5236
      %5390 = vmatprep.subr.mxu0 0.0
      %5391 = vmatpush1.msra.mxu0 %v5237
      %5392 = vmatprep.subr.mxu0 0.0
      %5393 = vmatpush1.msra.mxu0 %v5238
      %5394 = vmatprep.subr.mxu0 0.0
      %5395 = vmatpush1.msra.mxu0 %v5239
      %5396 = vmatprep.subr.mxu0 0.0
      %5397 = vmatpush1.msra.mxu0 %v5240
      %5398 = vmatprep.subr.mxu0 0.0
      %5399 = vmatpush1.msra.mxu0 %v5241
      %5400 = vmatprep.subr.mxu0 0.0
      %5401 = vmatpush1.msra.mxu0 %v5242
      %5402 = vmatprep.subr.mxu0 0.0
      %5403 = vmatpush1.msra.mxu0 %v5243
      %5404 = vmatprep.subr.mxu0 0.0
      %5405 = vmatpush1.msra.mxu0 0.0
      %5406 = vmatprep.subr.mxu0 0.0
      %5407 = vmatpush1.msra.mxu0 0.0
      %5408 = vmatprep.subr.mxu0 0.0
      %5409 = vmatpush1.msra.mxu0 0.0
      %5410 = vmatprep.subr.mxu0 0.0
      %5411 = vmatpush1.msra.mxu0 0.0
      %5412 = vmatprep.subr.mxu0 0.0
      %5413 = vmatpush1.msra.mxu0 0.0
      %5414 = vmatprep.subr.mxu0 0.0
      %5415 = vmatpush1.msra.mxu0 0.0
      %5416 = vmatprep.subr.mxu0 0.0
      %5417 = vmatpush1.msra.mxu0 0.0
      %5418 = vmatprep.subr.mxu0 0.0
      %5419 = vmatpush1.msra.mxu0 0.0
      %5420 = vmatprep.subr.mxu0 0.0
      %5421 = vmatpush1.msra.mxu0 0.0
      %5422 = vmatprep.subr.mxu0 0.0
      %5423 = vmatpush1.msra.mxu0 0.0
      %5424 = vmatprep.subr.mxu0 0.0
      %5425 = vmatpush1.msra.mxu0 0.0
      %5426 = vmatprep.subr.mxu0 0.0
      %5427 = vmatpush1.msra.mxu0 0.0
      %5428 = vmatprep.subr.mxu0 0.0
      %5429 = vmatpush1.msra.mxu0 0.0
      %5430 = vmatprep.subr.mxu0 0.0
      %5431 = vmatpush1.msra.mxu0 0.0
      %5432 = vmatprep.subr.mxu0 0.0
      %5433 = vmatpush1.msra.mxu0 0.0
      %5434 = vmatprep.subr.mxu0 0.0
      %5435 = vmatpush1.msra.mxu0 0.0
      %5436 = vmatprep.subr.mxu0 0.0
      %5437 = vmatpush1.msra.mxu0 0.0
      %5438 = vmatprep.subr.mxu0 0.0
      %5439 = vmatpush1.msra.mxu0 0.0
      %5440 = vmatprep.subr.mxu0 0.0
      %5441 = vmatpush1.msra.mxu0 0.0
      %5442 = vmatprep.subr.mxu0 0.0
      %5443 = vmatpush1.msra.mxu0 0.0
      %5444 = vmatprep.subr.mxu0 0.0
      %5445 = vmatpush1.msra.mxu0 0.0
      %5446 = vmatprep.subr.mxu0 0.0
      %5447 = vmatpush1.msra.mxu0 0.0
      %5448 = vmatprep.subr.mxu0 0.0
      %5449 = vmatpush1.msra.mxu0 0.0
      %5450 = vmatprep.subr.mxu0 0.0
      %5451 = vmatpush1.msra.mxu0 0.0
      %5452 = vmatprep.mubr.f32.mxu0 0.0
      %5453 = vmatmul.mubr.f32.gmra.mrb[0].mxu0 %v5246
      %v5454 = vpop.f32.mrb[0].mxu0
      %v5455 = vadd.f32 %v5385, %v5454
      %v5456 = vpop.f32.mrb[0].mxu0
      %5457 = vdwg.mxu0
      %vm5458 = vcmp.ge.f32.partialorder %v5455, 0.0
      %v5459 = vmul.f32 %v5455, 0.2
      %v5460 = vsel %vm5458, %v5455, %v5459
      %v5461 = vld [vmem:[%s15] sm:$0x1]
      %v5462 = vmul.f32 %v5460, %v5461
      %v5463 = vld [vmem:[%s16] sm:$0x1]
      %v5464 = vadd.f32 %v5462, %v5463
      %v5465 = vld [vmem:[%s17] sm:$0x1]
      %v5466 = vmul.f32 %v5464, %v5465
      %vm5467 = vcmask 1040384
      %v5468 = vsel %vm5467, %v5466, 0.0
      %5469 = vadd.xlane.f32.xlu0 %v5468
      %v5470 = vpop.xlane.xlu0 %5469
      %v5471 = vadd.f32 %v5470, 0.0
      %v5472 = vadd.f32 %v5471, 0.0
      %v5473 = vld [vmem:[#allocation2] sm:$0x1]
      %v5474 = vadd.f32 %v5472, %v5473
      %v5475 = vsub.f32 0.0, %v5474
      %v5476 = vmul.f32 %v5475, 1.442695
      %v5477 = vpow.pop %v5476
      %v5478 = vadd.f32 %v5477, 1.0
      %v5479 = vrcp.pop %v5478
      %v5480 = vmul.f32 1.0, %v5479
      %vm5481 = vcmask 0
      %5482 = vst.msk [vmem:[%s600] sm:$0x1] %vm5481, %v5480
      %p5483 = scmp.lt.s32.totalorder %s32, 1
      %s5484 = scalar_select %p5483, %s32, 1
      %s5485 = scalar_lea.vmem %s19, %s5484
      // Predicated region
      $region97: #{discriminator_forward.1} parent=95 // pred_check
        %p5486 = pneg %p454
      $region98: #{discriminator_forward.1} parent=95 // pred_check_branch
        %5488 = sbr.rel (%p5486) target = $region100
      $region99: #{discriminator_forward.1} parent=95 // pred_region
        _
      $region100: #{discriminator_forward.1} parent=95 // pred_fallthru
        _
    $region96: #{discriminator_forward.1} parent=5 // pred_fallthru
      _
    %p5489 = scmp.le.s32.totalorder 2, %s27
    // Predicated region
    $region101: #{discriminator_forward.1} parent=5 // pred_check
      %p5490 = pneg %p5489
    $region102: #{discriminator_forward.1} parent=5 // pred_check_branch
      %5492 = sbr.rel (%p5490) target = $region104
    $region103: #{discriminator_forward.1} parent=5 // pred_region
      %s5493 = ssub.s32 %s27, 2
      // Predicated region
      $region105: #{discriminator_forward.1} parent=103 // pred_check
        %p5494 = pneg %p460
      $region106: #{discriminator_forward.1} parent=103 // pred_check_branch
        %5496 = sbr.rel (%p5494) target = $region108
      $region107: #{discriminator_forward.1} parent=103 // pred_region
        %p5497 = scmp.lt.s32.totalorder %s33, 1
        %s5498 = scalar_select %p5497, %s33, 1
        %s5499 = scalar_lea.vmem %s19, %s5498
      $region108: #{discriminator_forward.1} parent=103 // pred_fallthru
        _
    $region104: #{discriminator_forward.1} parent=5 // pred_fallthru
      _
  $region6: #{discriminator_forward.1} parent=0 // loop_footer
    %s31 = sadd.s32 1, %s27
  $region7: #{discriminator_forward.1} parent=0 // loop_footer_branch
    %26 = sbr.rel target = $region3
  $region8: #{discriminator_forward.1} parent=0 // loop_exit
    _

</llo_original>
